<compile_context>
chip_gen: v7x
topology: tpu7x:2x2x1
jax: 0.10.0
libtpu: 0.0.40
codegen_flags: <defaults>
</compile_context>

<pallas_src>
import functools
import math

import jax
import jax.numpy as jnp
from jax import lax
from jax.experimental import pallas as pl
from jax.experimental.pallas import tpu as pltpu

_PARAM_ORDER = ("conv", "q1", "q2", "k1", "k2", "v1", "v2")
_HI = jax.lax.Precision.HIGHEST


# ----------------------------------------------------------------------------
# Pallas kernel
# ----------------------------------------------------------------------------
def _make_kernel(scale, n_keys, emit_scores):
    def kernel(x_ref,
               wc, bc, wq1, bq1, wq2, bq2, wk1, bk1, wk2, bk2,
               wv1, bv1, wv2, bv2, *rest):
        if emit_scores:
            o_ref, s_out_ref, s_scr, rank_scr = rest
        else:
            o_ref, s_scr, rank_scr = rest

        x = x_ref[0]                                            # (C, N)

        def proj(w_ref, t):                                     # (C,C)@(C,N) on MXU
            return jnp.dot(w_ref[...], t, preferred_element_type=jnp.float32)

        # 1x1 conv + ReLU, then the three two-layer 1x1-conv transforms.
        xc = jnp.maximum(proj(wc, x) + bc[...], 0.0)            # (C, N)
        q = proj(wq2, proj(wq1, xc) + bq1[...]) + bq2[...]      # (C, N)
        k = proj(wk2, proj(wk1, xc) + bk1[...]) + bk2[...]      # (C, N)
        v = proj(wv2, proj(wv1, xc) + bv1[...]) + bv2[...]      # (C, N)

        # scores: S[i, j] = scale * sum_c q[c, i] * k[c, j]
        s = lax.dot_general(q, k, (((0,), (0,)), ((), ())),
                            preferred_element_type=jnp.float32) * scale   # (N, N)
        s_scr[...] = s
        if emit_scores:
            s_out_ref[0] = s

        # ---- descending rank via comparison counting ----------------------
        # rank[i, j] = #{k : S[i, k] > S[i, j]}  (== torch's double argsort
        # for distinct scores).  Loop over the comparison column k; extract
        # column k EXACTLY via one-hot multiply + lane reduce (products are
        # x*1 / x*0, so the extraction is bit-exact) and accumulate its
        # (N, N) contribution.  Only natively supported 2-D broadcasts and
        # lane reductions are used (no transposes / 3-D relayouts).
        rank_scr[...] = jnp.zeros_like(rank_scr)
        lane_ids = lax.broadcasted_iota(jnp.int32, (1, n_keys), 1)     # (1, N)

        def count_body(kk, carry):
            s_full = s_scr[...]                                        # (N, N)
            onehot = (lane_ids == kk).astype(jnp.float32)              # (1, N)
            col = jnp.sum(s_full * onehot, axis=1, keepdims=True)      # (N, 1) == S[:, kk]
            rank_scr[...] += (col > s_full).astype(jnp.float32)
            return carry

        lax.fori_loop(0, n_keys, count_body, 0)

        # ---- softmax + sign/rank mask (full 2-D tiles) ---------------------
        s_full = s_scr[...]
        m = jnp.max(s_full, axis=-1, keepdims=True)
        e = jnp.exp(s_full - m)
        a = e / jnp.sum(e, axis=-1, keepdims=True)                     # row softmax

        pos = (s_full >= 0.0).astype(jnp.float32)                      # (N, N)
        p_cnt = jnp.sum(pos, axis=-1, keepdims=True)                   # (N, 1)

        rank = rank_scr[...]
        rank_kept = jnp.where(rank > p_cnt - 1.0, 0.0, rank)
        amask = (rank_kept + 1.0) ** 3 * pos + (1.0 - pos)
        aw = a * amask                                                 # (N, N)

        # out[c, i] = sum_j v[c, j] * aw[i, j]  (== bmm(A*mask, v^T) in NCHW)
        out = lax.dot_general(v, aw, (((1,), (1,)), ((), ())),
                              preferred_element_type=jnp.float32)      # (C, N)
        o_ref[0] = out + xc                                            # residual with conv'd x

    return kernel


# ----------------------------------------------------------------------------
# Wrapper
# ----------------------------------------------------------------------------
def aug_attention_forward(x, params, *, return_scores=False):
    """Forward pass of AugAttentionModule.  x: (B, C, H, W) float32 (NCHW)."""
    B, C, H, W = x.shape
    N = H * W
    scale = 1.0 / math.sqrt(C)
    x_cn = x.reshape(B, C, N).astype(jnp.float32)   # pure reshape, no data movement

    flat_inputs = [x_cn]
    in_specs = [pl.BlockSpec((1, C, N), lambda b: (b, 0, 0))]
    for name in _PARAM_ORDER:
        w = params[name + "_w"].astype(jnp.float32)
        bias = params[name + "_b"].astype(jnp.float32).reshape(C, 1)
        flat_inputs += [w, bias]
        in_specs += [pl.BlockSpec((C, C), lambda b: (0, 0)),
                     pl.BlockSpec((C, 1), lambda b: (0, 0))]

    out_shape = [jax.ShapeDtypeStruct((B, C, N), jnp.float32)]
    out_specs = [pl.BlockSpec((1, C, N), lambda b: (b, 0, 0))]
    if return_scores:  # debug/test output: the raw scores S
        out_shape.append(jax.ShapeDtypeStruct((B, N, N), jnp.float32))
        out_specs.append(pl.BlockSpec((1, N, N), lambda b: (b, 0, 0)))

    kernel = _make_kernel(scale, N, return_scores)

    # TODO(synk): for large H*W the (N, N) score/rank blocks no longer fit
    # VMEM; add a second grid axis tiling the query rows (and raise
    # vmem_limit_bytes / split the q/k/v projections into their own kernel).
    res = pl.pallas_call(
        kernel,
        out_shape=tuple(out_shape),
        grid=(B,),
        in_specs=in_specs,
        out_specs=tuple(out_specs),
        scratch_shapes=[pltpu.VMEM((N, N), jnp.float32),    # scores
                        pltpu.VMEM((N, N), jnp.float32)],   # rank accumulator
        compiler_params=pltpu.CompilerParams(
            dimension_semantics=("parallel",)),             # 2 TCs on v7x
    )(*flat_inputs)

    out = res[0].reshape(B, C, H, W)
    if return_scores:
        return out, res[1]
    return out


def init_aug_attention_params(key, input_channels):
    """1x1 convs stored as (C_out, C_in) matrices; PyTorch-default uniform init."""
    C = input_channels
    bound = 1.0 / math.sqrt(C)
    keys = jax.random.split(key, 2 * len(_PARAM_ORDER))
    params = {}
    for i, name in enumerate(_PARAM_ORDER):
        params[name + "_w"] = jax.random.uniform(
            keys[2 * i], (C, C), jnp.float32, -bound, bound)
        params[name + "_b"] = jax.random.uniform(
            keys[2 * i + 1], (C,), jnp.float32, -bound, bound)
    return params


# ----------------------------------------------------------------------------
# Pure-JAX reference pieces (for the correctness checks only)
# ----------------------------------------------------------------------------
def _conv1x1(x_nchw, w, b):
    return (jnp.einsum("oc,bchw->bohw", w, x_nchw, precision=_HI)
            + b[None, :, None, None])


def _ref_intermediates(x, p):
    """Linear front end of the module: conv+ReLU, q/k/v transforms, scores."""
    B, C, H, W = x.shape
    N = H * W
    xc = jax.nn.relu(_conv1x1(x, p["conv_w"], p["conv_b"]))
    q = _conv1x1(_conv1x1(xc, p["q1_w"], p["q1_b"]), p["q2_w"], p["q2_b"])
    k = _conv1x1(_conv1x1(xc, p["k1_w"], p["k1_b"]), p["k2_w"], p["k2_b"])
    v = _conv1x1(_conv1x1(xc, p["v1_w"], p["v1_b"]), p["v2_w"], p["v2_b"])
    s = jnp.einsum("bci,bcj->bij", q.reshape(B, C, N), k.reshape(B, C, N),
                   precision=_HI) * (1.0 / math.sqrt(C))
    return {"xc": xc.reshape(B, C, N), "v": v.reshape(B, C, N), "s": s}


def _rank_desc_count(s):
    """rank[..., j] = #{k : s[..., k] > s[..., j]} (descending rank)."""
    return jnp.sum((s[..., None, :] > s[..., :, None]).astype(s.dtype), axis=-1)


def _attention_from_scores(s, v_cn, xc_cn):
    """Softmax + rank/sign mask + output bmm + residual, given scores (B,N,N)."""
    a = jax.nn.softmax(s, axis=-1)
    pos = (s >= 0.0).astype(s.dtype)
    p_cnt = jnp.sum(pos, axis=-1, keepdims=True)
    rank = _rank_desc_count(s)
    rank_kept = jnp.where(rank > p_cnt - 1.0, 0.0, rank)
    mask = (rank_kept + 1.0) ** 3 * pos + (1.0 - pos)
    out_cn = jnp.einsum("bij,bcj->bci", a * mask, v_cn, precision=_HI)
    return out_cn + xc_cn


# ----------------------------------------------------------------------------
if __name__ == "__main__":
    B, C, H, W = 2, 32, 16, 16          # N = H*W = 256 (lane-dense last dim)
    key = jax.random.PRNGKey(0)
    k_x, k_p = jax.random.split(key)
    x = jax.random.normal(k_x, (B, C, H, W), dtype=jnp.float32)
    params = init_aug_attention_params(k_p, C)

    fwd_dbg = jax.jit(functools.partial(aug_attention_forward, return_scores=True))
    out, scores = jax.block_until_ready(fwd_dbg(x, params))
    assert out.shape == (B, C, H, W)

    # --- correctness checks (decomposed so they are robust to fp near-ties) ---
    ref = _ref_intermediates(x, params)

    # (a) linear front end: conv + q/k/v transforms + score matmul
    s_tol = 1e-3 * max(1.0, float(jnp.max(jnp.abs(ref["s"]))))
    s_err = float(jnp.max(jnp.abs(scores - ref["s"])))
    assert s_err < s_tol, f"score mismatch: {s_err} (tol {s_tol})"

    # (b) comparison-count rank == literal double-argsort rank (tie-free rows)
    rank_cnt = _rank_desc_count(scores).astype(jnp.int32)
    rank_srt = jnp.argsort(jnp.argsort(-scores, axis=-1), axis=-1)
    tie_free = jnp.all(jnp.diff(jnp.sort(scores, axis=-1), axis=-1) != 0.0, axis=-1)
    assert bool(jnp.all(jnp.where(tie_free[..., None], rank_cnt == rank_srt, True))), \
        "rank formula mismatch vs torch-style double argsort"

    # (c) softmax + mask + output bmm + residual, reconstructed from the
    #     kernel's own scores so near-tie rank decisions match exactly
    recon = _attention_from_scores(scores, ref["v"], ref["xc"]).reshape(B, C, H, W)
    o_tol = 1e-3 * max(1.0, float(jnp.max(jnp.abs(recon))))
    o_err = float(jnp.max(jnp.abs(out - recon)))
    assert o_err < o_tol, f"output mismatch: {o_err} (tol {o_tol})"

    # Production (single-output) entry point matches the debug variant.
    out2 = jax.block_until_ready(jax.jit(aug_attention_forward)(x, params))
    o2_err = float(jnp.max(jnp.abs(out2 - out)))
    assert o2_err < o_tol, f"variant mismatch: {o2_err} (tol {o_tol})"

    print("KERNEL_OK")
</pallas_src>

<mosaic_0001>
module attributes {stable_mosaic.version = 11 : i64} {
  func.func @kernel(%arg0: i32, %arg1: memref<1x32x256xf32, #tpu.memory_space<vmem>>, %arg2: memref<32x32xf32, #tpu.memory_space<vmem>>, %arg3: memref<32x1xf32, #tpu.memory_space<vmem>>, %arg4: memref<32x32xf32, #tpu.memory_space<vmem>>, %arg5: memref<32x1xf32, #tpu.memory_space<vmem>>, %arg6: memref<32x32xf32, #tpu.memory_space<vmem>>, %arg7: memref<32x1xf32, #tpu.memory_space<vmem>>, %arg8: memref<32x32xf32, #tpu.memory_space<vmem>>, %arg9: memref<32x1xf32, #tpu.memory_space<vmem>>, %arg10: memref<32x32xf32, #tpu.memory_space<vmem>>, %arg11: memref<32x1xf32, #tpu.memory_space<vmem>>, %arg12: memref<32x32xf32, #tpu.memory_space<vmem>>, %arg13: memref<32x1xf32, #tpu.memory_space<vmem>>, %arg14: memref<32x32xf32, #tpu.memory_space<vmem>>, %arg15: memref<32x1xf32, #tpu.memory_space<vmem>>, %arg16: memref<1x32x256xf32, #tpu.memory_space<vmem>>, %arg17: memref<1x256x256xf32, #tpu.memory_space<vmem>>, %arg18: memref<256x256xf32, #tpu.memory_space<vmem>>, %arg19: memref<256x256xf32, #tpu.memory_space<vmem>>) attributes {dimension_semantics = [#tpu.dimension_semantics<parallel>], iteration_bounds = array<i64: 2>, scalar_prefetch = 0 : i64, scratch_operands = 2 : i64, tpu.core_type = #tpu.core_type<tc>, window_params = [{transform_indices = @transform_0, window_bounds = array<i64: 1, 32, 256>}, {pipeline_mode = #tpu.pipeline_mode<synchronous>, transform_indices = @transform_1, window_bounds = array<i64: 32, 32>}, {pipeline_mode = #tpu.pipeline_mode<synchronous>, transform_indices = @transform_2, window_bounds = array<i64: 32, 1>}, {pipeline_mode = #tpu.pipeline_mode<synchronous>, transform_indices = @transform_3, window_bounds = array<i64: 32, 32>}, {pipeline_mode = #tpu.pipeline_mode<synchronous>, transform_indices = @transform_4, window_bounds = array<i64: 32, 1>}, {pipeline_mode = #tpu.pipeline_mode<synchronous>, transform_indices = @transform_5, window_bounds = array<i64: 32, 32>}, {pipeline_mode = #tpu.pipeline_mode<synchronous>, transform_indices = @transform_6, window_bounds = array<i64: 32, 1>}, {pipeline_mode = #tpu.pipeline_mode<synchronous>, transform_indices = @transform_7, window_bounds = array<i64: 32, 32>}, {pipeline_mode = #tpu.pipeline_mode<synchronous>, transform_indices = @transform_8, window_bounds = array<i64: 32, 1>}, {pipeline_mode = #tpu.pipeline_mode<synchronous>, transform_indices = @transform_9, window_bounds = array<i64: 32, 32>}, {pipeline_mode = #tpu.pipeline_mode<synchronous>, transform_indices = @transform_10, window_bounds = array<i64: 32, 1>}, {pipeline_mode = #tpu.pipeline_mode<synchronous>, transform_indices = @transform_11, window_bounds = array<i64: 32, 32>}, {pipeline_mode = #tpu.pipeline_mode<synchronous>, transform_indices = @transform_12, window_bounds = array<i64: 32, 1>}, {pipeline_mode = #tpu.pipeline_mode<synchronous>, transform_indices = @transform_13, window_bounds = array<i64: 32, 32>}, {pipeline_mode = #tpu.pipeline_mode<synchronous>, transform_indices = @transform_14, window_bounds = array<i64: 32, 1>}, {transform_indices = @transform_15, window_bounds = array<i64: 1, 32, 256>}, {transform_indices = @transform_16, window_bounds = array<i64: 1, 256, 256>}]} {
    %c0 = arith.constant 0 : index
    %c0_0 = arith.constant 0 : index
    %c0_1 = arith.constant 0 : index
    %0 = vector.load %arg1[%c0, %c0_0, %c0_1] : memref<1x32x256xf32, #tpu.memory_space<vmem>>, vector<1x32x256xf32>
    %1 = vector.shape_cast %0 : vector<1x32x256xf32> to vector<32x256xf32>
    %c0_2 = arith.constant 0 : index
    %c0_3 = arith.constant 0 : index
    %2 = vector.load %arg2[%c0_2, %c0_3] : memref<32x32xf32, #tpu.memory_space<vmem>>, vector<32x32xf32>
    %cst = arith.constant dense<0.000000e+00> : vector<32x256xf32>
    %3 = tpu.matmul %2, %1, %cst {dimension_numbers = #tpu.dot_dimension_numbers<[1], [0], [0], [1], [0, 0, 1, 1], [], []>} : vector<32x32xf32>, vector<32x256xf32>, vector<32x256xf32> -> vector<32x256xf32>
    %c0_4 = arith.constant 0 : index
    %c0_5 = arith.constant 0 : index
    %4 = vector.load %arg3[%c0_4, %c0_5] : memref<32x1xf32, #tpu.memory_space<vmem>>, vector<32x1xf32>
    %5 = vector.broadcast %4 : vector<32x1xf32> to vector<32x256xf32>
    %6 = arith.addf %3, %5 : vector<32x256xf32>
    %cst_6 = arith.constant 0.000000e+00 : f32
    %7 = vector.broadcast %cst_6 : f32 to vector<32x256xf32>
    %8 = arith.maximumf %6, %7 : vector<32x256xf32>
    %c0_7 = arith.constant 0 : index
    %c0_8 = arith.constant 0 : index
    %9 = vector.load %arg4[%c0_7, %c0_8] : memref<32x32xf32, #tpu.memory_space<vmem>>, vector<32x32xf32>
    %cst_9 = arith.constant dense<0.000000e+00> : vector<32x256xf32>
    %10 = tpu.matmul %9, %8, %cst_9 {dimension_numbers = #tpu.dot_dimension_numbers<[1], [0], [0], [1], [0, 0, 1, 1], [], []>} : vector<32x32xf32>, vector<32x256xf32>, vector<32x256xf32> -> vector<32x256xf32>
    %c0_10 = arith.constant 0 : index
    %c0_11 = arith.constant 0 : index
    %11 = vector.load %arg5[%c0_10, %c0_11] : memref<32x1xf32, #tpu.memory_space<vmem>>, vector<32x1xf32>
    %12 = vector.broadcast %11 : vector<32x1xf32> to vector<32x256xf32>
    %13 = arith.addf %10, %12 : vector<32x256xf32>
    %c0_12 = arith.constant 0 : index
    %c0_13 = arith.constant 0 : index
    %14 = vector.load %arg6[%c0_12, %c0_13] : memref<32x32xf32, #tpu.memory_space<vmem>>, vector<32x32xf32>
    %cst_14 = arith.constant dense<0.000000e+00> : vector<32x256xf32>
    %15 = tpu.matmul %14, %13, %cst_14 {dimension_numbers = #tpu.dot_dimension_numbers<[1], [0], [0], [1], [0, 0, 1, 1], [], []>} : vector<32x32xf32>, vector<32x256xf32>, vector<32x256xf32> -> vector<32x256xf32>
    %c0_15 = arith.constant 0 : index
    %c0_16 = arith.constant 0 : index
    %16 = vector.load %arg7[%c0_15, %c0_16] : memref<32x1xf32, #tpu.memory_space<vmem>>, vector<32x1xf32>
    %17 = vector.broadcast %16 : vector<32x1xf32> to vector<32x256xf32>
    %18 = arith.addf %15, %17 : vector<32x256xf32>
    %c0_17 = arith.constant 0 : index
    %c0_18 = arith.constant 0 : index
    %19 = vector.load %arg8[%c0_17, %c0_18] : memref<32x32xf32, #tpu.memory_space<vmem>>, vector<32x32xf32>
    %cst_19 = arith.constant dense<0.000000e+00> : vector<32x256xf32>
    %20 = tpu.matmul %19, %8, %cst_19 {dimension_numbers = #tpu.dot_dimension_numbers<[1], [0], [0], [1], [0, 0, 1, 1], [], []>} : vector<32x32xf32>, vector<32x256xf32>, vector<32x256xf32> -> vector<32x256xf32>
    %c0_20 = arith.constant 0 : index
    %c0_21 = arith.constant 0 : index
    %21 = vector.load %arg9[%c0_20, %c0_21] : memref<32x1xf32, #tpu.memory_space<vmem>>, vector<32x1xf32>
    %22 = vector.broadcast %21 : vector<32x1xf32> to vector<32x256xf32>
    %23 = arith.addf %20, %22 : vector<32x256xf32>
    %c0_22 = arith.constant 0 : index
    %c0_23 = arith.constant 0 : index
    %24 = vector.load %arg10[%c0_22, %c0_23] : memref<32x32xf32, #tpu.memory_space<vmem>>, vector<32x32xf32>
    %cst_24 = arith.constant dense<0.000000e+00> : vector<32x256xf32>
    %25 = tpu.matmul %24, %23, %cst_24 {dimension_numbers = #tpu.dot_dimension_numbers<[1], [0], [0], [1], [0, 0, 1, 1], [], []>} : vector<32x32xf32>, vector<32x256xf32>, vector<32x256xf32> -> vector<32x256xf32>
    %c0_25 = arith.constant 0 : index
    %c0_26 = arith.constant 0 : index
    %26 = vector.load %arg11[%c0_25, %c0_26] : memref<32x1xf32, #tpu.memory_space<vmem>>, vector<32x1xf32>
    %27 = vector.broadcast %26 : vector<32x1xf32> to vector<32x256xf32>
    %28 = arith.addf %25, %27 : vector<32x256xf32>
    %c0_27 = arith.constant 0 : index
    %c0_28 = arith.constant 0 : index
    %29 = vector.load %arg12[%c0_27, %c0_28] : memref<32x32xf32, #tpu.memory_space<vmem>>, vector<32x32xf32>
    %cst_29 = arith.constant dense<0.000000e+00> : vector<32x256xf32>
    %30 = tpu.matmul %29, %8, %cst_29 {dimension_numbers = #tpu.dot_dimension_numbers<[1], [0], [0], [1], [0, 0, 1, 1], [], []>} : vector<32x32xf32>, vector<32x256xf32>, vector<32x256xf32> -> vector<32x256xf32>
    %c0_30 = arith.constant 0 : index
    %c0_31 = arith.constant 0 : index
    %31 = vector.load %arg13[%c0_30, %c0_31] : memref<32x1xf32, #tpu.memory_space<vmem>>, vector<32x1xf32>
    %32 = vector.broadcast %31 : vector<32x1xf32> to vector<32x256xf32>
    %33 = arith.addf %30, %32 : vector<32x256xf32>
    %c0_32 = arith.constant 0 : index
    %c0_33 = arith.constant 0 : index
    %34 = vector.load %arg14[%c0_32, %c0_33] : memref<32x32xf32, #tpu.memory_space<vmem>>, vector<32x32xf32>
    %cst_34 = arith.constant dense<0.000000e+00> : vector<32x256xf32>
    %35 = tpu.matmul %34, %33, %cst_34 {dimension_numbers = #tpu.dot_dimension_numbers<[1], [0], [0], [1], [0, 0, 1, 1], [], []>} : vector<32x32xf32>, vector<32x256xf32>, vector<32x256xf32> -> vector<32x256xf32>
    %c0_35 = arith.constant 0 : index
    %c0_36 = arith.constant 0 : index
    %36 = vector.load %arg15[%c0_35, %c0_36] : memref<32x1xf32, #tpu.memory_space<vmem>>, vector<32x1xf32>
    %37 = vector.broadcast %36 : vector<32x1xf32> to vector<32x256xf32>
    %38 = arith.addf %35, %37 : vector<32x256xf32>
    %cst_37 = arith.constant dense<0.000000e+00> : vector<256x256xf32>
    %39 = tpu.matmul %18, %28, %cst_37 {dimension_numbers = #tpu.dot_dimension_numbers<[0], [0], [1], [1], [0, 1, 1, 1], [], []>} : vector<32x256xf32>, vector<32x256xf32>, vector<256x256xf32> -> vector<256x256xf32>
    %cst_38 = arith.constant 0.176776692 : f32
    %40 = vector.broadcast %cst_38 : f32 to vector<256x256xf32>
    %41 = arith.mulf %39, %40 : vector<256x256xf32>
    %c0_39 = arith.constant 0 : index
    %c0_40 = arith.constant 0 : index
    %42 = vector.load %arg18[%c0_39, %c0_40] : memref<256x256xf32, #tpu.memory_space<vmem>>, vector<256x256xf32>
    tpu.vector_store %arg18[%c0_39, %c0_40], %41 {strides = array<i32>} : memref<256x256xf32, #tpu.memory_space<vmem>>, vector<256x256xf32>,
    %c0_41 = arith.constant 0 : index
    %c0_42 = arith.constant 0 : index
    %c0_43 = arith.constant 0 : index
    %43 = vector.load %arg17[%c0_41, %c0_42, %c0_43] : memref<1x256x256xf32, #tpu.memory_space<vmem>>, vector<1x256x256xf32>
    %44 = vector.shape_cast %43 : vector<1x256x256xf32> to vector<256x256xf32>
    %45 = vector.shape_cast %41 : vector<256x256xf32> to vector<1x256x256xf32>
    tpu.vector_store %arg17[%c0_41, %c0_42, %c0_43], %45 {strides = array<i32>} : memref<1x256x256xf32, #tpu.memory_space<vmem>>, vector<1x256x256xf32>,
    %cst_44 = arith.constant 0.000000e+00 : f32
    %46 = vector.broadcast %cst_44 : f32 to vector<256x256xf32>
    %c0_45 = arith.constant 0 : index
    %c0_46 = arith.constant 0 : index
    %47 = vector.load %arg19[%c0_45, %c0_46] : memref<256x256xf32, #tpu.memory_space<vmem>>, vector<256x256xf32>
    tpu.vector_store %arg19[%c0_45, %c0_46], %46 {strides = array<i32>} : memref<256x256xf32, #tpu.memory_space<vmem>>, vector<256x256xf32>,
    %48 = tpu.iota {dimensions = array<i32: 1>} : vector<1x256xi32>
    %c0_i32 = arith.constant 0 : i32
    %c256_i32 = arith.constant 256 : i32
    %49 = arith.addi %c0_i32, %c256_i32 : i32
    %c1_i32 = arith.constant 1 : i32
    scf.for %arg20 = %c0_i32 to %49 step %c1_i32  : i32 {
      %c0_64 = arith.constant 0 : index
      %c0_65 = arith.constant 0 : index
      %87 = vector.load %arg18[%c0_64, %c0_65] : memref<256x256xf32, #tpu.memory_space<vmem>>, vector<256x256xf32>
      %88 = vector.broadcast %arg20 : i32 to vector<1x256xi32>
      %89 = arith.cmpi eq, %48, %88 : vector<1x256xi32>
      %90 = arith.extui %89 : vector<1x256xi1> to vector<1x256xi32>
      %91 = arith.sitofp %90 : vector<1x256xi32> to vector<1x256xf32>
      %92 = vector.broadcast %91 : vector<1x256xf32> to vector<256x256xf32>
      %93 = arith.mulf %87, %92 : vector<256x256xf32>
      %cst_66 = arith.constant dense<0.000000e+00> : vector<256xf32>
      %94 = vector.multi_reduction <add>, %93, %cst_66 [1] : vector<256x256xf32> to vector<256xf32>
      %95 = vector.shape_cast %94 : vector<256xf32> to vector<256x1xf32>
      %c0_67 = arith.constant 0 : index
      %c0_68 = arith.constant 0 : index
      %96 = vector.load %arg19[%c0_67, %c0_68] : memref<256x256xf32, #tpu.memory_space<vmem>>, vector<256x256xf32>
      %97 = vector.broadcast %95 : vector<256x1xf32> to vector<256x256xf32>
      %98 = arith.cmpf ogt, %97, %87 : vector<256x256xf32>
      %99 = arith.extui %98 : vector<256x256xi1> to vector<256x256xi32>
      %100 = arith.sitofp %99 : vector<256x256xi32> to vector<256x256xf32>
      %101 = arith.addf %96, %100 : vector<256x256xf32>
      %c0_69 = arith.constant 0 : index
      %c0_70 = arith.constant 0 : index
      %102 = vector.load %arg19[%c0_69, %c0_70] : memref<256x256xf32, #tpu.memory_space<vmem>>, vector<256x256xf32>
      tpu.vector_store %arg19[%c0_69, %c0_70], %101 {strides = array<i32>} : memref<256x256xf32, #tpu.memory_space<vmem>>, vector<256x256xf32>,
    }
    %c256_i32_47 = arith.constant 256 : i32
    %c0_48 = arith.constant 0 : index
    %c0_49 = arith.constant 0 : index
    %50 = vector.load %arg18[%c0_48, %c0_49] : memref<256x256xf32, #tpu.memory_space<vmem>>, vector<256x256xf32>
    %cst_50 = arith.constant dense<0xFF800000> : vector<256xf32>
    %51 = vector.multi_reduction <maximumf>, %50, %cst_50 [1] : vector<256x256xf32> to vector<256xf32>
    %52 = vector.shape_cast %51 : vector<256xf32> to vector<256x1xf32>
    %53 = vector.broadcast %52 : vector<256x1xf32> to vector<256x256xf32>
    %54 = arith.subf %50, %53 : vector<256x256xf32>
    %55 = math.exp %54 : vector<256x256xf32>
    %cst_51 = arith.constant dense<0.000000e+00> : vector<256xf32>
    %56 = vector.multi_reduction <add>, %55, %cst_51 [1] : vector<256x256xf32> to vector<256xf32>
    %57 = vector.shape_cast %56 : vector<256xf32> to vector<256x1xf32>
    %58 = vector.broadcast %57 : vector<256x1xf32> to vector<256x256xf32>
    %59 = arith.divf %55, %58 : vector<256x256xf32>
    %cst_52 = arith.constant 0.000000e+00 : f32
    %60 = vector.broadcast %cst_52 : f32 to vector<256x256xf32>
    %61 = arith.cmpf oge, %50, %60 : vector<256x256xf32>
    %62 = arith.extui %61 : vector<256x256xi1> to vector<256x256xi32>
    %63 = arith.sitofp %62 : vector<256x256xi32> to vector<256x256xf32>
    %cst_53 = arith.constant dense<0.000000e+00> : vector<256xf32>
    %64 = vector.multi_reduction <add>, %63, %cst_53 [1] : vector<256x256xf32> to vector<256xf32>
    %65 = vector.shape_cast %64 : vector<256xf32> to vector<256x1xf32>
    %c0_54 = arith.constant 0 : index
    %c0_55 = arith.constant 0 : index
    %66 = vector.load %arg19[%c0_54, %c0_55] : memref<256x256xf32, #tpu.memory_space<vmem>>, vector<256x256xf32>
    %cst_56 = arith.constant 1.000000e+00 : f32
    %67 = vector.broadcast %cst_56 : f32 to vector<256x1xf32>
    %68 = arith.subf %65, %67 : vector<256x1xf32>
    %69 = vector.broadcast %68 : vector<256x1xf32> to vector<256x256xf32>
    %70 = arith.cmpf ogt, %66, %69 : vector<256x256xf32>
    %cst_57 = arith.constant 0.000000e+00 : f32
    %71 = vector.broadcast %cst_57 : f32 to vector<256x256xf32>
    %72 = arith.select %70, %71, %66 : vector<256x256xi1>, vector<256x256xf32>
    %cst_58 = arith.constant 1.000000e+00 : f32
    %73 = vector.broadcast %cst_58 : f32 to vector<256x256xf32>
    %74 = arith.addf %72, %73 : vector<256x256xf32>
    %75 = arith.mulf %74, %74 : vector<256x256xf32>
    %76 = arith.mulf %74, %75 : vector<256x256xf32>
    %77 = arith.mulf %76, %63 : vector<256x256xf32>
    %cst_59 = arith.constant 1.000000e+00 : f32
    %78 = vector.broadcast %cst_59 : f32 to vector<256x256xf32>
    %79 = arith.subf %78, %63 : vector<256x256xf32>
    %80 = arith.addf %77, %79 : vector<256x256xf32>
    %81 = arith.mulf %59, %80 : vector<256x256xf32>
    %cst_60 = arith.constant dense<0.000000e+00> : vector<32x256xf32>
    %82 = tpu.matmul %38, %81, %cst_60 {dimension_numbers = #tpu.dot_dimension_numbers<[1], [1], [0], [0], [0, 0, 1, 0], [], []>} : vector<32x256xf32>, vector<256x256xf32>, vector<32x256xf32> -> vector<32x256xf32>
    %83 = arith.addf %82, %8 : vector<32x256xf32>
    %c0_61 = arith.constant 0 : index
    %c0_62 = arith.constant 0 : index
    %c0_63 = arith.constant 0 : index
    %84 = vector.load %arg16[%c0_61, %c0_62, %c0_63] : memref<1x32x256xf32, #tpu.memory_space<vmem>>, vector<1x32x256xf32>
    %85 = vector.shape_cast %84 : vector<1x32x256xf32> to vector<32x256xf32>
    %86 = vector.shape_cast %83 : vector<32x256xf32> to vector<1x32x256xf32>
    tpu.vector_store %arg16[%c0_61, %c0_62, %c0_63], %86 {strides = array<i32>} : memref<1x32x256xf32, #tpu.memory_space<vmem>>, vector<1x32x256xf32>,
    return
  }
  func.func @transform_0(%arg0: i32) -> (i32, i32, i32) {
    %c0_i32 = arith.constant 0 : i32
    %c0_i32_0 = arith.constant 0 : i32
    %c0_i32_1 = arith.constant 0 : i32
    return %arg0, %c0_i32, %c0_i32_0 : i32, i32, i32
  }
  func.func @transform_1(%arg0: i32) -> (i32, i32) {
    %c0_i32 = arith.constant 0 : i32
    %c0_i32_0 = arith.constant 0 : i32
    %c0_i32_1 = arith.constant 0 : i32
    return %c0_i32, %c0_i32_0 : i32, i32
  }
  func.func @transform_2(%arg0: i32) -> (i32, i32) {
    %c0_i32 = arith.constant 0 : i32
    %c0_i32_0 = arith.constant 0 : i32
    %c0_i32_1 = arith.constant 0 : i32
    return %c0_i32, %c0_i32_0 : i32, i32
  }
  func.func @transform_3(%arg0: i32) -> (i32, i32) {
    %c0_i32 = arith.constant 0 : i32
    %c0_i32_0 = arith.constant 0 : i32
    %c0_i32_1 = arith.constant 0 : i32
    return %c0_i32, %c0_i32_0 : i32, i32
  }
  func.func @transform_4(%arg0: i32) -> (i32, i32) {
    %c0_i32 = arith.constant 0 : i32
    %c0_i32_0 = arith.constant 0 : i32
    %c0_i32_1 = arith.constant 0 : i32
    return %c0_i32, %c0_i32_0 : i32, i32
  }
  func.func @transform_5(%arg0: i32) -> (i32, i32) {
    %c0_i32 = arith.constant 0 : i32
    %c0_i32_0 = arith.constant 0 : i32
    %c0_i32_1 = arith.constant 0 : i32
    return %c0_i32, %c0_i32_0 : i32, i32
  }
  func.func @transform_6(%arg0: i32) -> (i32, i32) {
    %c0_i32 = arith.constant 0 : i32
    %c0_i32_0 = arith.constant 0 : i32
    %c0_i32_1 = arith.constant 0 : i32
    return %c0_i32, %c0_i32_0 : i32, i32
  }
  func.func @transform_7(%arg0: i32) -> (i32, i32) {
    %c0_i32 = arith.constant 0 : i32
    %c0_i32_0 = arith.constant 0 : i32
    %c0_i32_1 = arith.constant 0 : i32
    return %c0_i32, %c0_i32_0 : i32, i32
  }
  func.func @transform_8(%arg0: i32) -> (i32, i32) {
    %c0_i32 = arith.constant 0 : i32
    %c0_i32_0 = arith.constant 0 : i32
    %c0_i32_1 = arith.constant 0 : i32
    return %c0_i32, %c0_i32_0 : i32, i32
  }
  func.func @transform_9(%arg0: i32) -> (i32, i32) {
    %c0_i32 = arith.constant 0 : i32
    %c0_i32_0 = arith.constant 0 : i32
    %c0_i32_1 = arith.constant 0 : i32
    return %c0_i32, %c0_i32_0 : i32, i32
  }
  func.func @transform_10(%arg0: i32) -> (i32, i32) {
    %c0_i32 = arith.constant 0 : i32
    %c0_i32_0 = arith.constant 0 : i32
    %c0_i32_1 = arith.constant 0 : i32
    return %c0_i32, %c0_i32_0 : i32, i32
  }
  func.func @transform_11(%arg0: i32) -> (i32, i32) {
    %c0_i32 = arith.constant 0 : i32
    %c0_i32_0 = arith.constant 0 : i32
    %c0_i32_1 = arith.constant 0 : i32
    return %c0_i32, %c0_i32_0 : i32, i32
  }
  func.func @transform_12(%arg0: i32) -> (i32, i32) {
    %c0_i32 = arith.constant 0 : i32
    %c0_i32_0 = arith.constant 0 : i32
    %c0_i32_1 = arith.constant 0 : i32
    return %c0_i32, %c0_i32_0 : i32, i32
  }
  func.func @transform_13(%arg0: i32) -> (i32, i32) {
    %c0_i32 = arith.constant 0 : i32
    %c0_i32_0 = arith.constant 0 : i32
    %c0_i32_1 = arith.constant 0 : i32
    return %c0_i32, %c0_i32_0 : i32, i32
  }
  func.func @transform_14(%arg0: i32) -> (i32, i32) {
    %c0_i32 = arith.constant 0 : i32
    %c0_i32_0 = arith.constant 0 : i32
    %c0_i32_1 = arith.constant 0 : i32
    return %c0_i32, %c0_i32_0 : i32, i32
  }
  func.func @transform_15(%arg0: i32) -> (i32, i32, i32) {
    %c0_i32 = arith.constant 0 : i32
    %c0_i32_0 = arith.constant 0 : i32
    %c0_i32_1 = arith.constant 0 : i32
    return %arg0, %c0_i32, %c0_i32_0 : i32, i32, i32
  }
  func.func @transform_16(%arg0: i32) -> (i32, i32, i32) {
    %c0_i32 = arith.constant 0 : i32
    %c0_i32_0 = arith.constant 0 : i32
    %c0_i32_1 = arith.constant 0 : i32
    return %arg0, %c0_i32, %c0_i32_0 : i32, i32, i32
  }
}

</mosaic_0001>

<llo_original>
// kernel: aug_attention_forward.1
$region0: #{aug_attention_forward.1}
  #allocation0 [shape = 'u32[]', space=smem, size = 0x4, offset = 0x4, fixed_abs, tag = 'smem constant byte address 0x4 - core index']
  #allocation1 [shape = 'u32[144,128]{1,0:T(1,128)}', space=vmem, size = 0x12000, scoped, tag = 'internal scratch']
  #allocation2 [shape = 'f32[256,256]{1,0:T(8,128)}', space=vmem, size = 0x40000, scoped, tag = 'scratch operand']
  #allocation3 [shape = 'f32[256,256]{1,0:T(8,128)}', space=vmem, size = 0x40000, scoped, tag = 'scratch operand']
  %s0 = inlined_call_operand.vmem [shape: f32[2,32,256], index: 0, kind: input, shape index: {}]
  %s1 = inlined_call_operand.vmem [shape: f32[32,32], index: 1, kind: input, shape index: {}]
  %s2 = inlined_call_operand.vmem [shape: f32[32,1], index: 2, kind: input, shape index: {}]
  %s3 = inlined_call_operand.vmem [shape: f32[32,32], index: 3, kind: input, shape index: {}]
  %s4 = inlined_call_operand.vmem [shape: f32[32,1], index: 4, kind: input, shape index: {}]
  %s5 = inlined_call_operand.vmem [shape: f32[32,32], index: 5, kind: input, shape index: {}]
  %s6 = inlined_call_operand.vmem [shape: f32[32,1], index: 6, kind: input, shape index: {}]
  %s7 = inlined_call_operand.vmem [shape: f32[32,32], index: 7, kind: input, shape index: {}]
  %s8 = inlined_call_operand.vmem [shape: f32[32,1], index: 8, kind: input, shape index: {}]
  %s9 = inlined_call_operand.vmem [shape: f32[32,32], index: 9, kind: input, shape index: {}]
  %s10 = inlined_call_operand.vmem [shape: f32[32,1], index: 10, kind: input, shape index: {}]
  %s11 = inlined_call_operand.vmem [shape: f32[32,32], index: 11, kind: input, shape index: {}]
  %s12 = inlined_call_operand.vmem [shape: f32[32,1], index: 12, kind: input, shape index: {}]
  %s13 = inlined_call_operand.vmem [shape: f32[32,32], index: 13, kind: input, shape index: {}]
  %s14 = inlined_call_operand.vmem [shape: f32[32,1], index: 14, kind: input, shape index: {}]
  %s15 = inlined_call_operand.vmem [shape: f32[2,32,256], index: 15, kind: output, shape index: {0}]
  %s16 = inlined_call_operand.hbm [shape: f32[2,256,256], index: 16, kind: output, shape index: {1}]
  %17 = xla_tuple %s15, %s16
  %s18 = sld [smem:[#allocation0]]
  $region108: #{aug_attention_forward.1} parent=0
    _
  %s20 = ssub.s32 1, %s18
  %s21 = scalar_select 0, %s20, %s18
  $region1: #{aug_attention_forward.1} parent=0
    #allocation4 [shape = 'u8[524288]{0}', space=vmem, size = 0x80000, scoped, tag = 'output window, operand 1']
    #allocation5 [shape = 's32[2]{0}', space=sflag, size = 0x8, scoped, tag = 'scoped memory for aug_attention_forward.1']
    %22 = vsyncpa [#allocation5], 0
    %s23 = scalar_lea.sflag [#allocation5], 1
    %24 = vsyncpa %s23, 0
    loop: start=0, step=1, limit=4
    $region2: #{aug_attention_forward.1} parent=1 // loop_pre_header
      _
    $region3: #{aug_attention_forward.1} parent=1 // loop_header
      %s26 = sphi 0, %s30
      %p27 = scmp.ge.s32.totalorder %s26, 4
      %s36 = sphi 0, %s38
      %s39 = sphi 0, %s36
      %s40 = sphi 0, %s39
      %s56 = sphi 0, %s40
      %s60 = sphi 0, %s60
      %s62 = sphi 0, %s60
      %s63 = sphi 0, %s62
      %s77 = sphi 0, %s63
      %s81 = sphi 0, %s81
      %s83 = sphi 0, %s81
      %s84 = sphi 0, %s83
      %s98 = sphi 0, %s84
      %s102 = sphi 0, %s102
      %s104 = sphi 0, %s102
      %s105 = sphi 0, %s104
      %s119 = sphi 0, %s105
      %s123 = sphi 0, %s123
      %s125 = sphi 0, %s123
      %s126 = sphi 0, %s125
      %s140 = sphi 0, %s126
      %s144 = sphi 0, %s144
      %s146 = sphi 0, %s144
      %s147 = sphi 0, %s146
      %s161 = sphi 0, %s147
      %s165 = sphi 0, %s165
      %s167 = sphi 0, %s165
      %s168 = sphi 0, %s167
      %s182 = sphi 0, %s168
      %s186 = sphi 0, %s186
      %s188 = sphi 0, %s186
      %s189 = sphi 0, %s188
      %s203 = sphi 0, %s189
      %s207 = sphi 0, %s207
      %s209 = sphi 0, %s207
      %s210 = sphi 0, %s209
      %s224 = sphi 0, %s210
      %s228 = sphi 0, %s228
      %s230 = sphi 0, %s228
      %s231 = sphi 0, %s230
      %s245 = sphi 0, %s231
      %s249 = sphi 0, %s249
      %s251 = sphi 0, %s249
      %s252 = sphi 0, %s251
      %s266 = sphi 0, %s252
      %s270 = sphi 0, %s270
      %s272 = sphi 0, %s270
      %s273 = sphi 0, %s272
      %s287 = sphi 0, %s273
      %s291 = sphi 0, %s291
      %s293 = sphi 0, %s291
      %s294 = sphi 0, %s293
      %s308 = sphi 0, %s294
      %s312 = sphi 0, %s312
      %s314 = sphi 0, %s312
      %s315 = sphi 0, %s314
      %s329 = sphi 0, %s315
      %s333 = sphi 0, %s333
      %s335 = sphi 0, %s333
      %s336 = sphi 0, %s335
      %s350 = sphi 0, %s336
      %s356 = sphi 0, %s358
      %s359 = sphi 0, %s356
      %s360 = sphi 0, %s359
      %s376 = sphi 0, %s360
      %s382 = sphi 0, %s384
      %s385 = sphi 0, %s382
      %s386 = sphi 0, %s385
      %s402 = sphi 0, %s386
    $region4: #{aug_attention_forward.1} parent=1 // loop_header_branch
      %29 = sbr.rel (%p27) target = $region8
    $region5: #{aug_attention_forward.1} parent=1 // loop_body
      %s31 = ssub.s32 %s26, 1
      %s32 = ssub.s32 %s26, 2
      %s33 = sadd.s32 %s26, 1
      %s34 = ssub.s32 %s26, %s33
      %p35 = scmp.eq.s32.totalorder %s34, 0
      %s37 = sadd.s32 %s36, 1
      %s38 = scalar_select %p35, %s36, %s37
      %p41 = pneg %p35
      %p42 = scmp.eq.s32.totalorder %s26, 1
      %p43 = por %p41, %p42
      %p44 = scmp.ne.s32.totalorder %s36, %s39
      %p45 = scmp.eq.s32.totalorder %s26, 0
      %p46 = por %p44, %p45
      %p47 = scmp.ne.s32.totalorder %s36, %s39
      %p48 = scmp.eq.s32.totalorder %s31, 1
      %p49 = por %p47, %p48
      %p50 = scmp.ne.s32.totalorder %s39, %s40
      %p51 = scmp.eq.s32.totalorder %s31, 0
      %p52 = por %p50, %p51
      %p53 = scmp.ne.s32.totalorder %s39, %s40
      %p54 = scmp.eq.s32.totalorder %s32, 1
      %p55 = por %p53, %p54
      %p57 = scmp.ne.s32.totalorder %s40, %s56
      %p58 = scmp.eq.s32.totalorder %s32, 0
      %p59 = por %p57, %p58
      %s61 = sadd.s32 %s60, 1
      %p64 = scmp.eq.s32.totalorder %s26, 1
      %p65 = scmp.ne.s32.totalorder %s60, %s62
      %p66 = scmp.eq.s32.totalorder %s26, 0
      %p67 = por %p65, %p66
      %p68 = scmp.ne.s32.totalorder %s60, %s62
      %p69 = scmp.eq.s32.totalorder %s31, 1
      %p70 = por %p68, %p69
      %p71 = scmp.ne.s32.totalorder %s62, %s63
      %p72 = scmp.eq.s32.totalorder %s31, 0
      %p73 = por %p71, %p72
      %p74 = scmp.ne.s32.totalorder %s62, %s63
      %p75 = scmp.eq.s32.totalorder %s32, 1
      %p76 = por %p74, %p75
      %p78 = scmp.ne.s32.totalorder %s63, %s77
      %p79 = scmp.eq.s32.totalorder %s32, 0
      %p80 = por %p78, %p79
      %s82 = sadd.s32 %s81, 1
      %p85 = scmp.eq.s32.totalorder %s26, 1
      %p86 = scmp.ne.s32.totalorder %s81, %s83
      %p87 = scmp.eq.s32.totalorder %s26, 0
      %p88 = por %p86, %p87
      %p89 = scmp.ne.s32.totalorder %s81, %s83
      %p90 = scmp.eq.s32.totalorder %s31, 1
      %p91 = por %p89, %p90
      %p92 = scmp.ne.s32.totalorder %s83, %s84
      %p93 = scmp.eq.s32.totalorder %s31, 0
      %p94 = por %p92, %p93
      %p95 = scmp.ne.s32.totalorder %s83, %s84
      %p96 = scmp.eq.s32.totalorder %s32, 1
      %p97 = por %p95, %p96
      %p99 = scmp.ne.s32.totalorder %s84, %s98
      %p100 = scmp.eq.s32.totalorder %s32, 0
      %p101 = por %p99, %p100
      %s103 = sadd.s32 %s102, 1
      %p106 = scmp.eq.s32.totalorder %s26, 1
      %p107 = scmp.ne.s32.totalorder %s102, %s104
      %p108 = scmp.eq.s32.totalorder %s26, 0
      %p109 = por %p107, %p108
      %p110 = scmp.ne.s32.totalorder %s102, %s104
      %p111 = scmp.eq.s32.totalorder %s31, 1
      %p112 = por %p110, %p111
      %p113 = scmp.ne.s32.totalorder %s104, %s105
      %p114 = scmp.eq.s32.totalorder %s31, 0
      %p115 = por %p113, %p114
      %p116 = scmp.ne.s32.totalorder %s104, %s105
      %p117 = scmp.eq.s32.totalorder %s32, 1
      %p118 = por %p116, %p117
      %p120 = scmp.ne.s32.totalorder %s105, %s119
      %p121 = scmp.eq.s32.totalorder %s32, 0
      %p122 = por %p120, %p121
      %s124 = sadd.s32 %s123, 1
      %p127 = scmp.eq.s32.totalorder %s26, 1
      %p128 = scmp.ne.s32.totalorder %s123, %s125
      %p129 = scmp.eq.s32.totalorder %s26, 0
      %p130 = por %p128, %p129
      %p131 = scmp.ne.s32.totalorder %s123, %s125
      %p132 = scmp.eq.s32.totalorder %s31, 1
      %p133 = por %p131, %p132
      %p134 = scmp.ne.s32.totalorder %s125, %s126
      %p135 = scmp.eq.s32.totalorder %s31, 0
      %p136 = por %p134, %p135
      %p137 = scmp.ne.s32.totalorder %s125, %s126
      %p138 = scmp.eq.s32.totalorder %s32, 1
      %p139 = por %p137, %p138
      %p141 = scmp.ne.s32.totalorder %s126, %s140
      %p142 = scmp.eq.s32.totalorder %s32, 0
      %p143 = por %p141, %p142
      %s145 = sadd.s32 %s144, 1
      %p148 = scmp.eq.s32.totalorder %s26, 1
      %p149 = scmp.ne.s32.totalorder %s144, %s146
      %p150 = scmp.eq.s32.totalorder %s26, 0
      %p151 = por %p149, %p150
      %p152 = scmp.ne.s32.totalorder %s144, %s146
      %p153 = scmp.eq.s32.totalorder %s31, 1
      %p154 = por %p152, %p153
      %p155 = scmp.ne.s32.totalorder %s146, %s147
      %p156 = scmp.eq.s32.totalorder %s31, 0
      %p157 = por %p155, %p156
      %p158 = scmp.ne.s32.totalorder %s146, %s147
      %p159 = scmp.eq.s32.totalorder %s32, 1
      %p160 = por %p158, %p159
      %p162 = scmp.ne.s32.totalorder %s147, %s161
      %p163 = scmp.eq.s32.totalorder %s32, 0
      %p164 = por %p162, %p163
      %s166 = sadd.s32 %s165, 1
      %p169 = scmp.eq.s32.totalorder %s26, 1
      %p170 = scmp.ne.s32.totalorder %s165, %s167
      %p171 = scmp.eq.s32.totalorder %s26, 0
      %p172 = por %p170, %p171
      %p173 = scmp.ne.s32.totalorder %s165, %s167
      %p174 = scmp.eq.s32.totalorder %s31, 1
      %p175 = por %p173, %p174
      %p176 = scmp.ne.s32.totalorder %s167, %s168
      %p177 = scmp.eq.s32.totalorder %s31, 0
      %p178 = por %p176, %p177
      %p179 = scmp.ne.s32.totalorder %s167, %s168
      %p180 = scmp.eq.s32.totalorder %s32, 1
      %p181 = por %p179, %p180
      %p183 = scmp.ne.s32.totalorder %s168, %s182
      %p184 = scmp.eq.s32.totalorder %s32, 0
      %p185 = por %p183, %p184
      %s187 = sadd.s32 %s186, 1
      %p190 = scmp.eq.s32.totalorder %s26, 1
      %p191 = scmp.ne.s32.totalorder %s186, %s188
      %p192 = scmp.eq.s32.totalorder %s26, 0
      %p193 = por %p191, %p192
      %p194 = scmp.ne.s32.totalorder %s186, %s188
      %p195 = scmp.eq.s32.totalorder %s31, 1
      %p196 = por %p194, %p195
      %p197 = scmp.ne.s32.totalorder %s188, %s189
      %p198 = scmp.eq.s32.totalorder %s31, 0
      %p199 = por %p197, %p198
      %p200 = scmp.ne.s32.totalorder %s188, %s189
      %p201 = scmp.eq.s32.totalorder %s32, 1
      %p202 = por %p200, %p201
      %p204 = scmp.ne.s32.totalorder %s189, %s203
      %p205 = scmp.eq.s32.totalorder %s32, 0
      %p206 = por %p204, %p205
      %s208 = sadd.s32 %s207, 1
      %p211 = scmp.eq.s32.totalorder %s26, 1
      %p212 = scmp.ne.s32.totalorder %s207, %s209
      %p213 = scmp.eq.s32.totalorder %s26, 0
      %p214 = por %p212, %p213
      %p215 = scmp.ne.s32.totalorder %s207, %s209
      %p216 = scmp.eq.s32.totalorder %s31, 1
      %p217 = por %p215, %p216
      %p218 = scmp.ne.s32.totalorder %s209, %s210
      %p219 = scmp.eq.s32.totalorder %s31, 0
      %p220 = por %p218, %p219
      %p221 = scmp.ne.s32.totalorder %s209, %s210
      %p222 = scmp.eq.s32.totalorder %s32, 1
      %p223 = por %p221, %p222
      %p225 = scmp.ne.s32.totalorder %s210, %s224
      %p226 = scmp.eq.s32.totalorder %s32, 0
      %p227 = por %p225, %p226
      %s229 = sadd.s32 %s228, 1
      %p232 = scmp.eq.s32.totalorder %s26, 1
      %p233 = scmp.ne.s32.totalorder %s228, %s230
      %p234 = scmp.eq.s32.totalorder %s26, 0
      %p235 = por %p233, %p234
      %p236 = scmp.ne.s32.totalorder %s228, %s230
      %p237 = scmp.eq.s32.totalorder %s31, 1
      %p238 = por %p236, %p237
      %p239 = scmp.ne.s32.totalorder %s230, %s231
      %p240 = scmp.eq.s32.totalorder %s31, 0
      %p241 = por %p239, %p240
      %p242 = scmp.ne.s32.totalorder %s230, %s231
      %p243 = scmp.eq.s32.totalorder %s32, 1
      %p244 = por %p242, %p243
      %p246 = scmp.ne.s32.totalorder %s231, %s245
      %p247 = scmp.eq.s32.totalorder %s32, 0
      %p248 = por %p246, %p247
      %s250 = sadd.s32 %s249, 1
      %p253 = scmp.eq.s32.totalorder %s26, 1
      %p254 = scmp.ne.s32.totalorder %s249, %s251
      %p255 = scmp.eq.s32.totalorder %s26, 0
      %p256 = por %p254, %p255
      %p257 = scmp.ne.s32.totalorder %s249, %s251
      %p258 = scmp.eq.s32.totalorder %s31, 1
      %p259 = por %p257, %p258
      %p260 = scmp.ne.s32.totalorder %s251, %s252
      %p261 = scmp.eq.s32.totalorder %s31, 0
      %p262 = por %p260, %p261
      %p263 = scmp.ne.s32.totalorder %s251, %s252
      %p264 = scmp.eq.s32.totalorder %s32, 1
      %p265 = por %p263, %p264
      %p267 = scmp.ne.s32.totalorder %s252, %s266
      %p268 = scmp.eq.s32.totalorder %s32, 0
      %p269 = por %p267, %p268
      %s271 = sadd.s32 %s270, 1
      %p274 = scmp.eq.s32.totalorder %s26, 1
      %p275 = scmp.ne.s32.totalorder %s270, %s272
      %p276 = scmp.eq.s32.totalorder %s26, 0
      %p277 = por %p275, %p276
      %p278 = scmp.ne.s32.totalorder %s270, %s272
      %p279 = scmp.eq.s32.totalorder %s31, 1
      %p280 = por %p278, %p279
      %p281 = scmp.ne.s32.totalorder %s272, %s273
      %p282 = scmp.eq.s32.totalorder %s31, 0
      %p283 = por %p281, %p282
      %p284 = scmp.ne.s32.totalorder %s272, %s273
      %p285 = scmp.eq.s32.totalorder %s32, 1
      %p286 = por %p284, %p285
      %p288 = scmp.ne.s32.totalorder %s273, %s287
      %p289 = scmp.eq.s32.totalorder %s32, 0
      %p290 = por %p288, %p289
      %s292 = sadd.s32 %s291, 1
      %p295 = scmp.eq.s32.totalorder %s26, 1
      %p296 = scmp.ne.s32.totalorder %s291, %s293
      %p297 = scmp.eq.s32.totalorder %s26, 0
      %p298 = por %p296, %p297
      %p299 = scmp.ne.s32.totalorder %s291, %s293
      %p300 = scmp.eq.s32.totalorder %s31, 1
      %p301 = por %p299, %p300
      %p302 = scmp.ne.s32.totalorder %s293, %s294
      %p303 = scmp.eq.s32.totalorder %s31, 0
      %p304 = por %p302, %p303
      %p305 = scmp.ne.s32.totalorder %s293, %s294
      %p306 = scmp.eq.s32.totalorder %s32, 1
      %p307 = por %p305, %p306
      %p309 = scmp.ne.s32.totalorder %s294, %s308
      %p310 = scmp.eq.s32.totalorder %s32, 0
      %p311 = por %p309, %p310
      %s313 = sadd.s32 %s312, 1
      %p316 = scmp.eq.s32.totalorder %s26, 1
      %p317 = scmp.ne.s32.totalorder %s312, %s314
      %p318 = scmp.eq.s32.totalorder %s26, 0
      %p319 = por %p317, %p318
      %p320 = scmp.ne.s32.totalorder %s312, %s314
      %p321 = scmp.eq.s32.totalorder %s31, 1
      %p322 = por %p320, %p321
      %p323 = scmp.ne.s32.totalorder %s314, %s315
      %p324 = scmp.eq.s32.totalorder %s31, 0
      %p325 = por %p323, %p324
      %p326 = scmp.ne.s32.totalorder %s314, %s315
      %p327 = scmp.eq.s32.totalorder %s32, 1
      %p328 = por %p326, %p327
      %p330 = scmp.ne.s32.totalorder %s315, %s329
      %p331 = scmp.eq.s32.totalorder %s32, 0
      %p332 = por %p330, %p331
      %s334 = sadd.s32 %s333, 1
      %p337 = scmp.eq.s32.totalorder %s26, 1
      %p338 = scmp.ne.s32.totalorder %s333, %s335
      %p339 = scmp.eq.s32.totalorder %s26, 0
      %p340 = por %p338, %p339
      %p341 = scmp.ne.s32.totalorder %s333, %s335
      %p342 = scmp.eq.s32.totalorder %s31, 1
      %p343 = por %p341, %p342
      %p344 = scmp.ne.s32.totalorder %s335, %s336
      %p345 = scmp.eq.s32.totalorder %s31, 0
      %p346 = por %p344, %p345
      %p347 = scmp.ne.s32.totalorder %s335, %s336
      %p348 = scmp.eq.s32.totalorder %s32, 1
      %p349 = por %p347, %p348
      %p351 = scmp.ne.s32.totalorder %s336, %s350
      %p352 = scmp.eq.s32.totalorder %s32, 0
      %p353 = por %p351, %p352
      %s354 = ssub.s32 %s26, %s33
      %p355 = scmp.eq.s32.totalorder %s354, 0
      %s357 = sadd.s32 %s356, 1
      %s358 = scalar_select %p355, %s356, %s357
      %p361 = pneg %p355
      %p362 = scmp.eq.s32.totalorder %s26, 1
      %p363 = por %p361, %p362
      %p364 = scmp.ne.s32.totalorder %s356, %s359
      %p365 = scmp.eq.s32.totalorder %s26, 0
      %p366 = por %p364, %p365
      %p367 = scmp.ne.s32.totalorder %s356, %s359
      %p368 = scmp.eq.s32.totalorder %s31, 1
      %p369 = por %p367, %p368
      %p370 = scmp.ne.s32.totalorder %s359, %s360
      %p371 = scmp.eq.s32.totalorder %s31, 0
      %p372 = por %p370, %p371
      %p373 = scmp.ne.s32.totalorder %s359, %s360
      %p374 = scmp.eq.s32.totalorder %s32, 1
      %p375 = por %p373, %p374
      %p377 = scmp.ne.s32.totalorder %s360, %s376
      %p378 = scmp.eq.s32.totalorder %s32, 0
      %p379 = por %p377, %p378
      %s380 = ssub.s32 %s26, %s33
      %p381 = scmp.eq.s32.totalorder %s380, 0
      %s383 = sadd.s32 %s382, 1
      %s384 = scalar_select %p381, %s382, %s383
      %p387 = pneg %p381
      %p388 = scmp.eq.s32.totalorder %s26, 1
      %p389 = por %p387, %p388
      %p390 = scmp.ne.s32.totalorder %s382, %s385
      %p391 = scmp.eq.s32.totalorder %s26, 0
      %p392 = por %p390, %p391
      %p393 = scmp.ne.s32.totalorder %s382, %s385
      %p394 = scmp.eq.s32.totalorder %s31, 1
      %p395 = por %p393, %p394
      %p396 = scmp.ne.s32.totalorder %s385, %s386
      %p397 = scmp.eq.s32.totalorder %s31, 0
      %p398 = por %p396, %p397
      %p399 = scmp.ne.s32.totalorder %s385, %s386
      %p400 = scmp.eq.s32.totalorder %s32, 1
      %p401 = por %p399, %p400
      %p403 = scmp.ne.s32.totalorder %s386, %s402
      %p404 = scmp.eq.s32.totalorder %s32, 0
      %p405 = por %p403, %p404
      %p406 = scmp.le.s32.totalorder 1, %s26
      %p407 = scmp.lt.s32.totalorder %s26, 3
      %p408 = pnand %p406, %p407
      %p409 = pneg %p408
      // Predicated region
      $region9: #{aug_attention_forward.1} parent=5 // pred_check
        _
      $region10: #{aug_attention_forward.1} parent=5 // pred_check_branch
        %411 = sbr.rel (%p408) target = $region12
      $region11: #{aug_attention_forward.1} parent=5 // pred_region
        %s412 = ssub.s32 %s26, 1
        // Predicated region
        $region13: #{aug_attention_forward.1} parent=11 // pred_check
          %p413 = pneg %p73
        $region14: #{aug_attention_forward.1} parent=11 // pred_check_branch
          %415 = sbr.rel (%p413) target = $region16
        $region15: #{aug_attention_forward.1} parent=11 // pred_region
          _
        $region16: #{aug_attention_forward.1} parent=11 // pred_fallthru
          _
        // Predicated region
        $region17: #{aug_attention_forward.1} parent=11 // pred_check
          %p416 = pneg %p94
        $region18: #{aug_attention_forward.1} parent=11 // pred_check_branch
          %418 = sbr.rel (%p416) target = $region20
        $region19: #{aug_attention_forward.1} parent=11 // pred_region
          _
        $region20: #{aug_attention_forward.1} parent=11 // pred_fallthru
          _
        // Predicated region
        $region21: #{aug_attention_forward.1} parent=11 // pred_check
          %p419 = pneg %p115
        $region22: #{aug_attention_forward.1} parent=11 // pred_check_branch
          %421 = sbr.rel (%p419) target = $region24
        $region23: #{aug_attention_forward.1} parent=11 // pred_region
          _
        $region24: #{aug_attention_forward.1} parent=11 // pred_fallthru
          _
        // Predicated region
        $region25: #{aug_attention_forward.1} parent=11 // pred_check
          %p422 = pneg %p136
        $region26: #{aug_attention_forward.1} parent=11 // pred_check_branch
          %424 = sbr.rel (%p422) target = $region28
        $region27: #{aug_attention_forward.1} parent=11 // pred_region
          _
        $region28: #{aug_attention_forward.1} parent=11 // pred_fallthru
          _
        // Predicated region
        $region29: #{aug_attention_forward.1} parent=11 // pred_check
          %p425 = pneg %p157
        $region30: #{aug_attention_forward.1} parent=11 // pred_check_branch
          %427 = sbr.rel (%p425) target = $region32
        $region31: #{aug_attention_forward.1} parent=11 // pred_region
          _
        $region32: #{aug_attention_forward.1} parent=11 // pred_fallthru
          _
        // Predicated region
        $region33: #{aug_attention_forward.1} parent=11 // pred_check
          %p428 = pneg %p178
        $region34: #{aug_attention_forward.1} parent=11 // pred_check_branch
          %430 = sbr.rel (%p428) target = $region36
        $region35: #{aug_attention_forward.1} parent=11 // pred_region
          _
        $region36: #{aug_attention_forward.1} parent=11 // pred_fallthru
          _
        // Predicated region
        $region37: #{aug_attention_forward.1} parent=11 // pred_check
          %p431 = pneg %p199
        $region38: #{aug_attention_forward.1} parent=11 // pred_check_branch
          %433 = sbr.rel (%p431) target = $region40
        $region39: #{aug_attention_forward.1} parent=11 // pred_region
          _
        $region40: #{aug_attention_forward.1} parent=11 // pred_fallthru
          _
        // Predicated region
        $region41: #{aug_attention_forward.1} parent=11 // pred_check
          %p434 = pneg %p220
        $region42: #{aug_attention_forward.1} parent=11 // pred_check_branch
          %436 = sbr.rel (%p434) target = $region44
        $region43: #{aug_attention_forward.1} parent=11 // pred_region
          _
        $region44: #{aug_attention_forward.1} parent=11 // pred_fallthru
          _
        // Predicated region
        $region45: #{aug_attention_forward.1} parent=11 // pred_check
          %p437 = pneg %p241
        $region46: #{aug_attention_forward.1} parent=11 // pred_check_branch
          %439 = sbr.rel (%p437) target = $region48
        $region47: #{aug_attention_forward.1} parent=11 // pred_region
          _
        $region48: #{aug_attention_forward.1} parent=11 // pred_fallthru
          _
        // Predicated region
        $region49: #{aug_attention_forward.1} parent=11 // pred_check
          %p440 = pneg %p262
        $region50: #{aug_attention_forward.1} parent=11 // pred_check_branch
          %442 = sbr.rel (%p440) target = $region52
        $region51: #{aug_attention_forward.1} parent=11 // pred_region
          _
        $region52: #{aug_attention_forward.1} parent=11 // pred_fallthru
          _
        // Predicated region
        $region53: #{aug_attention_forward.1} parent=11 // pred_check
          %p443 = pneg %p283
        $region54: #{aug_attention_forward.1} parent=11 // pred_check_branch
          %445 = sbr.rel (%p443) target = $region56
        $region55: #{aug_attention_forward.1} parent=11 // pred_region
          _
        $region56: #{aug_attention_forward.1} parent=11 // pred_fallthru
          _
        // Predicated region
        $region57: #{aug_attention_forward.1} parent=11 // pred_check
          %p446 = pneg %p304
        $region58: #{aug_attention_forward.1} parent=11 // pred_check_branch
          %448 = sbr.rel (%p446) target = $region60
        $region59: #{aug_attention_forward.1} parent=11 // pred_region
          _
        $region60: #{aug_attention_forward.1} parent=11 // pred_fallthru
          _
        // Predicated region
        $region61: #{aug_attention_forward.1} parent=11 // pred_check
          %p449 = pneg %p325
        $region62: #{aug_attention_forward.1} parent=11 // pred_check_branch
          %451 = sbr.rel (%p449) target = $region64
        $region63: #{aug_attention_forward.1} parent=11 // pred_region
          _
        $region64: #{aug_attention_forward.1} parent=11 // pred_fallthru
          _
        // Predicated region
        $region65: #{aug_attention_forward.1} parent=11 // pred_check
          %p452 = pneg %p346
        $region66: #{aug_attention_forward.1} parent=11 // pred_check_branch
          %454 = sbr.rel (%p452) target = $region68
        $region67: #{aug_attention_forward.1} parent=11 // pred_region
          _
        $region68: #{aug_attention_forward.1} parent=11 // pred_fallthru
          _
      $region12: #{aug_attention_forward.1} parent=5 // pred_fallthru
        _
      %p455 = scmp.lt.s32.totalorder %s26, 2
      // Predicated region
      $region69: #{aug_attention_forward.1} parent=5 // pred_check
        %p456 = pneg %p455
      $region70: #{aug_attention_forward.1} parent=5 // pred_check_branch
        %458 = sbr.rel (%p456) target = $region72
      $region71: #{aug_attention_forward.1} parent=5 // pred_region
        // Predicated region
        $region73: #{aug_attention_forward.1} parent=71 // pred_check
          %p459 = pneg %p46
        $region74: #{aug_attention_forward.1} parent=71 // pred_check_branch
          %461 = sbr.rel (%p459) target = $region76
        $region75: #{aug_attention_forward.1} parent=71 // pred_region
          %p462 = scmp.lt.s32.totalorder %s26, 1
          %s463 = scalar_select %p462, %s26, 1
          %s464 = smul.addr %s463, 8
          %s465 = smul.addr %s464, 8
          %s466 = scalar_lea.vmem %s0, %s465
        $region76: #{aug_attention_forward.1} parent=71 // pred_fallthru
          _
      $region72: #{aug_attention_forward.1} parent=5 // pred_fallthru
        _
      %p467 = scmp.le.s32.totalorder 1, %s26
      %p468 = scmp.lt.s32.totalorder %s26, 3
      %p469 = pnand %p467, %p468
      %p470 = pneg %p469
      // Predicated region
      $region77: #{aug_attention_forward.1} parent=5 // pred_check
        _
      $region78: #{aug_attention_forward.1} parent=5 // pred_check_branch
        %472 = sbr.rel (%p469) target = $region80
      $region79: #{aug_attention_forward.1} parent=5 // pred_region
        %s473 = ssub.s32 %s26, 1
        %p474 = scmp.lt.s32.totalorder %s31, 1
        %s475 = scalar_select %p474, %s31, 1
        %s476 = smul.addr %s475, 8
        %s477 = smul.addr %s476, 8
        %s478 = scalar_lea.vmem %s0, %s477
        %p479 = pneg %p52
        %p480 = pneg %p49
        %p481 = pneg %p73
        %p482 = pneg %p70
        %p483 = pneg %p94
        %p484 = pneg %p91
        %p485 = pneg %p115
        %p486 = pneg %p112
        %p487 = pneg %p136
        %p488 = pneg %p133
        %p489 = pneg %p157
        %p490 = pneg %p154
        %p491 = pneg %p178
        %p492 = pneg %p175
        %p493 = pneg %p199
        %p494 = pneg %p196
        %p495 = pneg %p220
        %p496 = pneg %p217
        %p497 = pneg %p241
        %p498 = pneg %p238
        %p499 = pneg %p262
        %p500 = pneg %p259
        %p501 = pneg %p283
        %p502 = pneg %p280
        %p503 = pneg %p304
        %p504 = pneg %p301
        %p505 = pneg %p325
        %p506 = pneg %p322
        %p507 = pneg %p346
        %p508 = pneg %p343
        %p509 = pneg %p372
        %p510 = pneg %p369
        %p511 = scmp.lt.s32.totalorder %s31, 1
        %s512 = scalar_select %p511, %s31, 1
        %s513 = smul.addr %s512, 8
        %s514 = smul.addr %s513, 8
        %s515 = scalar_lea.vmem %s15, %s514
        %p516 = pneg %p398
        %p517 = pneg %p395
        %s518 = sand.u32 %s385, 1
        %s519 = scalar_lea.sflag [#allocation5], %s518
        %s520 = sand.u32 %s385, 1
        %s521 = smul.addr %s520, 512
        %s522 = scalar_lea.vmem [#allocation4], %s521
        %p523 = scmp.lt.s32.totalorder %s31, 1
        %s524 = scalar_select %p523, %s31, 1
        %s525 = smul.addr %s524, 8
        %s526 = smul.addr %s525, 8
        %s527 = scalar_lea.vmem %s0, %s526
        %p528 = scmp.lt.s32.totalorder %s31, 1
        %s529 = scalar_select %p528, %s31, 1
        %s530 = smul.addr %s529, 8
        %s531 = smul.addr %s530, 8
        %s532 = scalar_lea.vmem %s15, %s531
        %v533 = vld [vmem:[%s527] sm:$0xff]
        %v534 = vld [vmem:[%s527 + $0x8] sm:$0xff]
        %v535 = vld [vmem:[%s527 + $0x10] sm:$0xff]
        %v536 = vld [vmem:[%s527 + $0x18] sm:$0xff]
        %v537 = vld [vmem:[%s527 + $0x20] sm:$0xff]
        %v538 = vld [vmem:[%s527 + $0x28] sm:$0xff]
        %v539 = vld [vmem:[%s527 + $0x30] sm:$0xff]
        %v540 = vld [vmem:[%s527 + $0x38] sm:$0xff]
        %v541 = vld [vmem:[%s1] sm:$0xff]
        %v542 = vld [vmem:[%s1 + $0x8] sm:$0xff]
        %v543 = vld [vmem:[%s1 + $0x10] sm:$0xff]
        %v544 = vld [vmem:[%s1 + $0x18] sm:$0xff]
        %v545 = vld [vmem:[%s2] sm:$0xff]
        %v546 = vld [vmem:[%s2 + $0x8] sm:$0xff]
        %v547 = vld [vmem:[%s2 + $0x10] sm:$0xff]
        %v548 = vld [vmem:[%s2 + $0x18] sm:$0xff]
        %550 = vset.pattern.permute.xlu0 0
        %551 = vperm.xlu0 %550, %v545
        %v552 = vpop.permute.xlu0 %551
        %555 = vset.pattern.permute.xlu0 0
        %556 = vperm.xlu0 %555, %v546
        %v557 = vpop.permute.xlu0 %556
        %560 = vset.pattern.permute.xlu0 0
        %561 = vperm.xlu0 %560, %v547
        %v562 = vpop.permute.xlu0 %561
        %565 = vset.pattern.permute.xlu0 0
        %566 = vperm.xlu0 %565, %v548
        %v567 = vpop.permute.xlu0 %566
        %vm569 = vcmask 261120
        %v571 = vsel %vm569, %v541, 0
        %v574 = vsel %vm569, %v542, 0
        %v577 = vsel %vm569, %v543, 0
        %v580 = vsel %vm569, %v544, 0
        %582 = vmatprep.subr.mxu0 %v534
        %583 = vmatpush1.msra.mxu0 %v533
        %584 = vmatprep.subr.mxu0 %v536
        %585 = vmatpush1.msra.mxu0 %v535
        %586 = vmatprep.subr.mxu0 %v538
        %587 = vmatpush1.msra.mxu0 %v537
        %588 = vmatprep.subr.mxu0 %v540
        %589 = vmatpush1.msra.mxu0 %v539
        %590 = vmatprep.subr.mxu0 0.0
        %591 = vmatpush1.msra.mxu0 0.0
        %592 = vmatprep.subr.mxu0 0.0
        %593 = vmatpush1.msra.mxu0 0.0
        %594 = vmatprep.subr.mxu0 0.0
        %595 = vmatpush1.msra.mxu0 0.0
        %596 = vmatprep.subr.mxu0 0.0
        %597 = vmatpush1.msra.mxu0 0.0
        %598 = vmatprep.subr.mxu0 0.0
        %599 = vmatpush1.msra.mxu0 0.0
        %600 = vmatprep.subr.mxu0 0.0
        %601 = vmatpush1.msra.mxu0 0.0
        %602 = vmatprep.subr.mxu0 0.0
        %603 = vmatpush1.msra.mxu0 0.0
        %604 = vmatprep.subr.mxu0 0.0
        %605 = vmatpush1.msra.mxu0 0.0
        %606 = vmatprep.subr.mxu0 0.0
        %607 = vmatpush1.msra.mxu0 0.0
        %608 = vmatprep.subr.mxu0 0.0
        %609 = vmatpush1.msra.mxu0 0.0
        %610 = vmatprep.subr.mxu0 0.0
        %611 = vmatpush1.msra.mxu0 0.0
        %612 = vmatprep.subr.mxu0 0.0
        %613 = vmatpush1.msra.mxu0 0.0
        %614 = vmatprep.subr.mxu0 0.0
        %615 = vmatpush1.msra.mxu0 0.0
        %616 = vmatprep.subr.mxu0 0.0
        %617 = vmatpush1.msra.mxu0 0.0
        %618 = vmatprep.subr.mxu0 0.0
        %619 = vmatpush1.msra.mxu0 0.0
        %620 = vmatprep.subr.mxu0 0.0
        %621 = vmatpush1.msra.mxu0 0.0
        %622 = vmatprep.subr.mxu0 0.0
        %623 = vmatpush1.msra.mxu0 0.0
        %624 = vmatprep.subr.mxu0 0.0
        %625 = vmatpush1.msra.mxu0 0.0
        %626 = vmatprep.subr.mxu0 0.0
        %627 = vmatpush1.msra.mxu0 0.0
        %628 = vmatprep.subr.mxu0 0.0
        %629 = vmatpush1.msra.mxu0 0.0
        %630 = vmatprep.subr.mxu0 0.0
        %631 = vmatpush1.msra.mxu0 0.0
        %632 = vmatprep.subr.mxu0 0.0
        %633 = vmatpush1.msra.mxu0 0.0
        %634 = vmatprep.subr.mxu0 0.0
        %635 = vmatpush1.msra.mxu0 0.0
        %636 = vmatprep.subr.mxu0 0.0
        %637 = vmatpush1.msra.mxu0 0.0
        %638 = vmatprep.subr.mxu0 0.0
        %639 = vmatpush1.msra.mxu0 0.0
        %640 = vmatprep.subr.mxu0 0.0
        %641 = vmatpush1.msra.mxu0 0.0
        %642 = vmatprep.subr.mxu0 0.0
        %643 = vmatpush1.msra.mxu0 0.0
        %644 = vmatprep.subr.mxu0 0.0
        %645 = vmatpush1.msra.mxu0 0.0
        %646 = vmatprep.mubr.f32.mxu0 0.0
        %647 = vmatmul.mubr.f32.gmra.mrb[0].mxu0 %v571
        %v648 = vpop.f32.mrb[0].mxu0
        %v649 = vadd.f32 %v552, %v648
        %v650 = vpop.f32.mrb[0].mxu0
        %v651 = vadd.f32 %v552, %v650
        %652 = vmatprep.mubr.f32.mxu0 0.0
        %653 = vmatmul.mubr.f32.gmra.mrb[0].mxu0 %v574
        %v654 = vpop.f32.mrb[0].mxu0
        %v655 = vadd.f32 %v557, %v654
        %v656 = vpop.f32.mrb[0].mxu0
        %v657 = vadd.f32 %v557, %v656
        %658 = vmatprep.mubr.f32.mxu0 0.0
        %659 = vmatmul.mubr.f32.gmra.mrb[0].mxu0 %v577
        %v660 = vpop.f32.mrb[0].mxu0
        %v661 = vadd.f32 %v562, %v660
        %v662 = vpop.f32.mrb[0].mxu0
        %v663 = vadd.f32 %v562, %v662
        %664 = vmatprep.mubr.f32.mxu0 0.0
        %665 = vmatmul.mubr.f32.gmra.mrb[0].mxu0 %v580
        %v666 = vpop.f32.mrb[0].mxu0
        %v667 = vadd.f32 %v567, %v666
        %v668 = vpop.f32.mrb[0].mxu0
        %v669 = vadd.f32 %v567, %v668
        %670 = vdwg.mxu0
        %v671 = vmax.f32 %v649, 0.0
        %v672 = vmax.f32 %v651, 0.0
        %v673 = vmax.f32 %v655, 0.0
        %v674 = vmax.f32 %v657, 0.0
        %v675 = vmax.f32 %v661, 0.0
        %v676 = vmax.f32 %v663, 0.0
        %v677 = vmax.f32 %v667, 0.0
        %v678 = vmax.f32 %v669, 0.0
        %v679 = vld [vmem:[%s3] sm:$0xff]
        %v680 = vld [vmem:[%s3 + $0x8] sm:$0xff]
        %v681 = vld [vmem:[%s3 + $0x10] sm:$0xff]
        %v682 = vld [vmem:[%s3 + $0x18] sm:$0xff]
        %v683 = vld [vmem:[%s4] sm:$0xff]
        %v684 = vld [vmem:[%s4 + $0x8] sm:$0xff]
        %v685 = vld [vmem:[%s4 + $0x10] sm:$0xff]
        %v686 = vld [vmem:[%s4 + $0x18] sm:$0xff]
        %688 = vset.pattern.permute.xlu0 0
        %689 = vperm.xlu0 %688, %v683
        %v690 = vpop.permute.xlu0 %689
        %693 = vset.pattern.permute.xlu0 0
        %694 = vperm.xlu0 %693, %v684
        %v695 = vpop.permute.xlu0 %694
        %698 = vset.pattern.permute.xlu0 0
        %699 = vperm.xlu0 %698, %v685
        %v700 = vpop.permute.xlu0 %699
        %703 = vset.pattern.permute.xlu0 0
        %704 = vperm.xlu0 %703, %v686
        %v705 = vpop.permute.xlu0 %704
        %v708 = vsel %vm569, %v679, 0
        %v711 = vsel %vm569, %v680, 0
        %v714 = vsel %vm569, %v681, 0
        %v717 = vsel %vm569, %v682, 0
        %719 = vmatprep.subr.mxu0 %v672
        %720 = vmatpush1.msra.mxu0 %v671
        %721 = vmatprep.subr.mxu0 %v674
        %722 = vmatpush1.msra.mxu0 %v673
        %723 = vmatprep.subr.mxu0 %v676
        %724 = vmatpush1.msra.mxu0 %v675
        %725 = vmatprep.subr.mxu0 %v678
        %726 = vmatpush1.msra.mxu0 %v677
        %727 = vmatprep.subr.mxu0 0.0
        %728 = vmatpush1.msra.mxu0 0.0
        %729 = vmatprep.subr.mxu0 0.0
        %730 = vmatpush1.msra.mxu0 0.0
        %731 = vmatprep.subr.mxu0 0.0
        %732 = vmatpush1.msra.mxu0 0.0
        %733 = vmatprep.subr.mxu0 0.0
        %734 = vmatpush1.msra.mxu0 0.0
        %735 = vmatprep.subr.mxu0 0.0
        %736 = vmatpush1.msra.mxu0 0.0
        %737 = vmatprep.subr.mxu0 0.0
        %738 = vmatpush1.msra.mxu0 0.0
        %739 = vmatprep.subr.mxu0 0.0
        %740 = vmatpush1.msra.mxu0 0.0
        %741 = vmatprep.subr.mxu0 0.0
        %742 = vmatpush1.msra.mxu0 0.0
        %743 = vmatprep.subr.mxu0 0.0
        %744 = vmatpush1.msra.mxu0 0.0
        %745 = vmatprep.subr.mxu0 0.0
        %746 = vmatpush1.msra.mxu0 0.0
        %747 = vmatprep.subr.mxu0 0.0
        %748 = vmatpush1.msra.mxu0 0.0
        %749 = vmatprep.subr.mxu0 0.0
        %750 = vmatpush1.msra.mxu0 0.0
        %751 = vmatprep.subr.mxu0 0.0
        %752 = vmatpush1.msra.mxu0 0.0
        %753 = vmatprep.subr.mxu0 0.0
        %754 = vmatpush1.msra.mxu0 0.0
        %755 = vmatprep.subr.mxu0 0.0
        %756 = vmatpush1.msra.mxu0 0.0
        %757 = vmatprep.subr.mxu0 0.0
        %758 = vmatpush1.msra.mxu0 0.0
        %759 = vmatprep.subr.mxu0 0.0
        %760 = vmatpush1.msra.mxu0 0.0
        %761 = vmatprep.subr.mxu0 0.0
        %762 = vmatpush1.msra.mxu0 0.0
        %763 = vmatprep.subr.mxu0 0.0
        %764 = vmatpush1.msra.mxu0 0.0
        %765 = vmatprep.subr.mxu0 0.0
        %766 = vmatpush1.msra.mxu0 0.0
        %767 = vmatprep.subr.mxu0 0.0
        %768 = vmatpush1.msra.mxu0 0.0
        %769 = vmatprep.subr.mxu0 0.0
        %770 = vmatpush1.msra.mxu0 0.0
        %771 = vmatprep.subr.mxu0 0.0
        %772 = vmatpush1.msra.mxu0 0.0
        %773 = vmatprep.subr.mxu0 0.0
        %774 = vmatpush1.msra.mxu0 0.0
        %775 = vmatprep.subr.mxu0 0.0
        %776 = vmatpush1.msra.mxu0 0.0
        %777 = vmatprep.subr.mxu0 0.0
        %778 = vmatpush1.msra.mxu0 0.0
        %779 = vmatprep.subr.mxu0 0.0
        %780 = vmatpush1.msra.mxu0 0.0
        %781 = vmatprep.subr.mxu0 0.0
        %782 = vmatpush1.msra.mxu0 0.0
        %783 = vmatprep.mubr.f32.mxu0 0.0
        %784 = vmatmul.mubr.f32.gmra.mrb[0].mxu0 %v708
        %v785 = vpop.f32.mrb[0].mxu0
        %v786 = vadd.f32 %v690, %v785
        %v787 = vpop.f32.mrb[0].mxu0
        %v788 = vadd.f32 %v690, %v787
        %789 = vmatprep.mubr.f32.mxu0 0.0
        %790 = vmatmul.mubr.f32.gmra.mrb[0].mxu0 %v711
        %v791 = vpop.f32.mrb[0].mxu0
        %v792 = vadd.f32 %v695, %v791
        %v793 = vpop.f32.mrb[0].mxu0
        %v794 = vadd.f32 %v695, %v793
        %795 = vmatprep.mubr.f32.mxu0 0.0
        %796 = vmatmul.mubr.f32.gmra.mrb[0].mxu0 %v714
        %v797 = vpop.f32.mrb[0].mxu0
        %v798 = vadd.f32 %v700, %v797
        %v799 = vpop.f32.mrb[0].mxu0
        %v800 = vadd.f32 %v700, %v799
        %801 = vmatprep.mubr.f32.mxu0 0.0
        %802 = vmatmul.mubr.f32.gmra.mrb[0].mxu0 %v717
        %v803 = vpop.f32.mrb[0].mxu0
        %v804 = vadd.f32 %v705, %v803
        %v805 = vpop.f32.mrb[0].mxu0
        %v806 = vadd.f32 %v705, %v805
        %807 = vdwg.mxu0
        %v808 = vld [vmem:[%s5] sm:$0xff]
        %v809 = vld [vmem:[%s5 + $0x8] sm:$0xff]
        %v810 = vld [vmem:[%s5 + $0x10] sm:$0xff]
        %v811 = vld [vmem:[%s5 + $0x18] sm:$0xff]
        %v812 = vld [vmem:[%s6] sm:$0xff]
        %v813 = vld [vmem:[%s6 + $0x8] sm:$0xff]
        %v814 = vld [vmem:[%s6 + $0x10] sm:$0xff]
        %v815 = vld [vmem:[%s6 + $0x18] sm:$0xff]
        %817 = vset.pattern.permute.xlu0 0
        %818 = vperm.xlu0 %817, %v812
        %v819 = vpop.permute.xlu0 %818
        %822 = vset.pattern.permute.xlu0 0
        %823 = vperm.xlu0 %822, %v813
        %v824 = vpop.permute.xlu0 %823
        %827 = vset.pattern.permute.xlu0 0
        %828 = vperm.xlu0 %827, %v814
        %v829 = vpop.permute.xlu0 %828
        %832 = vset.pattern.permute.xlu0 0
        %833 = vperm.xlu0 %832, %v815
        %v834 = vpop.permute.xlu0 %833
        %v837 = vsel %vm569, %v808, 0
        %v840 = vsel %vm569, %v809, 0
        %v843 = vsel %vm569, %v810, 0
        %v846 = vsel %vm569, %v811, 0
        %848 = vmatprep.subr.mxu0 %v788
        %849 = vmatpush1.msra.mxu0 %v786
        %850 = vmatprep.subr.mxu0 %v794
        %851 = vmatpush1.msra.mxu0 %v792
        %852 = vmatprep.subr.mxu0 %v800
        %853 = vmatpush1.msra.mxu0 %v798
        %854 = vmatprep.subr.mxu0 %v806
        %855 = vmatpush1.msra.mxu0 %v804
        %856 = vmatprep.subr.mxu0 0.0
        %857 = vmatpush1.msra.mxu0 0.0
        %858 = vmatprep.subr.mxu0 0.0
        %859 = vmatpush1.msra.mxu0 0.0
        %860 = vmatprep.subr.mxu0 0.0
        %861 = vmatpush1.msra.mxu0 0.0
        %862 = vmatprep.subr.mxu0 0.0
        %863 = vmatpush1.msra.mxu0 0.0
        %864 = vmatprep.subr.mxu0 0.0
        %865 = vmatpush1.msra.mxu0 0.0
        %866 = vmatprep.subr.mxu0 0.0
        %867 = vmatpush1.msra.mxu0 0.0
        %868 = vmatprep.subr.mxu0 0.0
        %869 = vmatpush1.msra.mxu0 0.0
        %870 = vmatprep.subr.mxu0 0.0
        %871 = vmatpush1.msra.mxu0 0.0
        %872 = vmatprep.subr.mxu0 0.0
        %873 = vmatpush1.msra.mxu0 0.0
        %874 = vmatprep.subr.mxu0 0.0
        %875 = vmatpush1.msra.mxu0 0.0
        %876 = vmatprep.subr.mxu0 0.0
        %877 = vmatpush1.msra.mxu0 0.0
        %878 = vmatprep.subr.mxu0 0.0
        %879 = vmatpush1.msra.mxu0 0.0
        %880 = vmatprep.subr.mxu0 0.0
        %881 = vmatpush1.msra.mxu0 0.0
        %882 = vmatprep.subr.mxu0 0.0
        %883 = vmatpush1.msra.mxu0 0.0
        %884 = vmatprep.subr.mxu0 0.0
        %885 = vmatpush1.msra.mxu0 0.0
        %886 = vmatprep.subr.mxu0 0.0
        %887 = vmatpush1.msra.mxu0 0.0
        %888 = vmatprep.subr.mxu0 0.0
        %889 = vmatpush1.msra.mxu0 0.0
        %890 = vmatprep.subr.mxu0 0.0
        %891 = vmatpush1.msra.mxu0 0.0
        %892 = vmatprep.subr.mxu0 0.0
        %893 = vmatpush1.msra.mxu0 0.0
        %894 = vmatprep.subr.mxu0 0.0
        %895 = vmatpush1.msra.mxu0 0.0
        %896 = vmatprep.subr.mxu0 0.0
        %897 = vmatpush1.msra.mxu0 0.0
        %898 = vmatprep.subr.mxu0 0.0
        %899 = vmatpush1.msra.mxu0 0.0
        %900 = vmatprep.subr.mxu0 0.0
        %901 = vmatpush1.msra.mxu0 0.0
        %902 = vmatprep.subr.mxu0 0.0
        %903 = vmatpush1.msra.mxu0 0.0
        %904 = vmatprep.subr.mxu0 0.0
        %905 = vmatpush1.msra.mxu0 0.0
        %906 = vmatprep.subr.mxu0 0.0
        %907 = vmatpush1.msra.mxu0 0.0
        %908 = vmatprep.subr.mxu0 0.0
        %909 = vmatpush1.msra.mxu0 0.0
        %910 = vmatprep.subr.mxu0 0.0
        %911 = vmatpush1.msra.mxu0 0.0
        %912 = vmatprep.mubr.f32.mxu0 0.0
        %913 = vmatmul.mubr.f32.gmra.mrb[0].mxu0 %v837
        %v914 = vpop.f32.mrb[0].mxu0
        %v915 = vadd.f32 %v819, %v914
        %v916 = vpop.f32.mrb[0].mxu0
        %v917 = vadd.f32 %v819, %v916
        %918 = vmatprep.mubr.f32.mxu0 0.0
        %919 = vmatmul.mubr.f32.gmra.mrb[0].mxu0 %v840
        %v920 = vpop.f32.mrb[0].mxu0
        %v921 = vadd.f32 %v824, %v920
        %v922 = vpop.f32.mrb[0].mxu0
        %v923 = vadd.f32 %v824, %v922
        %924 = vmatprep.mubr.f32.mxu0 0.0
        %925 = vmatmul.mubr.f32.gmra.mrb[0].mxu0 %v843
        %v926 = vpop.f32.mrb[0].mxu0
        %v927 = vadd.f32 %v829, %v926
        %v928 = vpop.f32.mrb[0].mxu0
        %v929 = vadd.f32 %v829, %v928
        %930 = vmatprep.mubr.f32.mxu0 0.0
        %931 = vmatmul.mubr.f32.gmra.mrb[0].mxu0 %v846
        %v932 = vpop.f32.mrb[0].mxu0
        %v933 = vadd.f32 %v834, %v932
        %v934 = vpop.f32.mrb[0].mxu0
        %v935 = vadd.f32 %v834, %v934
        %936 = vdwg.mxu0
        %v937 = vld [vmem:[%s7] sm:$0xff]
        %v938 = vld [vmem:[%s7 + $0x8] sm:$0xff]
        %v939 = vld [vmem:[%s7 + $0x10] sm:$0xff]
        %v940 = vld [vmem:[%s7 + $0x18] sm:$0xff]
        %v941 = vld [vmem:[%s8] sm:$0xff]
        %v942 = vld [vmem:[%s8 + $0x8] sm:$0xff]
        %v943 = vld [vmem:[%s8 + $0x10] sm:$0xff]
        %v944 = vld [vmem:[%s8 + $0x18] sm:$0xff]
        %946 = vset.pattern.permute.xlu0 0
        %947 = vperm.xlu0 %946, %v941
        %v948 = vpop.permute.xlu0 %947
        %951 = vset.pattern.permute.xlu0 0
        %952 = vperm.xlu0 %951, %v942
        %v953 = vpop.permute.xlu0 %952
        %956 = vset.pattern.permute.xlu0 0
        %957 = vperm.xlu0 %956, %v943
        %v958 = vpop.permute.xlu0 %957
        %961 = vset.pattern.permute.xlu0 0
        %962 = vperm.xlu0 %961, %v944
        %v963 = vpop.permute.xlu0 %962
        %v966 = vsel %vm569, %v937, 0
        %v969 = vsel %vm569, %v938, 0
        %v972 = vsel %vm569, %v939, 0
        %v975 = vsel %vm569, %v940, 0
        %977 = vmatprep.subr.mxu0 %v672
        %978 = vmatpush1.msra.mxu0 %v671
        %979 = vmatprep.subr.mxu0 %v674
        %980 = vmatpush1.msra.mxu0 %v673
        %981 = vmatprep.subr.mxu0 %v676
        %982 = vmatpush1.msra.mxu0 %v675
        %983 = vmatprep.subr.mxu0 %v678
        %984 = vmatpush1.msra.mxu0 %v677
        %985 = vmatprep.subr.mxu0 0.0
        %986 = vmatpush1.msra.mxu0 0.0
        %987 = vmatprep.subr.mxu0 0.0
        %988 = vmatpush1.msra.mxu0 0.0
        %989 = vmatprep.subr.mxu0 0.0
        %990 = vmatpush1.msra.mxu0 0.0
        %991 = vmatprep.subr.mxu0 0.0
        %992 = vmatpush1.msra.mxu0 0.0
        %993 = vmatprep.subr.mxu0 0.0
        %994 = vmatpush1.msra.mxu0 0.0
        %995 = vmatprep.subr.mxu0 0.0
        %996 = vmatpush1.msra.mxu0 0.0
        %997 = vmatprep.subr.mxu0 0.0
        %998 = vmatpush1.msra.mxu0 0.0
        %999 = vmatprep.subr.mxu0 0.0
        %1000 = vmatpush1.msra.mxu0 0.0
        %1001 = vmatprep.subr.mxu0 0.0
        %1002 = vmatpush1.msra.mxu0 0.0
        %1003 = vmatprep.subr.mxu0 0.0
        %1004 = vmatpush1.msra.mxu0 0.0
        %1005 = vmatprep.subr.mxu0 0.0
        %1006 = vmatpush1.msra.mxu0 0.0
        %1007 = vmatprep.subr.mxu0 0.0
        %1008 = vmatpush1.msra.mxu0 0.0
        %1009 = vmatprep.subr.mxu0 0.0
        %1010 = vmatpush1.msra.mxu0 0.0
        %1011 = vmatprep.subr.mxu0 0.0
        %1012 = vmatpush1.msra.mxu0 0.0
        %1013 = vmatprep.subr.mxu0 0.0
        %1014 = vmatpush1.msra.mxu0 0.0
        %1015 = vmatprep.subr.mxu0 0.0
        %1016 = vmatpush1.msra.mxu0 0.0
        %1017 = vmatprep.subr.mxu0 0.0
        %1018 = vmatpush1.msra.mxu0 0.0
        %1019 = vmatprep.subr.mxu0 0.0
        %1020 = vmatpush1.msra.mxu0 0.0
        %1021 = vmatprep.subr.mxu0 0.0
        %1022 = vmatpush1.msra.mxu0 0.0
        %1023 = vmatprep.subr.mxu0 0.0
        %1024 = vmatpush1.msra.mxu0 0.0
        %1025 = vmatprep.subr.mxu0 0.0
        %1026 = vmatpush1.msra.mxu0 0.0
        %1027 = vmatprep.subr.mxu0 0.0
        %1028 = vmatpush1.msra.mxu0 0.0
        %1029 = vmatprep.subr.mxu0 0.0
        %1030 = vmatpush1.msra.mxu0 0.0
        %1031 = vmatprep.subr.mxu0 0.0
        %1032 = vmatpush1.msra.mxu0 0.0
        %1033 = vmatprep.subr.mxu0 0.0
        %1034 = vmatpush1.msra.mxu0 0.0
        %1035 = vmatprep.subr.mxu0 0.0
        %1036 = vmatpush1.msra.mxu0 0.0
        %1037 = vmatprep.subr.mxu0 0.0
        %1038 = vmatpush1.msra.mxu0 0.0
        %1039 = vmatprep.subr.mxu0 0.0
        %1040 = vmatpush1.msra.mxu0 0.0
        %1041 = vmatprep.mubr.f32.mxu0 0.0
        %1042 = vmatmul.mubr.f32.gmra.mrb[0].mxu0 %v966
        %v1043 = vpop.f32.mrb[0].mxu0
        %v1044 = vadd.f32 %v948, %v1043
        %v1045 = vpop.f32.mrb[0].mxu0
        %v1046 = vadd.f32 %v948, %v1045
        %1047 = vmatprep.mubr.f32.mxu0 0.0
        %1048 = vmatmul.mubr.f32.gmra.mrb[0].mxu0 %v969
        %v1049 = vpop.f32.mrb[0].mxu0
        %v1050 = vadd.f32 %v953, %v1049
        %v1051 = vpop.f32.mrb[0].mxu0
        %v1052 = vadd.f32 %v953, %v1051
        %1053 = vmatprep.mubr.f32.mxu0 0.0
        %1054 = vmatmul.mubr.f32.gmra.mrb[0].mxu0 %v972
        %v1055 = vpop.f32.mrb[0].mxu0
        %v1056 = vadd.f32 %v958, %v1055
        %v1057 = vpop.f32.mrb[0].mxu0
        %v1058 = vadd.f32 %v958, %v1057
        %1059 = vmatprep.mubr.f32.mxu0 0.0
        %1060 = vmatmul.mubr.f32.gmra.mrb[0].mxu0 %v975
        %v1061 = vpop.f32.mrb[0].mxu0
        %v1062 = vadd.f32 %v963, %v1061
        %v1063 = vpop.f32.mrb[0].mxu0
        %v1064 = vadd.f32 %v963, %v1063
        %1065 = vdwg.mxu0
        %v1066 = vld [vmem:[%s9] sm:$0xff]
        %v1067 = vld [vmem:[%s9 + $0x8] sm:$0xff]
        %v1068 = vld [vmem:[%s9 + $0x10] sm:$0xff]
        %v1069 = vld [vmem:[%s9 + $0x18] sm:$0xff]
        %v1070 = vld [vmem:[%s10] sm:$0xff]
        %v1071 = vld [vmem:[%s10 + $0x8] sm:$0xff]
        %v1072 = vld [vmem:[%s10 + $0x10] sm:$0xff]
        %v1073 = vld [vmem:[%s10 + $0x18] sm:$0xff]
        %1075 = vset.pattern.permute.xlu0 0
        %1076 = vperm.xlu0 %1075, %v1070
        %v1077 = vpop.permute.xlu0 %1076
        %1080 = vset.pattern.permute.xlu0 0
        %1081 = vperm.xlu0 %1080, %v1071
        %v1082 = vpop.permute.xlu0 %1081
        %1085 = vset.pattern.permute.xlu0 0
        %1086 = vperm.xlu0 %1085, %v1072
        %v1087 = vpop.permute.xlu0 %1086
        %1090 = vset.pattern.permute.xlu0 0
        %1091 = vperm.xlu0 %1090, %v1073
        %v1092 = vpop.permute.xlu0 %1091
        %v1095 = vsel %vm569, %v1066, 0
        %v1098 = vsel %vm569, %v1067, 0
        %v1101 = vsel %vm569, %v1068, 0
        %v1104 = vsel %vm569, %v1069, 0
        %1106 = vmatprep.subr.mxu0 %v1046
        %1107 = vmatpush1.msra.mxu0 %v1044
        %1108 = vmatprep.subr.mxu0 %v1052
        %1109 = vmatpush1.msra.mxu0 %v1050
        %1110 = vmatprep.subr.mxu0 %v1058
        %1111 = vmatpush1.msra.mxu0 %v1056
        %1112 = vmatprep.subr.mxu0 %v1064
        %1113 = vmatpush1.msra.mxu0 %v1062
        %1114 = vmatprep.subr.mxu0 0.0
        %1115 = vmatpush1.msra.mxu0 0.0
        %1116 = vmatprep.subr.mxu0 0.0
        %1117 = vmatpush1.msra.mxu0 0.0
        %1118 = vmatprep.subr.mxu0 0.0
        %1119 = vmatpush1.msra.mxu0 0.0
        %1120 = vmatprep.subr.mxu0 0.0
        %1121 = vmatpush1.msra.mxu0 0.0
        %1122 = vmatprep.subr.mxu0 0.0
        %1123 = vmatpush1.msra.mxu0 0.0
        %1124 = vmatprep.subr.mxu0 0.0
        %1125 = vmatpush1.msra.mxu0 0.0
        %1126 = vmatprep.subr.mxu0 0.0
        %1127 = vmatpush1.msra.mxu0 0.0
        %1128 = vmatprep.subr.mxu0 0.0
        %1129 = vmatpush1.msra.mxu0 0.0
        %1130 = vmatprep.subr.mxu0 0.0
        %1131 = vmatpush1.msra.mxu0 0.0
        %1132 = vmatprep.subr.mxu0 0.0
        %1133 = vmatpush1.msra.mxu0 0.0
        %1134 = vmatprep.subr.mxu0 0.0
        %1135 = vmatpush1.msra.mxu0 0.0
        %1136 = vmatprep.subr.mxu0 0.0
        %1137 = vmatpush1.msra.mxu0 0.0
        %1138 = vmatprep.subr.mxu0 0.0
        %1139 = vmatpush1.msra.mxu0 0.0
        %1140 = vmatprep.subr.mxu0 0.0
        %1141 = vmatpush1.msra.mxu0 0.0
        %1142 = vmatprep.subr.mxu0 0.0
        %1143 = vmatpush1.msra.mxu0 0.0
        %1144 = vmatprep.subr.mxu0 0.0
        %1145 = vmatpush1.msra.mxu0 0.0
        %1146 = vmatprep.subr.mxu0 0.0
        %1147 = vmatpush1.msra.mxu0 0.0
        %1148 = vmatprep.subr.mxu0 0.0
        %1149 = vmatpush1.msra.mxu0 0.0
        %1150 = vmatprep.subr.mxu0 0.0
        %1151 = vmatpush1.msra.mxu0 0.0
        %1152 = vmatprep.subr.mxu0 0.0
        %1153 = vmatpush1.msra.mxu0 0.0
        %1154 = vmatprep.subr.mxu0 0.0
        %1155 = vmatpush1.msra.mxu0 0.0
        %1156 = vmatprep.subr.mxu0 0.0
        %1157 = vmatpush1.msra.mxu0 0.0
        %1158 = vmatprep.subr.mxu0 0.0
        %1159 = vmatpush1.msra.mxu0 0.0
        %1160 = vmatprep.subr.mxu0 0.0
        %1161 = vmatpush1.msra.mxu0 0.0
        %1162 = vmatprep.subr.mxu0 0.0
        %1163 = vmatpush1.msra.mxu0 0.0
        %1164 = vmatprep.subr.mxu0 0.0
        %1165 = vmatpush1.msra.mxu0 0.0
        %1166 = vmatprep.subr.mxu0 0.0
        %1167 = vmatpush1.msra.mxu0 0.0
        %1168 = vmatprep.subr.mxu0 0.0
        %1169 = vmatpush1.msra.mxu0 0.0
        %1170 = vmatprep.mubr.f32.mxu0 0.0
        %1171 = vmatmul.mubr.f32.gmra.mrb[0].mxu0 %v1095
        %v1172 = vpop.f32.mrb[0].mxu0
        %v1173 = vadd.f32 %v1077, %v1172
        %v1174 = vpop.f32.mrb[0].mxu0
        %v1175 = vadd.f32 %v1077, %v1174
        %1176 = vmatprep.mubr.f32.mxu0 0.0
        %1177 = vmatmul.mubr.f32.gmra.mrb[0].mxu0 %v1098
        %v1178 = vpop.f32.mrb[0].mxu0
        %v1179 = vadd.f32 %v1082, %v1178
        %v1180 = vpop.f32.mrb[0].mxu0
        %v1181 = vadd.f32 %v1082, %v1180
        %1182 = vmatprep.mubr.f32.mxu0 0.0
        %1183 = vmatmul.mubr.f32.gmra.mrb[0].mxu0 %v1101
        %v1184 = vpop.f32.mrb[0].mxu0
        %v1185 = vadd.f32 %v1087, %v1184
        %v1186 = vpop.f32.mrb[0].mxu0
        %v1187 = vadd.f32 %v1087, %v1186
        %1188 = vmatprep.mubr.f32.mxu0 0.0
        %1189 = vmatmul.mubr.f32.gmra.mrb[0].mxu0 %v1104
        %v1190 = vpop.f32.mrb[0].mxu0
        %v1191 = vadd.f32 %v1092, %v1190
        %v1192 = vpop.f32.mrb[0].mxu0
        %v1193 = vadd.f32 %v1092, %v1192
        %1194 = vdwg.mxu0
        %v1195 = vld [vmem:[%s11] sm:$0xff]
        %v1196 = vld [vmem:[%s11 + $0x8] sm:$0xff]
        %v1197 = vld [vmem:[%s11 + $0x10] sm:$0xff]
        %v1198 = vld [vmem:[%s11 + $0x18] sm:$0xff]
        %v1199 = vld [vmem:[%s12] sm:$0xff]
        %v1200 = vld [vmem:[%s12 + $0x8] sm:$0xff]
        %v1201 = vld [vmem:[%s12 + $0x10] sm:$0xff]
        %v1202 = vld [vmem:[%s12 + $0x18] sm:$0xff]
        %1204 = vset.pattern.permute.xlu0 0
        %1205 = vperm.xlu0 %1204, %v1199
        %v1206 = vpop.permute.xlu0 %1205
        %1209 = vset.pattern.permute.xlu0 0
        %1210 = vperm.xlu0 %1209, %v1200
        %v1211 = vpop.permute.xlu0 %1210
        %1214 = vset.pattern.permute.xlu0 0
        %1215 = vperm.xlu0 %1214, %v1201
        %v1216 = vpop.permute.xlu0 %1215
        %1219 = vset.pattern.permute.xlu0 0
        %1220 = vperm.xlu0 %1219, %v1202
        %v1221 = vpop.permute.xlu0 %1220
        %v1224 = vsel %vm569, %v1195, 0
        %v1227 = vsel %vm569, %v1196, 0
        %v1230 = vsel %vm569, %v1197, 0
        %v1233 = vsel %vm569, %v1198, 0
        %1235 = vmatprep.subr.mxu0 %v672
        %1236 = vmatpush1.msra.mxu0 %v671
        %1237 = vmatprep.subr.mxu0 %v674
        %1238 = vmatpush1.msra.mxu0 %v673
        %1239 = vmatprep.subr.mxu0 %v676
        %1240 = vmatpush1.msra.mxu0 %v675
        %1241 = vmatprep.subr.mxu0 %v678
        %1242 = vmatpush1.msra.mxu0 %v677
        %1243 = vmatprep.subr.mxu0 0.0
        %1244 = vmatpush1.msra.mxu0 0.0
        %1245 = vmatprep.subr.mxu0 0.0
        %1246 = vmatpush1.msra.mxu0 0.0
        %1247 = vmatprep.subr.mxu0 0.0
        %1248 = vmatpush1.msra.mxu0 0.0
        %1249 = vmatprep.subr.mxu0 0.0
        %1250 = vmatpush1.msra.mxu0 0.0
        %1251 = vmatprep.subr.mxu0 0.0
        %1252 = vmatpush1.msra.mxu0 0.0
        %1253 = vmatprep.subr.mxu0 0.0
        %1254 = vmatpush1.msra.mxu0 0.0
        %1255 = vmatprep.subr.mxu0 0.0
        %1256 = vmatpush1.msra.mxu0 0.0
        %1257 = vmatprep.subr.mxu0 0.0
        %1258 = vmatpush1.msra.mxu0 0.0
        %1259 = vmatprep.subr.mxu0 0.0
        %1260 = vmatpush1.msra.mxu0 0.0
        %1261 = vmatprep.subr.mxu0 0.0
        %1262 = vmatpush1.msra.mxu0 0.0
        %1263 = vmatprep.subr.mxu0 0.0
        %1264 = vmatpush1.msra.mxu0 0.0
        %1265 = vmatprep.subr.mxu0 0.0
        %1266 = vmatpush1.msra.mxu0 0.0
        %1267 = vmatprep.subr.mxu0 0.0
        %1268 = vmatpush1.msra.mxu0 0.0
        %1269 = vmatprep.subr.mxu0 0.0
        %1270 = vmatpush1.msra.mxu0 0.0
        %1271 = vmatprep.subr.mxu0 0.0
        %1272 = vmatpush1.msra.mxu0 0.0
        %1273 = vmatprep.subr.mxu0 0.0
        %1274 = vmatpush1.msra.mxu0 0.0
        %1275 = vmatprep.subr.mxu0 0.0
        %1276 = vmatpush1.msra.mxu0 0.0
        %1277 = vmatprep.subr.mxu0 0.0
        %1278 = vmatpush1.msra.mxu0 0.0
        %1279 = vmatprep.subr.mxu0 0.0
        %1280 = vmatpush1.msra.mxu0 0.0
        %1281 = vmatprep.subr.mxu0 0.0
        %1282 = vmatpush1.msra.mxu0 0.0
        %1283 = vmatprep.subr.mxu0 0.0
        %1284 = vmatpush1.msra.mxu0 0.0
        %1285 = vmatprep.subr.mxu0 0.0
        %1286 = vmatpush1.msra.mxu0 0.0
        %1287 = vmatprep.subr.mxu0 0.0
        %1288 = vmatpush1.msra.mxu0 0.0
        %1289 = vmatprep.subr.mxu0 0.0
        %1290 = vmatpush1.msra.mxu0 0.0
        %1291 = vmatprep.subr.mxu0 0.0
        %1292 = vmatpush1.msra.mxu0 0.0
        %1293 = vmatprep.subr.mxu0 0.0
        %1294 = vmatpush1.msra.mxu0 0.0
        %1295 = vmatprep.subr.mxu0 0.0
        %1296 = vmatpush1.msra.mxu0 0.0
        %1297 = vmatprep.subr.mxu0 0.0
        %1298 = vmatpush1.msra.mxu0 0.0
        %1299 = vmatprep.mubr.f32.mxu0 0.0
        %1300 = vmatmul.mubr.f32.gmra.mrb[0].mxu0 %v1224
        %v1301 = vpop.f32.mrb[0].mxu0
        %v1302 = vadd.f32 %v1206, %v1301
        %v1303 = vpop.f32.mrb[0].mxu0
        %v1304 = vadd.f32 %v1206, %v1303
        %1305 = vmatprep.mubr.f32.mxu0 0.0
        %1306 = vmatmul.mubr.f32.gmra.mrb[0].mxu0 %v1227
        %v1307 = vpop.f32.mrb[0].mxu0
        %v1308 = vadd.f32 %v1211, %v1307
        %v1309 = vpop.f32.mrb[0].mxu0
        %v1310 = vadd.f32 %v1211, %v1309
        %1311 = vmatprep.mubr.f32.mxu0 0.0
        %1312 = vmatmul.mubr.f32.gmra.mrb[0].mxu0 %v1230
        %v1313 = vpop.f32.mrb[0].mxu0
        %v1314 = vadd.f32 %v1216, %v1313
        %v1315 = vpop.f32.mrb[0].mxu0
        %v1316 = vadd.f32 %v1216, %v1315
        %1317 = vmatprep.mubr.f32.mxu0 0.0
        %1318 = vmatmul.mubr.f32.gmra.mrb[0].mxu0 %v1233
        %v1319 = vpop.f32.mrb[0].mxu0
        %v1320 = vadd.f32 %v1221, %v1319
        %v1321 = vpop.f32.mrb[0].mxu0
        %v1322 = vadd.f32 %v1221, %v1321
        %1323 = vdwg.mxu0
        %v1324 = vld [vmem:[%s13] sm:$0xff]
        %v1325 = vld [vmem:[%s13 + $0x8] sm:$0xff]
        %v1326 = vld [vmem:[%s13 + $0x10] sm:$0xff]
        %v1327 = vld [vmem:[%s13 + $0x18] sm:$0xff]
        %v1328 = vld [vmem:[%s14] sm:$0xff]
        %v1329 = vld [vmem:[%s14 + $0x8] sm:$0xff]
        %v1330 = vld [vmem:[%s14 + $0x10] sm:$0xff]
        %v1331 = vld [vmem:[%s14 + $0x18] sm:$0xff]
        %1333 = vset.pattern.permute.xlu0 0
        %1334 = vperm.xlu0 %1333, %v1328
        %v1335 = vpop.permute.xlu0 %1334
        %1338 = vset.pattern.permute.xlu0 0
        %1339 = vperm.xlu0 %1338, %v1329
        %v1340 = vpop.permute.xlu0 %1339
        %1343 = vset.pattern.permute.xlu0 0
        %1344 = vperm.xlu0 %1343, %v1330
        %v1345 = vpop.permute.xlu0 %1344
        %1348 = vset.pattern.permute.xlu0 0
        %1349 = vperm.xlu0 %1348, %v1331
        %v1350 = vpop.permute.xlu0 %1349
        %v1353 = vsel %vm569, %v1324, 0
        %v1356 = vsel %vm569, %v1325, 0
        %v1359 = vsel %vm569, %v1326, 0
        %v1362 = vsel %vm569, %v1327, 0
        %1364 = vmatprep.subr.mxu0 %v1304
        %1365 = vmatpush1.msra.mxu0 %v1302
        %1366 = vmatprep.subr.mxu0 %v1310
        %1367 = vmatpush1.msra.mxu0 %v1308
        %1368 = vmatprep.subr.mxu0 %v1316
        %1369 = vmatpush1.msra.mxu0 %v1314
        %1370 = vmatprep.subr.mxu0 %v1322
        %1371 = vmatpush1.msra.mxu0 %v1320
        %1372 = vmatprep.subr.mxu0 0.0
        %1373 = vmatpush1.msra.mxu0 0.0
        %1374 = vmatprep.subr.mxu0 0.0
        %1375 = vmatpush1.msra.mxu0 0.0
        %1376 = vmatprep.subr.mxu0 0.0
        %1377 = vmatpush1.msra.mxu0 0.0
        %1378 = vmatprep.subr.mxu0 0.0
        %1379 = vmatpush1.msra.mxu0 0.0
        %1380 = vmatprep.subr.mxu0 0.0
        %1381 = vmatpush1.msra.mxu0 0.0
        %1382 = vmatprep.subr.mxu0 0.0
        %1383 = vmatpush1.msra.mxu0 0.0
        %1384 = vmatprep.subr.mxu0 0.0
        %1385 = vmatpush1.msra.mxu0 0.0
        %1386 = vmatprep.subr.mxu0 0.0
        %1387 = vmatpush1.msra.mxu0 0.0
        %1388 = vmatprep.subr.mxu0 0.0
        %1389 = vmatpush1.msra.mxu0 0.0
        %1390 = vmatprep.subr.mxu0 0.0
        %1391 = vmatpush1.msra.mxu0 0.0
        %1392 = vmatprep.subr.mxu0 0.0
        %1393 = vmatpush1.msra.mxu0 0.0
        %1394 = vmatprep.subr.mxu0 0.0
        %1395 = vmatpush1.msra.mxu0 0.0
        %1396 = vmatprep.subr.mxu0 0.0
        %1397 = vmatpush1.msra.mxu0 0.0
        %1398 = vmatprep.subr.mxu0 0.0
        %1399 = vmatpush1.msra.mxu0 0.0
        %1400 = vmatprep.subr.mxu0 0.0
        %1401 = vmatpush1.msra.mxu0 0.0
        %1402 = vmatprep.subr.mxu0 0.0
        %1403 = vmatpush1.msra.mxu0 0.0
        %1404 = vmatprep.subr.mxu0 0.0
        %1405 = vmatpush1.msra.mxu0 0.0
        %1406 = vmatprep.subr.mxu0 0.0
        %1407 = vmatpush1.msra.mxu0 0.0
        %1408 = vmatprep.subr.mxu0 0.0
        %1409 = vmatpush1.msra.mxu0 0.0
        %1410 = vmatprep.subr.mxu0 0.0
        %1411 = vmatpush1.msra.mxu0 0.0
        %1412 = vmatprep.subr.mxu0 0.0
        %1413 = vmatpush1.msra.mxu0 0.0
        %1414 = vmatprep.subr.mxu0 0.0
        %1415 = vmatpush1.msra.mxu0 0.0
        %1416 = vmatprep.subr.mxu0 0.0
        %1417 = vmatpush1.msra.mxu0 0.0
        %1418 = vmatprep.subr.mxu0 0.0
        %1419 = vmatpush1.msra.mxu0 0.0
        %1420 = vmatprep.subr.mxu0 0.0
        %1421 = vmatpush1.msra.mxu0 0.0
        %1422 = vmatprep.subr.mxu0 0.0
        %1423 = vmatpush1.msra.mxu0 0.0
        %1424 = vmatprep.subr.mxu0 0.0
        %1425 = vmatpush1.msra.mxu0 0.0
        %1426 = vmatprep.subr.mxu0 0.0
        %1427 = vmatpush1.msra.mxu0 0.0
        %1428 = vmatprep.mubr.f32.mxu0 0.0
        %1429 = vmatmul.mubr.f32.gmra.mrb[0].mxu0 %v1353
        %v1430 = vpop.f32.mrb[0].mxu0
        %v1431 = vadd.f32 %v1335, %v1430
        %v1432 = vpop.f32.mrb[0].mxu0
        %v1433 = vadd.f32 %v1335, %v1432
        %1434 = vmatprep.mubr.f32.mxu0 0.0
        %1435 = vmatmul.mubr.f32.gmra.mrb[0].mxu0 %v1356
        %v1436 = vpop.f32.mrb[0].mxu0
        %v1437 = vadd.f32 %v1340, %v1436
        %v1438 = vpop.f32.mrb[0].mxu0
        %v1439 = vadd.f32 %v1340, %v1438
        %1440 = vmatprep.mubr.f32.mxu0 0.0
        %1441 = vmatmul.mubr.f32.gmra.mrb[0].mxu0 %v1359
        %v1442 = vpop.f32.mrb[0].mxu0
        %v1443 = vadd.f32 %v1345, %v1442
        %v1444 = vpop.f32.mrb[0].mxu0
        %v1445 = vadd.f32 %v1345, %v1444
        %1446 = vmatprep.mubr.f32.mxu0 0.0
        %1447 = vmatmul.mubr.f32.gmra.mrb[0].mxu0 %v1362
        %v1448 = vpop.f32.mrb[0].mxu0
        %v1449 = vadd.f32 %v1350, %v1448
        %v1450 = vpop.f32.mrb[0].mxu0
        %v1451 = vadd.f32 %v1350, %v1450
        %1452 = vdwg.mxu0
        %1453 = vxpose.xlu0.b32.start [1/16] %v915, 128
        %1454 = vxpose.xlu0.b32.cont [2/16] %v921, 128
        %1455 = vxpose.xlu0.b32.cont [3/16] %v927, 128
        %1456 = vxpose.xlu0.b32.cont [4/16] %v933, 128
        %1457 = vxpose.xlu0.b32.cont [5/16] 0.0, 128
        %1458 = vxpose.xlu0.b32.cont [6/16] 0.0, 128
        %1459 = vxpose.xlu0.b32.cont [7/16] 0.0, 128
        %1460 = vxpose.xlu0.b32.cont [8/16] 0.0, 128
        %1461 = vxpose.xlu0.b32.cont [9/16] 0.0, 128
        %1462 = vxpose.xlu0.b32.cont [10/16] 0.0, 128
        %1463 = vxpose.xlu0.b32.cont [11/16] 0.0, 128
        %1464 = vxpose.xlu0.b32.cont [12/16] 0.0, 128
        %1465 = vxpose.xlu0.b32.cont [13/16] 0.0, 128
        %1466 = vxpose.xlu0.b32.cont [14/16] 0.0, 128
        %1467 = vxpose.xlu0.b32.cont [15/16] 0.0, 128
        %1468 = vxpose.xlu0.b32.end [16/16] 0.0, 128
        %v1469 = vpop.trf.xlu0
        %v1470 = vpop.trf.xlu0
        %v1471 = vpop.trf.xlu0
        %v1472 = vpop.trf.xlu0
        %v1473 = vpop.trf.xlu0
        %v1474 = vpop.trf.xlu0
        %v1475 = vpop.trf.xlu0
        %v1476 = vpop.trf.xlu0
        %v1477 = vpop.trf.xlu0
        %v1478 = vpop.trf.xlu0
        %v1479 = vpop.trf.xlu0
        %v1480 = vpop.trf.xlu0
        %v1481 = vpop.trf.xlu0
        %v1482 = vpop.trf.xlu0
        %v1483 = vpop.trf.xlu0
        %v1484 = vpop.trf.xlu0
        %1485 = vxpose.xlu0.b32.start [1/16] %v917, 128
        %1486 = vxpose.xlu0.b32.cont [2/16] %v923, 128
        %1487 = vxpose.xlu0.b32.cont [3/16] %v929, 128
        %1488 = vxpose.xlu0.b32.cont [4/16] %v935, 128
        %1489 = vxpose.xlu0.b32.cont [5/16] 0.0, 128
        %1490 = vxpose.xlu0.b32.cont [6/16] 0.0, 128
        %1491 = vxpose.xlu0.b32.cont [7/16] 0.0, 128
        %1492 = vxpose.xlu0.b32.cont [8/16] 0.0, 128
        %1493 = vxpose.xlu0.b32.cont [9/16] 0.0, 128
        %1494 = vxpose.xlu0.b32.cont [10/16] 0.0, 128
        %1495 = vxpose.xlu0.b32.cont [11/16] 0.0, 128
        %1496 = vxpose.xlu0.b32.cont [12/16] 0.0, 128
        %1497 = vxpose.xlu0.b32.cont [13/16] 0.0, 128
        %1498 = vxpose.xlu0.b32.cont [14/16] 0.0, 128
        %1499 = vxpose.xlu0.b32.cont [15/16] 0.0, 128
        %1500 = vxpose.xlu0.b32.end [16/16] 0.0, 128
        %v1501 = vpop.trf.xlu0
        %v1502 = vpop.trf.xlu0
        %v1503 = vpop.trf.xlu0
        %v1504 = vpop.trf.xlu0
        %v1505 = vpop.trf.xlu0
        %v1506 = vpop.trf.xlu0
        %v1507 = vpop.trf.xlu0
        %v1508 = vpop.trf.xlu0
        %v1509 = vpop.trf.xlu0
        %v1510 = vpop.trf.xlu0
        %v1511 = vpop.trf.xlu0
        %v1512 = vpop.trf.xlu0
        %v1513 = vpop.trf.xlu0
        %v1514 = vpop.trf.xlu0
        %v1515 = vpop.trf.xlu0
        %v1516 = vpop.trf.xlu0
        %v1518 = vsel %vm569, %v1469, 0
        %v1521 = vsel %vm569, %v1470, 0
        %v1524 = vsel %vm569, %v1471, 0
        %v1527 = vsel %vm569, %v1472, 0
        %v1530 = vsel %vm569, %v1473, 0
        %v1533 = vsel %vm569, %v1474, 0
        %v1536 = vsel %vm569, %v1475, 0
        %v1539 = vsel %vm569, %v1476, 0
        %v1542 = vsel %vm569, %v1477, 0
        %v1545 = vsel %vm569, %v1478, 0
        %v1548 = vsel %vm569, %v1479, 0
        %v1551 = vsel %vm569, %v1480, 0
        %v1554 = vsel %vm569, %v1481, 0
        %v1557 = vsel %vm569, %v1482, 0
        %v1560 = vsel %vm569, %v1483, 0
        %v1563 = vsel %vm569, %v1484, 0
        %v1566 = vsel %vm569, %v1501, 0
        %v1569 = vsel %vm569, %v1502, 0
        %v1572 = vsel %vm569, %v1503, 0
        %v1575 = vsel %vm569, %v1504, 0
        %v1578 = vsel %vm569, %v1505, 0
        %v1581 = vsel %vm569, %v1506, 0
        %v1584 = vsel %vm569, %v1507, 0
        %v1587 = vsel %vm569, %v1508, 0
        %v1590 = vsel %vm569, %v1509, 0
        %v1593 = vsel %vm569, %v1510, 0
        %v1596 = vsel %vm569, %v1511, 0
        %v1599 = vsel %vm569, %v1512, 0
        %v1602 = vsel %vm569, %v1513, 0
        %v1605 = vsel %vm569, %v1514, 0
        %v1608 = vsel %vm569, %v1515, 0
        %v1611 = vsel %vm569, %v1516, 0
        %1613 = vmatprep.subr.mxu0 %v1175
        %1614 = vmatpush1.msra.mxu0 %v1173
        %1615 = vmatprep.subr.mxu0 %v1181
        %1616 = vmatpush1.msra.mxu0 %v1179
        %1617 = vmatprep.subr.mxu0 %v1187
        %1618 = vmatpush1.msra.mxu0 %v1185
        %1619 = vmatprep.subr.mxu0 %v1193
        %1620 = vmatpush1.msra.mxu0 %v1191
        %1621 = vmatprep.subr.mxu0 0.0
        %1622 = vmatpush1.msra.mxu0 0.0
        %1623 = vmatprep.subr.mxu0 0.0
        %1624 = vmatpush1.msra.mxu0 0.0
        %1625 = vmatprep.subr.mxu0 0.0
        %1626 = vmatpush1.msra.mxu0 0.0
        %1627 = vmatprep.subr.mxu0 0.0
        %1628 = vmatpush1.msra.mxu0 0.0
        %1629 = vmatprep.subr.mxu0 0.0
        %1630 = vmatpush1.msra.mxu0 0.0
        %1631 = vmatprep.subr.mxu0 0.0
        %1632 = vmatpush1.msra.mxu0 0.0
        %1633 = vmatprep.subr.mxu0 0.0
        %1634 = vmatpush1.msra.mxu0 0.0
        %1635 = vmatprep.subr.mxu0 0.0
        %1636 = vmatpush1.msra.mxu0 0.0
        %1637 = vmatprep.subr.mxu0 0.0
        %1638 = vmatpush1.msra.mxu0 0.0
        %1639 = vmatprep.subr.mxu0 0.0
        %1640 = vmatpush1.msra.mxu0 0.0
        %1641 = vmatprep.subr.mxu0 0.0
        %1642 = vmatpush1.msra.mxu0 0.0
        %1643 = vmatprep.subr.mxu0 0.0
        %1644 = vmatpush1.msra.mxu0 0.0
        %1645 = vmatprep.subr.mxu0 0.0
        %1646 = vmatpush1.msra.mxu0 0.0
        %1647 = vmatprep.subr.mxu0 0.0
        %1648 = vmatpush1.msra.mxu0 0.0
        %1649 = vmatprep.subr.mxu0 0.0
        %1650 = vmatpush1.msra.mxu0 0.0
        %1651 = vmatprep.subr.mxu0 0.0
        %1652 = vmatpush1.msra.mxu0 0.0
        %1653 = vmatprep.subr.mxu0 0.0
        %1654 = vmatpush1.msra.mxu0 0.0
        %1655 = vmatprep.subr.mxu0 0.0
        %1656 = vmatpush1.msra.mxu0 0.0
        %1657 = vmatprep.subr.mxu0 0.0
        %1658 = vmatpush1.msra.mxu0 0.0
        %1659 = vmatprep.subr.mxu0 0.0
        %1660 = vmatpush1.msra.mxu0 0.0
        %1661 = vmatprep.subr.mxu0 0.0
        %1662 = vmatpush1.msra.mxu0 0.0
        %1663 = vmatprep.subr.mxu0 0.0
        %1664 = vmatpush1.msra.mxu0 0.0
        %1665 = vmatprep.subr.mxu0 0.0
        %1666 = vmatpush1.msra.mxu0 0.0
        %1667 = vmatprep.subr.mxu0 0.0
        %1668 = vmatpush1.msra.mxu0 0.0
        %1669 = vmatprep.subr.mxu0 0.0
        %1670 = vmatpush1.msra.mxu0 0.0
        %1671 = vmatprep.subr.mxu0 0.0
        %1672 = vmatpush1.msra.mxu0 0.0
        %1673 = vmatprep.subr.mxu0 0.0
        %1674 = vmatpush1.msra.mxu0 0.0
        %1675 = vmatprep.subr.mxu0 0.0
        %1676 = vmatpush1.msra.mxu0 0.0
        %1677 = vmatprep.mubr.f32.mxu0 0.0
        %1678 = vmatmul.mubr.f32.gmra.mrb[0].mxu0 %v1518
        %v1679 = vpop.f32.mrb[0].mxu0
        %v1680 = vadd.f32 0.0, %v1679
        %v1681 = vpop.f32.mrb[0].mxu0
        %v1682 = vadd.f32 0.0, %v1681
        %1683 = vmatprep.mubr.f32.mxu0 0.0
        %1684 = vmatmul.mubr.f32.gmra.mrb[0].mxu0 %v1521
        %v1685 = vpop.f32.mrb[0].mxu0
        %v1686 = vadd.f32 0.0, %v1685
        %v1687 = vpop.f32.mrb[0].mxu0
        %v1688 = vadd.f32 0.0, %v1687
        %1689 = vmatprep.mubr.f32.mxu0 0.0
        %1690 = vmatmul.mubr.f32.gmra.mrb[0].mxu0 %v1524
        %v1691 = vpop.f32.mrb[0].mxu0
        %v1692 = vadd.f32 0.0, %v1691
        %v1693 = vpop.f32.mrb[0].mxu0
        %v1694 = vadd.f32 0.0, %v1693
        %1695 = vmatprep.mubr.f32.mxu0 0.0
        %1696 = vmatmul.mubr.f32.gmra.mrb[0].mxu0 %v1527
        %v1697 = vpop.f32.mrb[0].mxu0
        %v1698 = vadd.f32 0.0, %v1697
        %v1699 = vpop.f32.mrb[0].mxu0
        %v1700 = vadd.f32 0.0, %v1699
        %1701 = vmatprep.mubr.f32.mxu0 0.0
        %1702 = vmatmul.mubr.f32.gmra.mrb[0].mxu0 %v1530
        %v1703 = vpop.f32.mrb[0].mxu0
        %v1704 = vadd.f32 0.0, %v1703
        %v1705 = vpop.f32.mrb[0].mxu0
        %v1706 = vadd.f32 0.0, %v1705
        %1707 = vmatprep.mubr.f32.mxu0 0.0
        %1708 = vmatmul.mubr.f32.gmra.mrb[0].mxu0 %v1533
        %v1709 = vpop.f32.mrb[0].mxu0
        %v1710 = vadd.f32 0.0, %v1709
        %v1711 = vpop.f32.mrb[0].mxu0
        %v1712 = vadd.f32 0.0, %v1711
        %1713 = vmatprep.mubr.f32.mxu0 0.0
        %1714 = vmatmul.mubr.f32.gmra.mrb[0].mxu0 %v1536
        %v1715 = vpop.f32.mrb[0].mxu0
        %v1716 = vadd.f32 0.0, %v1715
        %v1717 = vpop.f32.mrb[0].mxu0
        %v1718 = vadd.f32 0.0, %v1717
        %1719 = vmatprep.mubr.f32.mxu0 0.0
        %1720 = vmatmul.mubr.f32.gmra.mrb[0].mxu0 %v1539
        %v1721 = vpop.f32.mrb[0].mxu0
        %v1722 = vadd.f32 0.0, %v1721
        %v1723 = vpop.f32.mrb[0].mxu0
        %v1724 = vadd.f32 0.0, %v1723
        %1725 = vmatprep.mubr.f32.mxu0 0.0
        %1726 = vmatmul.mubr.f32.gmra.mrb[0].mxu0 %v1542
        %v1727 = vpop.f32.mrb[0].mxu0
        %v1728 = vadd.f32 0.0, %v1727
        %v1729 = vpop.f32.mrb[0].mxu0
        %v1730 = vadd.f32 0.0, %v1729
        %1731 = vmatprep.mubr.f32.mxu0 0.0
        %1732 = vmatmul.mubr.f32.gmra.mrb[0].mxu0 %v1545
        %v1733 = vpop.f32.mrb[0].mxu0
        %v1734 = vadd.f32 0.0, %v1733
        %v1735 = vpop.f32.mrb[0].mxu0
        %v1736 = vadd.f32 0.0, %v1735
        %1737 = vmatprep.mubr.f32.mxu0 0.0
        %1738 = vmatmul.mubr.f32.gmra.mrb[0].mxu0 %v1548
        %v1739 = vpop.f32.mrb[0].mxu0
        %v1740 = vadd.f32 0.0, %v1739
        %v1741 = vpop.f32.mrb[0].mxu0
        %v1742 = vadd.f32 0.0, %v1741
        %1743 = vmatprep.mubr.f32.mxu0 0.0
        %1744 = vmatmul.mubr.f32.gmra.mrb[0].mxu0 %v1551
        %v1745 = vpop.f32.mrb[0].mxu0
        %v1746 = vadd.f32 0.0, %v1745
        %v1747 = vpop.f32.mrb[0].mxu0
        %v1748 = vadd.f32 0.0, %v1747
        %1749 = vmatprep.mubr.f32.mxu0 0.0
        %1750 = vmatmul.mubr.f32.gmra.mrb[0].mxu0 %v1554
        %v1751 = vpop.f32.mrb[0].mxu0
        %v1752 = vadd.f32 0.0, %v1751
        %v1753 = vpop.f32.mrb[0].mxu0
        %v1754 = vadd.f32 0.0, %v1753
        %1755 = vmatprep.mubr.f32.mxu0 0.0
        %1756 = vmatmul.mubr.f32.gmra.mrb[0].mxu0 %v1557
        %v1757 = vpop.f32.mrb[0].mxu0
        %v1758 = vadd.f32 0.0, %v1757
        %v1759 = vpop.f32.mrb[0].mxu0
        %v1760 = vadd.f32 0.0, %v1759
        %1761 = vmatprep.mubr.f32.mxu0 0.0
        %1762 = vmatmul.mubr.f32.gmra.mrb[0].mxu0 %v1560
        %v1763 = vpop.f32.mrb[0].mxu0
        %v1764 = vadd.f32 0.0, %v1763
        %v1765 = vpop.f32.mrb[0].mxu0
        %v1766 = vadd.f32 0.0, %v1765
        %1767 = vmatprep.mubr.f32.mxu0 0.0
        %1768 = vmatmul.mubr.f32.gmra.mrb[0].mxu0 %v1563
        %v1769 = vpop.f32.mrb[0].mxu0
        %v1770 = vadd.f32 0.0, %v1769
        %v1771 = vpop.f32.mrb[0].mxu0
        %v1772 = vadd.f32 0.0, %v1771
        %1773 = vmatprep.mubr.f32.mxu0 0.0
        %1774 = vmatmul.mubr.f32.gmra.mrb[0].mxu0 %v1566
        %v1775 = vpop.f32.mrb[0].mxu0
        %v1776 = vadd.f32 0.0, %v1775
        %v1777 = vpop.f32.mrb[0].mxu0
        %v1778 = vadd.f32 0.0, %v1777
        %1779 = vmatprep.mubr.f32.mxu0 0.0
        %1780 = vmatmul.mubr.f32.gmra.mrb[0].mxu0 %v1569
        %v1781 = vpop.f32.mrb[0].mxu0
        %v1782 = vadd.f32 0.0, %v1781
        %v1783 = vpop.f32.mrb[0].mxu0
        %v1784 = vadd.f32 0.0, %v1783
        %1785 = vmatprep.mubr.f32.mxu0 0.0
        %1786 = vmatmul.mubr.f32.gmra.mrb[0].mxu0 %v1572
        %v1787 = vpop.f32.mrb[0].mxu0
        %v1788 = vadd.f32 0.0, %v1787
        %v1789 = vpop.f32.mrb[0].mxu0
        %v1790 = vadd.f32 0.0, %v1789
        %1791 = vmatprep.mubr.f32.mxu0 0.0
        %1792 = vmatmul.mubr.f32.gmra.mrb[0].mxu0 %v1575
        %v1793 = vpop.f32.mrb[0].mxu0
        %v1794 = vadd.f32 0.0, %v1793
        %v1795 = vpop.f32.mrb[0].mxu0
        %v1796 = vadd.f32 0.0, %v1795
        %1797 = vmatprep.mubr.f32.mxu0 0.0
        %1798 = vmatmul.mubr.f32.gmra.mrb[0].mxu0 %v1578
        %v1799 = vpop.f32.mrb[0].mxu0
        %v1800 = vadd.f32 0.0, %v1799
        %v1801 = vpop.f32.mrb[0].mxu0
        %v1802 = vadd.f32 0.0, %v1801
        %1803 = vmatprep.mubr.f32.mxu0 0.0
        %1804 = vmatmul.mubr.f32.gmra.mrb[0].mxu0 %v1581
        %v1805 = vpop.f32.mrb[0].mxu0
        %v1806 = vadd.f32 0.0, %v1805
        %v1807 = vpop.f32.mrb[0].mxu0
        %v1808 = vadd.f32 0.0, %v1807
        %1809 = vmatprep.mubr.f32.mxu0 0.0
        %1810 = vmatmul.mubr.f32.gmra.mrb[0].mxu0 %v1584
        %v1811 = vpop.f32.mrb[0].mxu0
        %v1812 = vadd.f32 0.0, %v1811
        %v1813 = vpop.f32.mrb[0].mxu0
        %v1814 = vadd.f32 0.0, %v1813
        %1815 = vmatprep.mubr.f32.mxu0 0.0
        %1816 = vmatmul.mubr.f32.gmra.mrb[0].mxu0 %v1587
        %v1817 = vpop.f32.mrb[0].mxu0
        %v1818 = vadd.f32 0.0, %v1817
        %v1819 = vpop.f32.mrb[0].mxu0
        %v1820 = vadd.f32 0.0, %v1819
        %1821 = vmatprep.mubr.f32.mxu0 0.0
        %1822 = vmatmul.mubr.f32.gmra.mrb[0].mxu0 %v1590
        %v1823 = vpop.f32.mrb[0].mxu0
        %v1824 = vadd.f32 0.0, %v1823
        %v1825 = vpop.f32.mrb[0].mxu0
        %v1826 = vadd.f32 0.0, %v1825
        %1827 = vmatprep.mubr.f32.mxu0 0.0
        %1828 = vmatmul.mubr.f32.gmra.mrb[0].mxu0 %v1593
        %v1829 = vpop.f32.mrb[0].mxu0
        %v1830 = vadd.f32 0.0, %v1829
        %v1831 = vpop.f32.mrb[0].mxu0
        %v1832 = vadd.f32 0.0, %v1831
        %1833 = vmatprep.mubr.f32.mxu0 0.0
        %1834 = vmatmul.mubr.f32.gmra.mrb[0].mxu0 %v1596
        %v1835 = vpop.f32.mrb[0].mxu0
        %v1836 = vadd.f32 0.0, %v1835
        %v1837 = vpop.f32.mrb[0].mxu0
        %v1838 = vadd.f32 0.0, %v1837
        %1839 = vmatprep.mubr.f32.mxu0 0.0
        %1840 = vmatmul.mubr.f32.gmra.mrb[0].mxu0 %v1599
        %v1841 = vpop.f32.mrb[0].mxu0
        %v1842 = vadd.f32 0.0, %v1841
        %v1843 = vpop.f32.mrb[0].mxu0
        %v1844 = vadd.f32 0.0, %v1843
        %1845 = vmatprep.mubr.f32.mxu0 0.0
        %1846 = vmatmul.mubr.f32.gmra.mrb[0].mxu0 %v1602
        %v1847 = vpop.f32.mrb[0].mxu0
        %v1848 = vadd.f32 0.0, %v1847
        %v1849 = vpop.f32.mrb[0].mxu0
        %v1850 = vadd.f32 0.0, %v1849
        %1851 = vmatprep.mubr.f32.mxu0 0.0
        %1852 = vmatmul.mubr.f32.gmra.mrb[0].mxu0 %v1605
        %v1853 = vpop.f32.mrb[0].mxu0
        %v1854 = vadd.f32 0.0, %v1853
        %v1855 = vpop.f32.mrb[0].mxu0
        %v1856 = vadd.f32 0.0, %v1855
        %1857 = vmatprep.mubr.f32.mxu0 0.0
        %1858 = vmatmul.mubr.f32.gmra.mrb[0].mxu0 %v1608
        %v1859 = vpop.f32.mrb[0].mxu0
        %v1860 = vadd.f32 0.0, %v1859
        %v1861 = vpop.f32.mrb[0].mxu0
        %v1862 = vadd.f32 0.0, %v1861
        %1863 = vmatprep.mubr.f32.mxu0 0.0
        %1864 = vmatmul.mubr.f32.gmra.mrb[0].mxu0 %v1611
        %v1865 = vpop.f32.mrb[0].mxu0
        %v1866 = vadd.f32 0.0, %v1865
        %v1867 = vpop.f32.mrb[0].mxu0
        %v1868 = vadd.f32 0.0, %v1867
        %1869 = vdwg.mxu0
        %v1870 = vmul.f32 %v1680, 0.17677669
        %v1871 = vmul.f32 %v1682, 0.17677669
        %v1872 = vmul.f32 %v1686, 0.17677669
        %v1873 = vmul.f32 %v1688, 0.17677669
        %v1874 = vmul.f32 %v1692, 0.17677669
        %v1875 = vmul.f32 %v1694, 0.17677669
        %v1876 = vmul.f32 %v1698, 0.17677669
        %v1877 = vmul.f32 %v1700, 0.17677669
        %v1878 = vmul.f32 %v1704, 0.17677669
        %v1879 = vmul.f32 %v1706, 0.17677669
        %v1880 = vmul.f32 %v1710, 0.17677669
        %v1881 = vmul.f32 %v1712, 0.17677669
        %v1882 = vmul.f32 %v1716, 0.17677669
        %v1883 = vmul.f32 %v1718, 0.17677669
        %v1884 = vmul.f32 %v1722, 0.17677669
        %v1885 = vmul.f32 %v1724, 0.17677669
        %v1886 = vmul.f32 %v1728, 0.17677669
        %v1887 = vmul.f32 %v1730, 0.17677669
        %v1888 = vmul.f32 %v1734, 0.17677669
        %v1889 = vmul.f32 %v1736, 0.17677669
        %v1890 = vmul.f32 %v1740, 0.17677669
        %v1891 = vmul.f32 %v1742, 0.17677669
        %v1892 = vmul.f32 %v1746, 0.17677669
        %v1893 = vmul.f32 %v1748, 0.17677669
        %v1894 = vmul.f32 %v1752, 0.17677669
        %v1895 = vmul.f32 %v1754, 0.17677669
        %v1896 = vmul.f32 %v1758, 0.17677669
        %v1897 = vmul.f32 %v1760, 0.17677669
        %v1898 = vmul.f32 %v1764, 0.17677669
        %v1899 = vmul.f32 %v1766, 0.17677669
        %v1900 = vmul.f32 %v1770, 0.17677669
        %v1901 = vmul.f32 %v1772, 0.17677669
        %v1902 = vmul.f32 %v1776, 0.17677669
        %v1903 = vmul.f32 %v1778, 0.17677669
        %v1904 = vmul.f32 %v1782, 0.17677669
        %v1905 = vmul.f32 %v1784, 0.17677669
        %v1906 = vmul.f32 %v1788, 0.17677669
        %v1907 = vmul.f32 %v1790, 0.17677669
        %v1908 = vmul.f32 %v1794, 0.17677669
        %v1909 = vmul.f32 %v1796, 0.17677669
        %v1910 = vmul.f32 %v1800, 0.17677669
        %v1911 = vmul.f32 %v1802, 0.17677669
        %v1912 = vmul.f32 %v1806, 0.17677669
        %v1913 = vmul.f32 %v1808, 0.17677669
        %v1914 = vmul.f32 %v1812, 0.17677669
        %v1915 = vmul.f32 %v1814, 0.17677669
        %v1916 = vmul.f32 %v1818, 0.17677669
        %v1917 = vmul.f32 %v1820, 0.17677669
        %v1918 = vmul.f32 %v1824, 0.17677669
        %v1919 = vmul.f32 %v1826, 0.17677669
        %v1920 = vmul.f32 %v1830, 0.17677669
        %v1921 = vmul.f32 %v1832, 0.17677669
        %v1922 = vmul.f32 %v1836, 0.17677669
        %v1923 = vmul.f32 %v1838, 0.17677669
        %v1924 = vmul.f32 %v1842, 0.17677669
        %v1925 = vmul.f32 %v1844, 0.17677669
        %v1926 = vmul.f32 %v1848, 0.17677669
        %v1927 = vmul.f32 %v1850, 0.17677669
        %v1928 = vmul.f32 %v1854, 0.17677669
        %v1929 = vmul.f32 %v1856, 0.17677669
        %v1930 = vmul.f32 %v1860, 0.17677669
        %v1931 = vmul.f32 %v1862, 0.17677669
        %v1932 = vmul.f32 %v1866, 0.17677669
        %v1933 = vmul.f32 %v1868, 0.17677669
        %1934 = vst [vmem:[#allocation2] sm:$0xff] %v1870
        %1935 = vst [vmem:[#allocation2 + $0x8] sm:$0xff] %v1871
        %1936 = vst [vmem:[#allocation2 + $0x10] sm:$0xff] %v1872
        %1937 = vst [vmem:[#allocation2 + $0x18] sm:$0xff] %v1873
        %1938 = vst [vmem:[#allocation2 + $0x20] sm:$0xff] %v1874
        %1939 = vst [vmem:[#allocation2 + $0x28] sm:$0xff] %v1875
        %1940 = vst [vmem:[#allocation2 + $0x30] sm:$0xff] %v1876
        %1941 = vst [vmem:[#allocation2 + $0x38] sm:$0xff] %v1877
        %1942 = vst [vmem:[#allocation2 + $0x40] sm:$0xff] %v1878
        %1943 = vst [vmem:[#allocation2 + $0x48] sm:$0xff] %v1879
        %1944 = vst [vmem:[#allocation2 + $0x50] sm:$0xff] %v1880
        %1945 = vst [vmem:[#allocation2 + $0x58] sm:$0xff] %v1881
        %1946 = vst [vmem:[#allocation2 + $0x60] sm:$0xff] %v1882
        %1947 = vst [vmem:[#allocation2 + $0x68] sm:$0xff] %v1883
        %1948 = vst [vmem:[#allocation2 + $0x70] sm:$0xff] %v1884
        %1949 = vst [vmem:[#allocation2 + $0x78] sm:$0xff] %v1885
        %1950 = vst [vmem:[#allocation2 + $0x80] sm:$0xff] %v1886
        %1951 = vst [vmem:[#allocation2 + $0x88] sm:$0xff] %v1887
        %1952 = vst [vmem:[#allocation2 + $0x90] sm:$0xff] %v1888
        %1953 = vst [vmem:[#allocation2 + $0x98] sm:$0xff] %v1889
        %1954 = vst [vmem:[#allocation2 + $0xa0] sm:$0xff] %v1890
        %1955 = vst [vmem:[#allocation2 + $0xa8] sm:$0xff] %v1891
        %1956 = vst [vmem:[#allocation2 + $0xb0] sm:$0xff] %v1892
        %1957 = vst [vmem:[#allocation2 + $0xb8] sm:$0xff] %v1893
        %1958 = vst [vmem:[#allocation2 + $0xc0] sm:$0xff] %v1894
        %1959 = vst [vmem:[#allocation2 + $0xc8] sm:$0xff] %v1895
        %1960 = vst [vmem:[#allocation2 + $0xd0] sm:$0xff] %v1896
        %1961 = vst [vmem:[#allocation2 + $0xd8] sm:$0xff] %v1897
        %1962 = vst [vmem:[#allocation2 + $0xe0] sm:$0xff] %v1898
        %1963 = vst [vmem:[#allocation2 + $0xe8] sm:$0xff] %v1899
        %1964 = vst [vmem:[#allocation2 + $0xf0] sm:$0xff] %v1900
        %1965 = vst [vmem:[#allocation2 + $0xf8] sm:$0xff] %v1901
        %1966 = vst [vmem:[#allocation2 + $0x100] sm:$0xff] %v1902
        %1967 = vst [vmem:[#allocation2 + $0x108] sm:$0xff] %v1903
        %1968 = vst [vmem:[#allocation2 + $0x110] sm:$0xff] %v1904
        %1969 = vst [vmem:[#allocation2 + $0x118] sm:$0xff] %v1905
        %1970 = vst [vmem:[#allocation2 + $0x120] sm:$0xff] %v1906
        %1971 = vst [vmem:[#allocation2 + $0x128] sm:$0xff] %v1907
        %1972 = vst [vmem:[#allocation2 + $0x130] sm:$0xff] %v1908
        %1973 = vst [vmem:[#allocation2 + $0x138] sm:$0xff] %v1909
        %1974 = vst [vmem:[#allocation2 + $0x140] sm:$0xff] %v1910
        %1975 = vst [vmem:[#allocation2 + $0x148] sm:$0xff] %v1911
        %1976 = vst [vmem:[#allocation2 + $0x150] sm:$0xff] %v1912
        %1977 = vst [vmem:[#allocation2 + $0x158] sm:$0xff] %v1913
        %1978 = vst [vmem:[#allocation2 + $0x160] sm:$0xff] %v1914
        %1979 = vst [vmem:[#allocation2 + $0x168] sm:$0xff] %v1915
        %1980 = vst [vmem:[#allocation2 + $0x170] sm:$0xff] %v1916
        %1981 = vst [vmem:[#allocation2 + $0x178] sm:$0xff] %v1917
        %1982 = vst [vmem:[#allocation2 + $0x180] sm:$0xff] %v1918
        %1983 = vst [vmem:[#allocation2 + $0x188] sm:$0xff] %v1919
        %1984 = vst [vmem:[#allocation2 + $0x190] sm:$0xff] %v1920
        %1985 = vst [vmem:[#allocation2 + $0x198] sm:$0xff] %v1921
        %1986 = vst [vmem:[#allocation2 + $0x1a0] sm:$0xff] %v1922
        %1987 = vst [vmem:[#allocation2 + $0x1a8] sm:$0xff] %v1923
        %1988 = vst [vmem:[#allocation2 + $0x1b0] sm:$0xff] %v1924
        %1989 = vst [vmem:[#allocation2 + $0x1b8] sm:$0xff] %v1925
        %1990 = vst [vmem:[#allocation2 + $0x1c0] sm:$0xff] %v1926
        %1991 = vst [vmem:[#allocation2 + $0x1c8] sm:$0xff] %v1927
        %1992 = vst [vmem:[#allocation2 + $0x1d0] sm:$0xff] %v1928
        %1993 = vst [vmem:[#allocation2 + $0x1d8] sm:$0xff] %v1929
        %1994 = vst [vmem:[#allocation2 + $0x1e0] sm:$0xff] %v1930
        %1995 = vst [vmem:[#allocation2 + $0x1e8] sm:$0xff] %v1931
        %1996 = vst [vmem:[#allocation2 + $0x1f0] sm:$0xff] %v1932
        %1997 = vst [vmem:[#allocation2 + $0x1f8] sm:$0xff] %v1933
        %1998 = vst [vmem:[%s522] sm:$0xff] %v1870
        %1999 = vst [vmem:[%s522 + $0x8] sm:$0xff] %v1871
        %2000 = vst [vmem:[%s522 + $0x10] sm:$0xff] %v1872
        %2001 = vst [vmem:[%s522 + $0x18] sm:$0xff] %v1873
        %2002 = vst [vmem:[%s522 + $0x20] sm:$0xff] %v1874
        %2003 = vst [vmem:[%s522 + $0x28] sm:$0xff] %v1875
        %2004 = vst [vmem:[%s522 + $0x30] sm:$0xff] %v1876
        %2005 = vst [vmem:[%s522 + $0x38] sm:$0xff] %v1877
        %2006 = vst [vmem:[%s522 + $0x40] sm:$0xff] %v1878
        %2007 = vst [vmem:[%s522 + $0x48] sm:$0xff] %v1879
        %2008 = vst [vmem:[%s522 + $0x50] sm:$0xff] %v1880
        %2009 = vst [vmem:[%s522 + $0x58] sm:$0xff] %v1881
        %2010 = vst [vmem:[%s522 + $0x60] sm:$0xff] %v1882
        %2011 = vst [vmem:[%s522 + $0x68] sm:$0xff] %v1883
        %2012 = vst [vmem:[%s522 + $0x70] sm:$0xff] %v1884
        %2013 = vst [vmem:[%s522 + $0x78] sm:$0xff] %v1885
        %2014 = vst [vmem:[%s522 + $0x80] sm:$0xff] %v1886
        %2015 = vst [vmem:[%s522 + $0x88] sm:$0xff] %v1887
        %2016 = vst [vmem:[%s522 + $0x90] sm:$0xff] %v1888
        %2017 = vst [vmem:[%s522 + $0x98] sm:$0xff] %v1889
        %2018 = vst [vmem:[%s522 + $0xa0] sm:$0xff] %v1890
        %2019 = vst [vmem:[%s522 + $0xa8] sm:$0xff] %v1891
        %2020 = vst [vmem:[%s522 + $0xb0] sm:$0xff] %v1892
        %2021 = vst [vmem:[%s522 + $0xb8] sm:$0xff] %v1893
        %2022 = vst [vmem:[%s522 + $0xc0] sm:$0xff] %v1894
        %2023 = vst [vmem:[%s522 + $0xc8] sm:$0xff] %v1895
        %2024 = vst [vmem:[%s522 + $0xd0] sm:$0xff] %v1896
        %2025 = vst [vmem:[%s522 + $0xd8] sm:$0xff] %v1897
        %2026 = vst [vmem:[%s522 + $0xe0] sm:$0xff] %v1898
        %2027 = vst [vmem:[%s522 + $0xe8] sm:$0xff] %v1899
        %2028 = vst [vmem:[%s522 + $0xf0] sm:$0xff] %v1900
        %2029 = vst [vmem:[%s522 + $0xf8] sm:$0xff] %v1901
        %2030 = vst [vmem:[%s522 + $0x100] sm:$0xff] %v1902
        %2031 = vst [vmem:[%s522 + $0x108] sm:$0xff] %v1903
        %2032 = vst [vmem:[%s522 + $0x110] sm:$0xff] %v1904
        %2033 = vst [vmem:[%s522 + $0x118] sm:$0xff] %v1905
        %2034 = vst [vmem:[%s522 + $0x120] sm:$0xff] %v1906
        %2035 = vst [vmem:[%s522 + $0x128] sm:$0xff] %v1907
        %2036 = vst [vmem:[%s522 + $0x130] sm:$0xff] %v1908
        %2037 = vst [vmem:[%s522 + $0x138] sm:$0xff] %v1909
        %2038 = vst [vmem:[%s522 + $0x140] sm:$0xff] %v1910
        %2039 = vst [vmem:[%s522 + $0x148] sm:$0xff] %v1911
        %2040 = vst [vmem:[%s522 + $0x150] sm:$0xff] %v1912
        %2041 = vst [vmem:[%s522 + $0x158] sm:$0xff] %v1913
        %2042 = vst [vmem:[%s522 + $0x160] sm:$0xff] %v1914
        %2043 = vst [vmem:[%s522 + $0x168] sm:$0xff] %v1915
        %2044 = vst [vmem:[%s522 + $0x170] sm:$0xff] %v1916
        %2045 = vst [vmem:[%s522 + $0x178] sm:$0xff] %v1917
        %2046 = vst [vmem:[%s522 + $0x180] sm:$0xff] %v1918
        %2047 = vst [vmem:[%s522 + $0x188] sm:$0xff] %v1919
        %2048 = vst [vmem:[%s522 + $0x190] sm:$0xff] %v1920
        %2049 = vst [vmem:[%s522 + $0x198] sm:$0xff] %v1921
        %2050 = vst [vmem:[%s522 + $0x1a0] sm:$0xff] %v1922
        %2051 = vst [vmem:[%s522 + $0x1a8] sm:$0xff] %v1923
        %2052 = vst [vmem:[%s522 + $0x1b0] sm:$0xff] %v1924
        %2053 = vst [vmem:[%s522 + $0x1b8] sm:$0xff] %v1925
        %2054 = vst [vmem:[%s522 + $0x1c0] sm:$0xff] %v1926
        %2055 = vst [vmem:[%s522 + $0x1c8] sm:$0xff] %v1927
        %2056 = vst [vmem:[%s522 + $0x1d0] sm:$0xff] %v1928
        %2057 = vst [vmem:[%s522 + $0x1d8] sm:$0xff] %v1929
        %2058 = vst [vmem:[%s522 + $0x1e0] sm:$0xff] %v1930
        %2059 = vst [vmem:[%s522 + $0x1e8] sm:$0xff] %v1931
        %2060 = vst [vmem:[%s522 + $0x1f0] sm:$0xff] %v1932
        %2061 = vst [vmem:[%s522 + $0x1f8] sm:$0xff] %v1933
        %2062 = vst [vmem:[#allocation3] sm:$0xff] 0.0
        %2063 = vst [vmem:[#allocation3 + $0x8] sm:$0xff] 0.0
        %2064 = vst [vmem:[#allocation3 + $0x10] sm:$0xff] 0.0
        %2065 = vst [vmem:[#allocation3 + $0x18] sm:$0xff] 0.0
        %2066 = vst [vmem:[#allocation3 + $0x20] sm:$0xff] 0.0
        %2067 = vst [vmem:[#allocation3 + $0x28] sm:$0xff] 0.0
        %2068 = vst [vmem:[#allocation3 + $0x30] sm:$0xff] 0.0
        %2069 = vst [vmem:[#allocation3 + $0x38] sm:$0xff] 0.0
        %2070 = vst [vmem:[#allocation3 + $0x40] sm:$0xff] 0.0
        %2071 = vst [vmem:[#allocation3 + $0x48] sm:$0xff] 0.0
        %2072 = vst [vmem:[#allocation3 + $0x50] sm:$0xff] 0.0
        %2073 = vst [vmem:[#allocation3 + $0x58] sm:$0xff] 0.0
        %2074 = vst [vmem:[#allocation3 + $0x60] sm:$0xff] 0.0
        %2075 = vst [vmem:[#allocation3 + $0x68] sm:$0xff] 0.0
        %2076 = vst [vmem:[#allocation3 + $0x70] sm:$0xff] 0.0
        %2077 = vst [vmem:[#allocation3 + $0x78] sm:$0xff] 0.0
        %2078 = vst [vmem:[#allocation3 + $0x80] sm:$0xff] 0.0
        %2079 = vst [vmem:[#allocation3 + $0x88] sm:$0xff] 0.0
        %2080 = vst [vmem:[#allocation3 + $0x90] sm:$0xff] 0.0
        %2081 = vst [vmem:[#allocation3 + $0x98] sm:$0xff] 0.0
        %2082 = vst [vmem:[#allocation3 + $0xa0] sm:$0xff] 0.0
        %2083 = vst [vmem:[#allocation3 + $0xa8] sm:$0xff] 0.0
        %2084 = vst [vmem:[#allocation3 + $0xb0] sm:$0xff] 0.0
        %2085 = vst [vmem:[#allocation3 + $0xb8] sm:$0xff] 0.0
        %2086 = vst [vmem:[#allocation3 + $0xc0] sm:$0xff] 0.0
        %2087 = vst [vmem:[#allocation3 + $0xc8] sm:$0xff] 0.0
        %2088 = vst [vmem:[#allocation3 + $0xd0] sm:$0xff] 0.0
        %2089 = vst [vmem:[#allocation3 + $0xd8] sm:$0xff] 0.0
        %2090 = vst [vmem:[#allocation3 + $0xe0] sm:$0xff] 0.0
        %2091 = vst [vmem:[#allocation3 + $0xe8] sm:$0xff] 0.0
        %2092 = vst [vmem:[#allocation3 + $0xf0] sm:$0xff] 0.0
        %2093 = vst [vmem:[#allocation3 + $0xf8] sm:$0xff] 0.0
        %2094 = vst [vmem:[#allocation3 + $0x100] sm:$0xff] 0.0
        %2095 = vst [vmem:[#allocation3 + $0x108] sm:$0xff] 0.0
        %2096 = vst [vmem:[#allocation3 + $0x110] sm:$0xff] 0.0
        %2097 = vst [vmem:[#allocation3 + $0x118] sm:$0xff] 0.0
        %2098 = vst [vmem:[#allocation3 + $0x120] sm:$0xff] 0.0
        %2099 = vst [vmem:[#allocation3 + $0x128] sm:$0xff] 0.0
        %2100 = vst [vmem:[#allocation3 + $0x130] sm:$0xff] 0.0
        %2101 = vst [vmem:[#allocation3 + $0x138] sm:$0xff] 0.0
        %2102 = vst [vmem:[#allocation3 + $0x140] sm:$0xff] 0.0
        %2103 = vst [vmem:[#allocation3 + $0x148] sm:$0xff] 0.0
        %2104 = vst [vmem:[#allocation3 + $0x150] sm:$0xff] 0.0
        %2105 = vst [vmem:[#allocation3 + $0x158] sm:$0xff] 0.0
        %2106 = vst [vmem:[#allocation3 + $0x160] sm:$0xff] 0.0
        %2107 = vst [vmem:[#allocation3 + $0x168] sm:$0xff] 0.0
        %2108 = vst [vmem:[#allocation3 + $0x170] sm:$0xff] 0.0
        %2109 = vst [vmem:[#allocation3 + $0x178] sm:$0xff] 0.0
        %2110 = vst [vmem:[#allocation3 + $0x180] sm:$0xff] 0.0
        %2111 = vst [vmem:[#allocation3 + $0x188] sm:$0xff] 0.0
        %2112 = vst [vmem:[#allocation3 + $0x190] sm:$0xff] 0.0
        %2113 = vst [vmem:[#allocation3 + $0x198] sm:$0xff] 0.0
        %2114 = vst [vmem:[#allocation3 + $0x1a0] sm:$0xff] 0.0
        %2115 = vst [vmem:[#allocation3 + $0x1a8] sm:$0xff] 0.0
        %2116 = vst [vmem:[#allocation3 + $0x1b0] sm:$0xff] 0.0
        %2117 = vst [vmem:[#allocation3 + $0x1b8] sm:$0xff] 0.0
        %2118 = vst [vmem:[#allocation3 + $0x1c0] sm:$0xff] 0.0
        %2119 = vst [vmem:[#allocation3 + $0x1c8] sm:$0xff] 0.0
        %2120 = vst [vmem:[#allocation3 + $0x1d0] sm:$0xff] 0.0
        %2121 = vst [vmem:[#allocation3 + $0x1d8] sm:$0xff] 0.0
        %2122 = vst [vmem:[#allocation3 + $0x1e0] sm:$0xff] 0.0
        %2123 = vst [vmem:[#allocation3 + $0x1e8] sm:$0xff] 0.0
        %2124 = vst [vmem:[#allocation3 + $0x1f0] sm:$0xff] 0.0
        %2125 = vst [vmem:[#allocation3 + $0x1f8] sm:$0xff] 0.0
        %v2126 = vlaneseq
        %v2127 = vand.u32 %v2126, 127
        %v2128 = vadd.s32 %v2127, 128
        loop: start=0, step=1, limit=256
        $region81: #{aug_attention_forward.1} parent=79 // loop_pre_header
          _
        $region82: #{aug_attention_forward.1} parent=79 // loop_header
          %s2130 = sphi 0, %s2134
          %p2131 = scmp.ge.s32.totalorder %s2130, 256
        $region83: #{aug_attention_forward.1} parent=79 // loop_header_branch
          %2133 = sbr.rel (%p2131) target = $region87
        $region84: #{aug_attention_forward.1} parent=79 // loop_body
          %v2135 = vld [vmem:[#allocation2] sm:$0xff]
          %v2136 = vld [vmem:[#allocation2 + $0x8] sm:$0xff]
          %v2137 = vld [vmem:[#allocation2 + $0x10] sm:$0xff]
          %v2138 = vld [vmem:[#allocation2 + $0x18] sm:$0xff]
          %v2139 = vld [vmem:[#allocation2 + $0x20] sm:$0xff]
          %v2140 = vld [vmem:[#allocation2 + $0x28] sm:$0xff]
          %v2141 = vld [vmem:[#allocation2 + $0x30] sm:$0xff]
          %v2142 = vld [vmem:[#allocation2 + $0x38] sm:$0xff]
          %v2143 = vld [vmem:[#allocation2 + $0x40] sm:$0xff]
          %v2144 = vld [vmem:[#allocation2 + $0x48] sm:$0xff]
          %v2145 = vld [vmem:[#allocation2 + $0x50] sm:$0xff]
          %v2146 = vld [vmem:[#allocation2 + $0x58] sm:$0xff]
          %v2147 = vld [vmem:[#allocation2 + $0x60] sm:$0xff]
          %v2148 = vld [vmem:[#allocation2 + $0x68] sm:$0xff]
          %v2149 = vld [vmem:[#allocation2 + $0x70] sm:$0xff]
          %v2150 = vld [vmem:[#allocation2 + $0x78] sm:$0xff]
          %v2151 = vld [vmem:[#allocation2 + $0x80] sm:$0xff]
          %v2152 = vld [vmem:[#allocation2 + $0x88] sm:$0xff]
          %v2153 = vld [vmem:[#allocation2 + $0x90] sm:$0xff]
          %v2154 = vld [vmem:[#allocation2 + $0x98] sm:$0xff]
          %v2155 = vld [vmem:[#allocation2 + $0xa0] sm:$0xff]
          %v2156 = vld [vmem:[#allocation2 + $0xa8] sm:$0xff]
          %v2157 = vld [vmem:[#allocation2 + $0xb0] sm:$0xff]
          %v2158 = vld [vmem:[#allocation2 + $0xb8] sm:$0xff]
          %v2159 = vld [vmem:[#allocation2 + $0xc0] sm:$0xff]
          %v2160 = vld [vmem:[#allocation2 + $0xc8] sm:$0xff]
          %v2161 = vld [vmem:[#allocation2 + $0xd0] sm:$0xff]
          %v2162 = vld [vmem:[#allocation2 + $0xd8] sm:$0xff]
          %v2163 = vld [vmem:[#allocation2 + $0xe0] sm:$0xff]
          %v2164 = vld [vmem:[#allocation2 + $0xe8] sm:$0xff]
          %v2165 = vld [vmem:[#allocation2 + $0xf0] sm:$0xff]
          %v2166 = vld [vmem:[#allocation2 + $0xf8] sm:$0xff]
          %v2167 = vld [vmem:[#allocation2 + $0x100] sm:$0xff]
          %v2168 = vld [vmem:[#allocation2 + $0x108] sm:$0xff]
          %v2169 = vld [vmem:[#allocation2 + $0x110] sm:$0xff]
          %v2170 = vld [vmem:[#allocation2 + $0x118] sm:$0xff]
          %v2171 = vld [vmem:[#allocation2 + $0x120] sm:$0xff]
          %v2172 = vld [vmem:[#allocation2 + $0x128] sm:$0xff]
          %v2173 = vld [vmem:[#allocation2 + $0x130] sm:$0xff]
          %v2174 = vld [vmem:[#allocation2 + $0x138] sm:$0xff]
          %v2175 = vld [vmem:[#allocation2 + $0x140] sm:$0xff]
          %v2176 = vld [vmem:[#allocation2 + $0x148] sm:$0xff]
          %v2177 = vld [vmem:[#allocation2 + $0x150] sm:$0xff]
          %v2178 = vld [vmem:[#allocation2 + $0x158] sm:$0xff]
          %v2179 = vld [vmem:[#allocation2 + $0x160] sm:$0xff]
          %v2180 = vld [vmem:[#allocation2 + $0x168] sm:$0xff]
          %v2181 = vld [vmem:[#allocation2 + $0x170] sm:$0xff]
          %v2182 = vld [vmem:[#allocation2 + $0x178] sm:$0xff]
          %v2183 = vld [vmem:[#allocation2 + $0x180] sm:$0xff]
          %v2184 = vld [vmem:[#allocation2 + $0x188] sm:$0xff]
          %v2185 = vld [vmem:[#allocation2 + $0x190] sm:$0xff]
          %v2186 = vld [vmem:[#allocation2 + $0x198] sm:$0xff]
          %v2187 = vld [vmem:[#allocation2 + $0x1a0] sm:$0xff]
          %v2188 = vld [vmem:[#allocation2 + $0x1a8] sm:$0xff]
          %v2189 = vld [vmem:[#allocation2 + $0x1b0] sm:$0xff]
          %v2190 = vld [vmem:[#allocation2 + $0x1b8] sm:$0xff]
          %v2191 = vld [vmem:[#allocation2 + $0x1c0] sm:$0xff]
          %v2192 = vld [vmem:[#allocation2 + $0x1c8] sm:$0xff]
          %v2193 = vld [vmem:[#allocation2 + $0x1d0] sm:$0xff]
          %v2194 = vld [vmem:[#allocation2 + $0x1d8] sm:$0xff]
          %v2195 = vld [vmem:[#allocation2 + $0x1e0] sm:$0xff]
          %v2196 = vld [vmem:[#allocation2 + $0x1e8] sm:$0xff]
          %v2197 = vld [vmem:[#allocation2 + $0x1f0] sm:$0xff]
          %v2198 = vld [vmem:[#allocation2 + $0x1f8] sm:$0xff]
          %v2199 = vstv %s2130
          %vm2200 = vcmp.eq.s32.totalorder %v2127, %v2199
          %vm2201 = vcmp.eq.s32.totalorder %v2128, %v2199
          %v2202 = vsel %vm2200, 1, 0
          %v2203 = vsel %vm2201, 1, 0
          %v2204 = vcvt.s32.f32 %v2202
          %v2205 = vcvt.s32.f32 %v2203
          %v2206 = vmul.f32 %v2135, %v2204
          %v2207 = vmul.f32 %v2136, %v2205
          %v2208 = vmul.f32 %v2137, %v2204
          %v2209 = vmul.f32 %v2138, %v2205
          %v2210 = vmul.f32 %v2139, %v2204
          %v2211 = vmul.f32 %v2140, %v2205
          %v2212 = vmul.f32 %v2141, %v2204
          %v2213 = vmul.f32 %v2142, %v2205
          %v2214 = vmul.f32 %v2143, %v2204
          %v2215 = vmul.f32 %v2144, %v2205
          %v2216 = vmul.f32 %v2145, %v2204
          %v2217 = vmul.f32 %v2146, %v2205
          %v2218 = vmul.f32 %v2147, %v2204
          %v2219 = vmul.f32 %v2148, %v2205
          %v2220 = vmul.f32 %v2149, %v2204
          %v2221 = vmul.f32 %v2150, %v2205
          %v2222 = vmul.f32 %v2151, %v2204
          %v2223 = vmul.f32 %v2152, %v2205
          %v2224 = vmul.f32 %v2153, %v2204
          %v2225 = vmul.f32 %v2154, %v2205
          %v2226 = vmul.f32 %v2155, %v2204
          %v2227 = vmul.f32 %v2156, %v2205
          %v2228 = vmul.f32 %v2157, %v2204
          %v2229 = vmul.f32 %v2158, %v2205
          %v2230 = vmul.f32 %v2159, %v2204
          %v2231 = vmul.f32 %v2160, %v2205
          %v2232 = vmul.f32 %v2161, %v2204
          %v2233 = vmul.f32 %v2162, %v2205
          %v2234 = vmul.f32 %v2163, %v2204
          %v2235 = vmul.f32 %v2164, %v2205
          %v2236 = vmul.f32 %v2165, %v2204
          %v2237 = vmul.f32 %v2166, %v2205
          %v2238 = vmul.f32 %v2167, %v2204
          %v2239 = vmul.f32 %v2168, %v2205
          %v2240 = vmul.f32 %v2169, %v2204
          %v2241 = vmul.f32 %v2170, %v2205
          %v2242 = vmul.f32 %v2171, %v2204
          %v2243 = vmul.f32 %v2172, %v2205
          %v2244 = vmul.f32 %v2173, %v2204
          %v2245 = vmul.f32 %v2174, %v2205
          %v2246 = vmul.f32 %v2175, %v2204
          %v2247 = vmul.f32 %v2176, %v2205
          %v2248 = vmul.f32 %v2177, %v2204
          %v2249 = vmul.f32 %v2178, %v2205
          %v2250 = vmul.f32 %v2179, %v2204
          %v2251 = vmul.f32 %v2180, %v2205
          %v2252 = vmul.f32 %v2181, %v2204
          %v2253 = vmul.f32 %v2182, %v2205
          %v2254 = vmul.f32 %v2183, %v2204
          %v2255 = vmul.f32 %v2184, %v2205
          %v2256 = vmul.f32 %v2185, %v2204
          %v2257 = vmul.f32 %v2186, %v2205
          %v2258 = vmul.f32 %v2187, %v2204
          %v2259 = vmul.f32 %v2188, %v2205
          %v2260 = vmul.f32 %v2189, %v2204
          %v2261 = vmul.f32 %v2190, %v2205
          %v2262 = vmul.f32 %v2191, %v2204
          %v2263 = vmul.f32 %v2192, %v2205
          %v2264 = vmul.f32 %v2193, %v2204
          %v2265 = vmul.f32 %v2194, %v2205
          %v2266 = vmul.f32 %v2195, %v2204
          %v2267 = vmul.f32 %v2196, %v2205
          %v2268 = vmul.f32 %v2197, %v2204
          %v2269 = vmul.f32 %v2198, %v2205
          %v2270 = vadd.f32 %v2206, %v2207
          %2271 = vadd.xlane.f32.xlu0 %v2270
          %v2272 = vpop.xlane.xlu0 %2271
          %v2273 = vadd.f32 %v2208, %v2209
          %2274 = vadd.xlane.f32.xlu0 %v2273
          %v2275 = vpop.xlane.xlu0 %2274
          %v2276 = vadd.f32 %v2210, %v2211
          %2277 = vadd.xlane.f32.xlu0 %v2276
          %v2278 = vpop.xlane.xlu0 %2277
          %v2279 = vadd.f32 %v2212, %v2213
          %2280 = vadd.xlane.f32.xlu0 %v2279
          %v2281 = vpop.xlane.xlu0 %2280
          %v2282 = vadd.f32 %v2214, %v2215
          %2283 = vadd.xlane.f32.xlu0 %v2282
          %v2284 = vpop.xlane.xlu0 %2283
          %v2285 = vadd.f32 %v2216, %v2217
          %2286 = vadd.xlane.f32.xlu0 %v2285
          %v2287 = vpop.xlane.xlu0 %2286
          %v2288 = vadd.f32 %v2218, %v2219
          %2289 = vadd.xlane.f32.xlu0 %v2288
          %v2290 = vpop.xlane.xlu0 %2289
          %v2291 = vadd.f32 %v2220, %v2221
          %2292 = vadd.xlane.f32.xlu0 %v2291
          %v2293 = vpop.xlane.xlu0 %2292
          %v2294 = vadd.f32 %v2222, %v2223
          %2295 = vadd.xlane.f32.xlu0 %v2294
          %v2296 = vpop.xlane.xlu0 %2295
          %v2297 = vadd.f32 %v2224, %v2225
          %2298 = vadd.xlane.f32.xlu0 %v2297
          %v2299 = vpop.xlane.xlu0 %2298
          %v2300 = vadd.f32 %v2226, %v2227
          %2301 = vadd.xlane.f32.xlu0 %v2300
          %v2302 = vpop.xlane.xlu0 %2301
          %v2303 = vadd.f32 %v2228, %v2229
          %2304 = vadd.xlane.f32.xlu0 %v2303
          %v2305 = vpop.xlane.xlu0 %2304
          %v2306 = vadd.f32 %v2230, %v2231
          %2307 = vadd.xlane.f32.xlu0 %v2306
          %v2308 = vpop.xlane.xlu0 %2307
          %v2309 = vadd.f32 %v2232, %v2233
          %2310 = vadd.xlane.f32.xlu0 %v2309
          %v2311 = vpop.xlane.xlu0 %2310
          %v2312 = vadd.f32 %v2234, %v2235
          %2313 = vadd.xlane.f32.xlu0 %v2312
          %v2314 = vpop.xlane.xlu0 %2313
          %v2315 = vadd.f32 %v2236, %v2237
          %2316 = vadd.xlane.f32.xlu0 %v2315
          %v2317 = vpop.xlane.xlu0 %2316
          %v2318 = vadd.f32 %v2238, %v2239
          %2319 = vadd.xlane.f32.xlu0 %v2318
          %v2320 = vpop.xlane.xlu0 %2319
          %v2321 = vadd.f32 %v2240, %v2241
          %2322 = vadd.xlane.f32.xlu0 %v2321
          %v2323 = vpop.xlane.xlu0 %2322
          %v2324 = vadd.f32 %v2242, %v2243
          %2325 = vadd.xlane.f32.xlu0 %v2324
          %v2326 = vpop.xlane.xlu0 %2325
          %v2327 = vadd.f32 %v2244, %v2245
          %2328 = vadd.xlane.f32.xlu0 %v2327
          %v2329 = vpop.xlane.xlu0 %2328
          %v2330 = vadd.f32 %v2246, %v2247
          %2331 = vadd.xlane.f32.xlu0 %v2330
          %v2332 = vpop.xlane.xlu0 %2331
          %v2333 = vadd.f32 %v2248, %v2249
          %2334 = vadd.xlane.f32.xlu0 %v2333
          %v2335 = vpop.xlane.xlu0 %2334
          %v2336 = vadd.f32 %v2250, %v2251
          %2337 = vadd.xlane.f32.xlu0 %v2336
          %v2338 = vpop.xlane.xlu0 %2337
          %v2339 = vadd.f32 %v2252, %v2253
          %2340 = vadd.xlane.f32.xlu0 %v2339
          %v2341 = vpop.xlane.xlu0 %2340
          %v2342 = vadd.f32 %v2254, %v2255
          %2343 = vadd.xlane.f32.xlu0 %v2342
          %v2344 = vpop.xlane.xlu0 %2343
          %v2345 = vadd.f32 %v2256, %v2257
          %2346 = vadd.xlane.f32.xlu0 %v2345
          %v2347 = vpop.xlane.xlu0 %2346
          %v2348 = vadd.f32 %v2258, %v2259
          %2349 = vadd.xlane.f32.xlu0 %v2348
          %v2350 = vpop.xlane.xlu0 %2349
          %v2351 = vadd.f32 %v2260, %v2261
          %2352 = vadd.xlane.f32.xlu0 %v2351
          %v2353 = vpop.xlane.xlu0 %2352
          %v2354 = vadd.f32 %v2262, %v2263
          %2355 = vadd.xlane.f32.xlu0 %v2354
          %v2356 = vpop.xlane.xlu0 %2355
          %v2357 = vadd.f32 %v2264, %v2265
          %2358 = vadd.xlane.f32.xlu0 %v2357
          %v2359 = vpop.xlane.xlu0 %2358
          %v2360 = vadd.f32 %v2266, %v2267
          %2361 = vadd.xlane.f32.xlu0 %v2360
          %v2362 = vpop.xlane.xlu0 %2361
          %v2363 = vadd.f32 %v2268, %v2269
          %2364 = vadd.xlane.f32.xlu0 %v2363
          %v2365 = vpop.xlane.xlu0 %2364
          %v2366 = vld [vmem:[#allocation3] sm:$0xff]
          %v2367 = vld [vmem:[#allocation3 + $0x8] sm:$0xff]
          %v2368 = vld [vmem:[#allocation3 + $0x10] sm:$0xff]
          %v2369 = vld [vmem:[#allocation3 + $0x18] sm:$0xff]
          %v2370 = vld [vmem:[#allocation3 + $0x20] sm:$0xff]
          %v2371 = vld [vmem:[#allocation3 + $0x28] sm:$0xff]
          %v2372 = vld [vmem:[#allocation3 + $0x30] sm:$0xff]
          %v2373 = vld [vmem:[#allocation3 + $0x38] sm:$0xff]
          %v2374 = vld [vmem:[#allocation3 + $0x40] sm:$0xff]
          %v2375 = vld [vmem:[#allocation3 + $0x48] sm:$0xff]
          %v2376 = vld [vmem:[#allocation3 + $0x50] sm:$0xff]
          %v2377 = vld [vmem:[#allocation3 + $0x58] sm:$0xff]
          %v2378 = vld [vmem:[#allocation3 + $0x60] sm:$0xff]
          %v2379 = vld [vmem:[#allocation3 + $0x68] sm:$0xff]
          %v2380 = vld [vmem:[#allocation3 + $0x70] sm:$0xff]
          %v2381 = vld [vmem:[#allocation3 + $0x78] sm:$0xff]
          %v2382 = vld [vmem:[#allocation3 + $0x80] sm:$0xff]
          %v2383 = vld [vmem:[#allocation3 + $0x88] sm:$0xff]
          %v2384 = vld [vmem:[#allocation3 + $0x90] sm:$0xff]
          %v2385 = vld [vmem:[#allocation3 + $0x98] sm:$0xff]
          %v2386 = vld [vmem:[#allocation3 + $0xa0] sm:$0xff]
          %v2387 = vld [vmem:[#allocation3 + $0xa8] sm:$0xff]
          %v2388 = vld [vmem:[#allocation3 + $0xb0] sm:$0xff]
          %v2389 = vld [vmem:[#allocation3 + $0xb8] sm:$0xff]
          %v2390 = vld [vmem:[#allocation3 + $0xc0] sm:$0xff]
          %v2391 = vld [vmem:[#allocation3 + $0xc8] sm:$0xff]
          %v2392 = vld [vmem:[#allocation3 + $0xd0] sm:$0xff]
          %v2393 = vld [vmem:[#allocation3 + $0xd8] sm:$0xff]
          %v2394 = vld [vmem:[#allocation3 + $0xe0] sm:$0xff]
          %v2395 = vld [vmem:[#allocation3 + $0xe8] sm:$0xff]
          %v2396 = vld [vmem:[#allocation3 + $0xf0] sm:$0xff]
          %v2397 = vld [vmem:[#allocation3 + $0xf8] sm:$0xff]
          %v2398 = vld [vmem:[#allocation3 + $0x100] sm:$0xff]
          %v2399 = vld [vmem:[#allocation3 + $0x108] sm:$0xff]
          %v2400 = vld [vmem:[#allocation3 + $0x110] sm:$0xff]
          %v2401 = vld [vmem:[#allocation3 + $0x118] sm:$0xff]
          %v2402 = vld [vmem:[#allocation3 + $0x120] sm:$0xff]
          %v2403 = vld [vmem:[#allocation3 + $0x128] sm:$0xff]
          %v2404 = vld [vmem:[#allocation3 + $0x130] sm:$0xff]
          %v2405 = vld [vmem:[#allocation3 + $0x138] sm:$0xff]
          %v2406 = vld [vmem:[#allocation3 + $0x140] sm:$0xff]
          %v2407 = vld [vmem:[#allocation3 + $0x148] sm:$0xff]
          %v2408 = vld [vmem:[#allocation3 + $0x150] sm:$0xff]
          %v2409 = vld [vmem:[#allocation3 + $0x158] sm:$0xff]
          %v2410 = vld [vmem:[#allocation3 + $0x160] sm:$0xff]
          %v2411 = vld [vmem:[#allocation3 + $0x168] sm:$0xff]
          %v2412 = vld [vmem:[#allocation3 + $0x170] sm:$0xff]
          %v2413 = vld [vmem:[#allocation3 + $0x178] sm:$0xff]
          %v2414 = vld [vmem:[#allocation3 + $0x180] sm:$0xff]
          %v2415 = vld [vmem:[#allocation3 + $0x188] sm:$0xff]
          %v2416 = vld [vmem:[#allocation3 + $0x190] sm:$0xff]
          %v2417 = vld [vmem:[#allocation3 + $0x198] sm:$0xff]
          %v2418 = vld [vmem:[#allocation3 + $0x1a0] sm:$0xff]
          %v2419 = vld [vmem:[#allocation3 + $0x1a8] sm:$0xff]
          %v2420 = vld [vmem:[#allocation3 + $0x1b0] sm:$0xff]
          %v2421 = vld [vmem:[#allocation3 + $0x1b8] sm:$0xff]
          %v2422 = vld [vmem:[#allocation3 + $0x1c0] sm:$0xff]
          %v2423 = vld [vmem:[#allocation3 + $0x1c8] sm:$0xff]
          %v2424 = vld [vmem:[#allocation3 + $0x1d0] sm:$0xff]
          %v2425 = vld [vmem:[#allocation3 + $0x1d8] sm:$0xff]
          %v2426 = vld [vmem:[#allocation3 + $0x1e0] sm:$0xff]
          %v2427 = vld [vmem:[#allocation3 + $0x1e8] sm:$0xff]
          %v2428 = vld [vmem:[#allocation3 + $0x1f0] sm:$0xff]
          %v2429 = vld [vmem:[#allocation3 + $0x1f8] sm:$0xff]
          %vm2430 = vcmp.gt.f32.partialorder %v2272, %v2135
          %vm2431 = vcmp.gt.f32.partialorder %v2272, %v2136
          %vm2432 = vcmp.gt.f32.partialorder %v2275, %v2137
          %vm2433 = vcmp.gt.f32.partialorder %v2275, %v2138
          %vm2434 = vcmp.gt.f32.partialorder %v2278, %v2139
          %vm2435 = vcmp.gt.f32.partialorder %v2278, %v2140
          %vm2436 = vcmp.gt.f32.partialorder %v2281, %v2141
          %vm2437 = vcmp.gt.f32.partialorder %v2281, %v2142
          %vm2438 = vcmp.gt.f32.partialorder %v2284, %v2143
          %vm2439 = vcmp.gt.f32.partialorder %v2284, %v2144
          %vm2440 = vcmp.gt.f32.partialorder %v2287, %v2145
          %vm2441 = vcmp.gt.f32.partialorder %v2287, %v2146
          %vm2442 = vcmp.gt.f32.partialorder %v2290, %v2147
          %vm2443 = vcmp.gt.f32.partialorder %v2290, %v2148
          %vm2444 = vcmp.gt.f32.partialorder %v2293, %v2149
          %vm2445 = vcmp.gt.f32.partialorder %v2293, %v2150
          %vm2446 = vcmp.gt.f32.partialorder %v2296, %v2151
          %vm2447 = vcmp.gt.f32.partialorder %v2296, %v2152
          %vm2448 = vcmp.gt.f32.partialorder %v2299, %v2153
          %vm2449 = vcmp.gt.f32.partialorder %v2299, %v2154
          %vm2450 = vcmp.gt.f32.partialorder %v2302, %v2155
          %vm2451 = vcmp.gt.f32.partialorder %v2302, %v2156
          %vm2452 = vcmp.gt.f32.partialorder %v2305, %v2157
          %vm2453 = vcmp.gt.f32.partialorder %v2305, %v2158
          %vm2454 = vcmp.gt.f32.partialorder %v2308, %v2159
          %vm2455 = vcmp.gt.f32.partialorder %v2308, %v2160
          %vm2456 = vcmp.gt.f32.partialorder %v2311, %v2161
          %vm2457 = vcmp.gt.f32.partialorder %v2311, %v2162
          %vm2458 = vcmp.gt.f32.partialorder %v2314, %v2163
          %vm2459 = vcmp.gt.f32.partialorder %v2314, %v2164
          %vm2460 = vcmp.gt.f32.partialorder %v2317, %v2165
          %vm2461 = vcmp.gt.f32.partialorder %v2317, %v2166
          %vm2462 = vcmp.gt.f32.partialorder %v2320, %v2167
          %vm2463 = vcmp.gt.f32.partialorder %v2320, %v2168
          %vm2464 = vcmp.gt.f32.partialorder %v2323, %v2169
          %vm2465 = vcmp.gt.f32.partialorder %v2323, %v2170
          %vm2466 = vcmp.gt.f32.partialorder %v2326, %v2171
          %vm2467 = vcmp.gt.f32.partialorder %v2326, %v2172
          %vm2468 = vcmp.gt.f32.partialorder %v2329, %v2173
          %vm2469 = vcmp.gt.f32.partialorder %v2329, %v2174
          %vm2470 = vcmp.gt.f32.partialorder %v2332, %v2175
          %vm2471 = vcmp.gt.f32.partialorder %v2332, %v2176
          %vm2472 = vcmp.gt.f32.partialorder %v2335, %v2177
          %vm2473 = vcmp.gt.f32.partialorder %v2335, %v2178
          %vm2474 = vcmp.gt.f32.partialorder %v2338, %v2179
          %vm2475 = vcmp.gt.f32.partialorder %v2338, %v2180
          %vm2476 = vcmp.gt.f32.partialorder %v2341, %v2181
          %vm2477 = vcmp.gt.f32.partialorder %v2341, %v2182
          %vm2478 = vcmp.gt.f32.partialorder %v2344, %v2183
          %vm2479 = vcmp.gt.f32.partialorder %v2344, %v2184
          %vm2480 = vcmp.gt.f32.partialorder %v2347, %v2185
          %vm2481 = vcmp.gt.f32.partialorder %v2347, %v2186
          %vm2482 = vcmp.gt.f32.partialorder %v2350, %v2187
          %vm2483 = vcmp.gt.f32.partialorder %v2350, %v2188
          %vm2484 = vcmp.gt.f32.partialorder %v2353, %v2189
          %vm2485 = vcmp.gt.f32.partialorder %v2353, %v2190
          %vm2486 = vcmp.gt.f32.partialorder %v2356, %v2191
          %vm2487 = vcmp.gt.f32.partialorder %v2356, %v2192
          %vm2488 = vcmp.gt.f32.partialorder %v2359, %v2193
          %vm2489 = vcmp.gt.f32.partialorder %v2359, %v2194
          %vm2490 = vcmp.gt.f32.partialorder %v2362, %v2195
          %vm2491 = vcmp.gt.f32.partialorder %v2362, %v2196
          %vm2492 = vcmp.gt.f32.partialorder %v2365, %v2197
          %vm2493 = vcmp.gt.f32.partialorder %v2365, %v2198
          %v2494 = vsel %vm2430, 1, 0
          %v2495 = vsel %vm2431, 1, 0
          %v2496 = vsel %vm2432, 1, 0
          %v2497 = vsel %vm2433, 1, 0
          %v2498 = vsel %vm2434, 1, 0
          %v2499 = vsel %vm2435, 1, 0
          %v2500 = vsel %vm2436, 1, 0
          %v2501 = vsel %vm2437, 1, 0
          %v2502 = vsel %vm2438, 1, 0
          %v2503 = vsel %vm2439, 1, 0
          %v2504 = vsel %vm2440, 1, 0
          %v2505 = vsel %vm2441, 1, 0
          %v2506 = vsel %vm2442, 1, 0
          %v2507 = vsel %vm2443, 1, 0
          %v2508 = vsel %vm2444, 1, 0
          %v2509 = vsel %vm2445, 1, 0
          %v2510 = vsel %vm2446, 1, 0
          %v2511 = vsel %vm2447, 1, 0
          %v2512 = vsel %vm2448, 1, 0
          %v2513 = vsel %vm2449, 1, 0
          %v2514 = vsel %vm2450, 1, 0
          %v2515 = vsel %vm2451, 1, 0
          %v2516 = vsel %vm2452, 1, 0
          %v2517 = vsel %vm2453, 1, 0
          %v2518 = vsel %vm2454, 1, 0
          %v2519 = vsel %vm2455, 1, 0
          %v2520 = vsel %vm2456, 1, 0
          %v2521 = vsel %vm2457, 1, 0
          %v2522 = vsel %vm2458, 1, 0
          %v2523 = vsel %vm2459, 1, 0
          %v2524 = vsel %vm2460, 1, 0
          %v2525 = vsel %vm2461, 1, 0
          %v2526 = vsel %vm2462, 1, 0
          %v2527 = vsel %vm2463, 1, 0
          %v2528 = vsel %vm2464, 1, 0
          %v2529 = vsel %vm2465, 1, 0
          %v2530 = vsel %vm2466, 1, 0
          %v2531 = vsel %vm2467, 1, 0
          %v2532 = vsel %vm2468, 1, 0
          %v2533 = vsel %vm2469, 1, 0
          %v2534 = vsel %vm2470, 1, 0
          %v2535 = vsel %vm2471, 1, 0
          %v2536 = vsel %vm2472, 1, 0
          %v2537 = vsel %vm2473, 1, 0
          %v2538 = vsel %vm2474, 1, 0
          %v2539 = vsel %vm2475, 1, 0
          %v2540 = vsel %vm2476, 1, 0
          %v2541 = vsel %vm2477, 1, 0
          %v2542 = vsel %vm2478, 1, 0
          %v2543 = vsel %vm2479, 1, 0
          %v2544 = vsel %vm2480, 1, 0
          %v2545 = vsel %vm2481, 1, 0
          %v2546 = vsel %vm2482, 1, 0
          %v2547 = vsel %vm2483, 1, 0
          %v2548 = vsel %vm2484, 1, 0
          %v2549 = vsel %vm2485, 1, 0
          %v2550 = vsel %vm2486, 1, 0
          %v2551 = vsel %vm2487, 1, 0
          %v2552 = vsel %vm2488, 1, 0
          %v2553 = vsel %vm2489, 1, 0
          %v2554 = vsel %vm2490, 1, 0
          %v2555 = vsel %vm2491, 1, 0
          %v2556 = vsel %vm2492, 1, 0
          %v2557 = vsel %vm2493, 1, 0
          %v2558 = vcvt.s32.f32 %v2494
          %v2559 = vcvt.s32.f32 %v2495
          %v2560 = vcvt.s32.f32 %v2496
          %v2561 = vcvt.s32.f32 %v2497
          %v2562 = vcvt.s32.f32 %v2498
          %v2563 = vcvt.s32.f32 %v2499
          %v2564 = vcvt.s32.f32 %v2500
          %v2565 = vcvt.s32.f32 %v2501
          %v2566 = vcvt.s32.f32 %v2502
          %v2567 = vcvt.s32.f32 %v2503
          %v2568 = vcvt.s32.f32 %v2504
          %v2569 = vcvt.s32.f32 %v2505
          %v2570 = vcvt.s32.f32 %v2506
          %v2571 = vcvt.s32.f32 %v2507
          %v2572 = vcvt.s32.f32 %v2508
          %v2573 = vcvt.s32.f32 %v2509
          %v2574 = vcvt.s32.f32 %v2510
          %v2575 = vcvt.s32.f32 %v2511
          %v2576 = vcvt.s32.f32 %v2512
          %v2577 = vcvt.s32.f32 %v2513
          %v2578 = vcvt.s32.f32 %v2514
          %v2579 = vcvt.s32.f32 %v2515
          %v2580 = vcvt.s32.f32 %v2516
          %v2581 = vcvt.s32.f32 %v2517
          %v2582 = vcvt.s32.f32 %v2518
          %v2583 = vcvt.s32.f32 %v2519
          %v2584 = vcvt.s32.f32 %v2520
          %v2585 = vcvt.s32.f32 %v2521
          %v2586 = vcvt.s32.f32 %v2522
          %v2587 = vcvt.s32.f32 %v2523
          %v2588 = vcvt.s32.f32 %v2524
          %v2589 = vcvt.s32.f32 %v2525
          %v2590 = vcvt.s32.f32 %v2526
          %v2591 = vcvt.s32.f32 %v2527
          %v2592 = vcvt.s32.f32 %v2528
          %v2593 = vcvt.s32.f32 %v2529
          %v2594 = vcvt.s32.f32 %v2530
          %v2595 = vcvt.s32.f32 %v2531
          %v2596 = vcvt.s32.f32 %v2532
          %v2597 = vcvt.s32.f32 %v2533
          %v2598 = vcvt.s32.f32 %v2534
          %v2599 = vcvt.s32.f32 %v2535
          %v2600 = vcvt.s32.f32 %v2536
          %v2601 = vcvt.s32.f32 %v2537
          %v2602 = vcvt.s32.f32 %v2538
          %v2603 = vcvt.s32.f32 %v2539
          %v2604 = vcvt.s32.f32 %v2540
          %v2605 = vcvt.s32.f32 %v2541
          %v2606 = vcvt.s32.f32 %v2542
          %v2607 = vcvt.s32.f32 %v2543
          %v2608 = vcvt.s32.f32 %v2544
          %v2609 = vcvt.s32.f32 %v2545
          %v2610 = vcvt.s32.f32 %v2546
          %v2611 = vcvt.s32.f32 %v2547
          %v2612 = vcvt.s32.f32 %v2548
          %v2613 = vcvt.s32.f32 %v2549
          %v2614 = vcvt.s32.f32 %v2550
          %v2615 = vcvt.s32.f32 %v2551
          %v2616 = vcvt.s32.f32 %v2552
          %v2617 = vcvt.s32.f32 %v2553
          %v2618 = vcvt.s32.f32 %v2554
          %v2619 = vcvt.s32.f32 %v2555
          %v2620 = vcvt.s32.f32 %v2556
          %v2621 = vcvt.s32.f32 %v2557
          %v2622 = vadd.f32 %v2366, %v2558
          %v2623 = vadd.f32 %v2367, %v2559
          %v2624 = vadd.f32 %v2368, %v2560
          %v2625 = vadd.f32 %v2369, %v2561
          %v2626 = vadd.f32 %v2370, %v2562
          %v2627 = vadd.f32 %v2371, %v2563
          %v2628 = vadd.f32 %v2372, %v2564
          %v2629 = vadd.f32 %v2373, %v2565
          %v2630 = vadd.f32 %v2374, %v2566
          %v2631 = vadd.f32 %v2375, %v2567
          %v2632 = vadd.f32 %v2376, %v2568
          %v2633 = vadd.f32 %v2377, %v2569
          %v2634 = vadd.f32 %v2378, %v2570
          %v2635 = vadd.f32 %v2379, %v2571
          %v2636 = vadd.f32 %v2380, %v2572
          %v2637 = vadd.f32 %v2381, %v2573
          %v2638 = vadd.f32 %v2382, %v2574
          %v2639 = vadd.f32 %v2383, %v2575
          %v2640 = vadd.f32 %v2384, %v2576
          %v2641 = vadd.f32 %v2385, %v2577
          %v2642 = vadd.f32 %v2386, %v2578
          %v2643 = vadd.f32 %v2387, %v2579
          %v2644 = vadd.f32 %v2388, %v2580
          %v2645 = vadd.f32 %v2389, %v2581
          %v2646 = vadd.f32 %v2390, %v2582
          %v2647 = vadd.f32 %v2391, %v2583
          %v2648 = vadd.f32 %v2392, %v2584
          %v2649 = vadd.f32 %v2393, %v2585
          %v2650 = vadd.f32 %v2394, %v2586
          %v2651 = vadd.f32 %v2395, %v2587
          %v2652 = vadd.f32 %v2396, %v2588
          %v2653 = vadd.f32 %v2397, %v2589
          %v2654 = vadd.f32 %v2398, %v2590
          %v2655 = vadd.f32 %v2399, %v2591
          %v2656 = vadd.f32 %v2400, %v2592
          %v2657 = vadd.f32 %v2401, %v2593
          %v2658 = vadd.f32 %v2402, %v2594
          %v2659 = vadd.f32 %v2403, %v2595
          %v2660 = vadd.f32 %v2404, %v2596
          %v2661 = vadd.f32 %v2405, %v2597
          %v2662 = vadd.f32 %v2406, %v2598
          %v2663 = vadd.f32 %v2407, %v2599
          %v2664 = vadd.f32 %v2408, %v2600
          %v2665 = vadd.f32 %v2409, %v2601
          %v2666 = vadd.f32 %v2410, %v2602
          %v2667 = vadd.f32 %v2411, %v2603
          %v2668 = vadd.f32 %v2412, %v2604
          %v2669 = vadd.f32 %v2413, %v2605
          %v2670 = vadd.f32 %v2414, %v2606
          %v2671 = vadd.f32 %v2415, %v2607
          %v2672 = vadd.f32 %v2416, %v2608
          %v2673 = vadd.f32 %v2417, %v2609
          %v2674 = vadd.f32 %v2418, %v2610
          %v2675 = vadd.f32 %v2419, %v2611
          %v2676 = vadd.f32 %v2420, %v2612
          %v2677 = vadd.f32 %v2421, %v2613
          %v2678 = vadd.f32 %v2422, %v2614
          %v2679 = vadd.f32 %v2423, %v2615
          %v2680 = vadd.f32 %v2424, %v2616
          %v2681 = vadd.f32 %v2425, %v2617
          %v2682 = vadd.f32 %v2426, %v2618
          %v2683 = vadd.f32 %v2427, %v2619
          %v2684 = vadd.f32 %v2428, %v2620
          %v2685 = vadd.f32 %v2429, %v2621
          %2686 = vst [vmem:[#allocation3] sm:$0xff] %v2622
          %2687 = vst [vmem:[#allocation3 + $0x8] sm:$0xff] %v2623
          %2688 = vst [vmem:[#allocation3 + $0x10] sm:$0xff] %v2624
          %2689 = vst [vmem:[#allocation3 + $0x18] sm:$0xff] %v2625
          %2690 = vst [vmem:[#allocation3 + $0x20] sm:$0xff] %v2626
          %2691 = vst [vmem:[#allocation3 + $0x28] sm:$0xff] %v2627
          %2692 = vst [vmem:[#allocation3 + $0x30] sm:$0xff] %v2628
          %2693 = vst [vmem:[#allocation3 + $0x38] sm:$0xff] %v2629
          %2694 = vst [vmem:[#allocation3 + $0x40] sm:$0xff] %v2630
          %2695 = vst [vmem:[#allocation3 + $0x48] sm:$0xff] %v2631
          %2696 = vst [vmem:[#allocation3 + $0x50] sm:$0xff] %v2632
          %2697 = vst [vmem:[#allocation3 + $0x58] sm:$0xff] %v2633
          %2698 = vst [vmem:[#allocation3 + $0x60] sm:$0xff] %v2634
          %2699 = vst [vmem:[#allocation3 + $0x68] sm:$0xff] %v2635
          %2700 = vst [vmem:[#allocation3 + $0x70] sm:$0xff] %v2636
          %2701 = vst [vmem:[#allocation3 + $0x78] sm:$0xff] %v2637
          %2702 = vst [vmem:[#allocation3 + $0x80] sm:$0xff] %v2638
          %2703 = vst [vmem:[#allocation3 + $0x88] sm:$0xff] %v2639
          %2704 = vst [vmem:[#allocation3 + $0x90] sm:$0xff] %v2640
          %2705 = vst [vmem:[#allocation3 + $0x98] sm:$0xff] %v2641
          %2706 = vst [vmem:[#allocation3 + $0xa0] sm:$0xff] %v2642
          %2707 = vst [vmem:[#allocation3 + $0xa8] sm:$0xff] %v2643
          %2708 = vst [vmem:[#allocation3 + $0xb0] sm:$0xff] %v2644
          %2709 = vst [vmem:[#allocation3 + $0xb8] sm:$0xff] %v2645
          %2710 = vst [vmem:[#allocation3 + $0xc0] sm:$0xff] %v2646
          %2711 = vst [vmem:[#allocation3 + $0xc8] sm:$0xff] %v2647
          %2712 = vst [vmem:[#allocation3 + $0xd0] sm:$0xff] %v2648
          %2713 = vst [vmem:[#allocation3 + $0xd8] sm:$0xff] %v2649
          %2714 = vst [vmem:[#allocation3 + $0xe0] sm:$0xff] %v2650
          %2715 = vst [vmem:[#allocation3 + $0xe8] sm:$0xff] %v2651
          %2716 = vst [vmem:[#allocation3 + $0xf0] sm:$0xff] %v2652
          %2717 = vst [vmem:[#allocation3 + $0xf8] sm:$0xff] %v2653
          %2718 = vst [vmem:[#allocation3 + $0x100] sm:$0xff] %v2654
          %2719 = vst [vmem:[#allocation3 + $0x108] sm:$0xff] %v2655
          %2720 = vst [vmem:[#allocation3 + $0x110] sm:$0xff] %v2656
          %2721 = vst [vmem:[#allocation3 + $0x118] sm:$0xff] %v2657
          %2722 = vst [vmem:[#allocation3 + $0x120] sm:$0xff] %v2658
          %2723 = vst [vmem:[#allocation3 + $0x128] sm:$0xff] %v2659
          %2724 = vst [vmem:[#allocation3 + $0x130] sm:$0xff] %v2660
          %2725 = vst [vmem:[#allocation3 + $0x138] sm:$0xff] %v2661
          %2726 = vst [vmem:[#allocation3 + $0x140] sm:$0xff] %v2662
          %2727 = vst [vmem:[#allocation3 + $0x148] sm:$0xff] %v2663
          %2728 = vst [vmem:[#allocation3 + $0x150] sm:$0xff] %v2664
          %2729 = vst [vmem:[#allocation3 + $0x158] sm:$0xff] %v2665
          %2730 = vst [vmem:[#allocation3 + $0x160] sm:$0xff] %v2666
          %2731 = vst [vmem:[#allocation3 + $0x168] sm:$0xff] %v2667
          %2732 = vst [vmem:[#allocation3 + $0x170] sm:$0xff] %v2668
          %2733 = vst [vmem:[#allocation3 + $0x178] sm:$0xff] %v2669
          %2734 = vst [vmem:[#allocation3 + $0x180] sm:$0xff] %v2670
          %2735 = vst [vmem:[#allocation3 + $0x188] sm:$0xff] %v2671
          %2736 = vst [vmem:[#allocation3 + $0x190] sm:$0xff] %v2672
          %2737 = vst [vmem:[#allocation3 + $0x198] sm:$0xff] %v2673
          %2738 = vst [vmem:[#allocation3 + $0x1a0] sm:$0xff] %v2674
          %2739 = vst [vmem:[#allocation3 + $0x1a8] sm:$0xff] %v2675
          %2740 = vst [vmem:[#allocation3 + $0x1b0] sm:$0xff] %v2676
          %2741 = vst [vmem:[#allocation3 + $0x1b8] sm:$0xff] %v2677
          %2742 = vst [vmem:[#allocation3 + $0x1c0] sm:$0xff] %v2678
          %2743 = vst [vmem:[#allocation3 + $0x1c8] sm:$0xff] %v2679
          %2744 = vst [vmem:[#allocation3 + $0x1d0] sm:$0xff] %v2680
          %2745 = vst [vmem:[#allocation3 + $0x1d8] sm:$0xff] %v2681
          %2746 = vst [vmem:[#allocation3 + $0x1e0] sm:$0xff] %v2682
          %2747 = vst [vmem:[#allocation3 + $0x1e8] sm:$0xff] %v2683
          %2748 = vst [vmem:[#allocation3 + $0x1f0] sm:$0xff] %v2684
          %2749 = vst [vmem:[#allocation3 + $0x1f8] sm:$0xff] %v2685
        $region85: #{aug_attention_forward.1} parent=79 // loop_footer
          %s2134 = sadd.s32 1, %s2130
        $region86: #{aug_attention_forward.1} parent=79 // loop_footer_branch
          %2129 = sbr.rel target = $region82
        $region87: #{aug_attention_forward.1} parent=79 // loop_exit
          _
        %v2750 = vld [vmem:[#allocation2] sm:$0xff]
        %v2751 = vld [vmem:[#allocation2 + $0x8] sm:$0xff]
        %v2752 = vld [vmem:[#allocation2 + $0x10] sm:$0xff]
        %v2753 = vld [vmem:[#allocation2 + $0x18] sm:$0xff]
        %v2754 = vld [vmem:[#allocation2 + $0x20] sm:$0xff]
        %v2755 = vld [vmem:[#allocation2 + $0x28] sm:$0xff]
        %v2756 = vld [vmem:[#allocation2 + $0x30] sm:$0xff]
        %v2757 = vld [vmem:[#allocation2 + $0x38] sm:$0xff]
        %v2758 = vld [vmem:[#allocation2 + $0x40] sm:$0xff]
        %v2759 = vld [vmem:[#allocation2 + $0x48] sm:$0xff]
        %v2760 = vld [vmem:[#allocation2 + $0x50] sm:$0xff]
        %v2761 = vld [vmem:[#allocation2 + $0x58] sm:$0xff]
        %v2762 = vld [vmem:[#allocation2 + $0x60] sm:$0xff]
        %v2763 = vld [vmem:[#allocation2 + $0x68] sm:$0xff]
        %v2764 = vld [vmem:[#allocation2 + $0x70] sm:$0xff]
        %v2765 = vld [vmem:[#allocation2 + $0x78] sm:$0xff]
        %v2766 = vld [vmem:[#allocation2 + $0x80] sm:$0xff]
        %v2767 = vld [vmem:[#allocation2 + $0x88] sm:$0xff]
        %v2768 = vld [vmem:[#allocation2 + $0x90] sm:$0xff]
        %v2769 = vld [vmem:[#allocation2 + $0x98] sm:$0xff]
        %v2770 = vld [vmem:[#allocation2 + $0xa0] sm:$0xff]
        %v2771 = vld [vmem:[#allocation2 + $0xa8] sm:$0xff]
        %v2772 = vld [vmem:[#allocation2 + $0xb0] sm:$0xff]
        %v2773 = vld [vmem:[#allocation2 + $0xb8] sm:$0xff]
        %v2774 = vld [vmem:[#allocation2 + $0xc0] sm:$0xff]
        %v2775 = vld [vmem:[#allocation2 + $0xc8] sm:$0xff]
        %v2776 = vld [vmem:[#allocation2 + $0xd0] sm:$0xff]
        %v2777 = vld [vmem:[#allocation2 + $0xd8] sm:$0xff]
        %v2778 = vld [vmem:[#allocation2 + $0xe0] sm:$0xff]
        %v2779 = vld [vmem:[#allocation2 + $0xe8] sm:$0xff]
        %v2780 = vld [vmem:[#allocation2 + $0xf0] sm:$0xff]
        %v2781 = vld [vmem:[#allocation2 + $0xf8] sm:$0xff]
        %v2782 = vld [vmem:[#allocation2 + $0x100] sm:$0xff]
        %v2783 = vld [vmem:[#allocation2 + $0x108] sm:$0xff]
        %v2784 = vld [vmem:[#allocation2 + $0x110] sm:$0xff]
        %v2785 = vld [vmem:[#allocation2 + $0x118] sm:$0xff]
        %v2786 = vld [vmem:[#allocation2 + $0x120] sm:$0xff]
        %v2787 = vld [vmem:[#allocation2 + $0x128] sm:$0xff]
        %v2788 = vld [vmem:[#allocation2 + $0x130] sm:$0xff]
        %v2789 = vld [vmem:[#allocation2 + $0x138] sm:$0xff]
        %v2790 = vld [vmem:[#allocation2 + $0x140] sm:$0xff]
        %v2791 = vld [vmem:[#allocation2 + $0x148] sm:$0xff]
        %v2792 = vld [vmem:[#allocation2 + $0x150] sm:$0xff]
        %v2793 = vld [vmem:[#allocation2 + $0x158] sm:$0xff]
        %v2794 = vld [vmem:[#allocation2 + $0x160] sm:$0xff]
        %v2795 = vld [vmem:[#allocation2 + $0x168] sm:$0xff]
        %v2796 = vld [vmem:[#allocation2 + $0x170] sm:$0xff]
        %v2797 = vld [vmem:[#allocation2 + $0x178] sm:$0xff]
        %v2798 = vld [vmem:[#allocation2 + $0x180] sm:$0xff]
        %v2799 = vld [vmem:[#allocation2 + $0x188] sm:$0xff]
        %v2800 = vld [vmem:[#allocation2 + $0x190] sm:$0xff]
        %v2801 = vld [vmem:[#allocation2 + $0x198] sm:$0xff]
        %v2802 = vld [vmem:[#allocation2 + $0x1a0] sm:$0xff]
        %v2803 = vld [vmem:[#allocation2 + $0x1a8] sm:$0xff]
        %v2804 = vld [vmem:[#allocation2 + $0x1b0] sm:$0xff]
        %v2805 = vld [vmem:[#allocation2 + $0x1b8] sm:$0xff]
        %v2806 = vld [vmem:[#allocation2 + $0x1c0] sm:$0xff]
        %v2807 = vld [vmem:[#allocation2 + $0x1c8] sm:$0xff]
        %v2808 = vld [vmem:[#allocation2 + $0x1d0] sm:$0xff]
        %v2809 = vld [vmem:[#allocation2 + $0x1d8] sm:$0xff]
        %v2810 = vld [vmem:[#allocation2 + $0x1e0] sm:$0xff]
        %v2811 = vld [vmem:[#allocation2 + $0x1e8] sm:$0xff]
        %v2812 = vld [vmem:[#allocation2 + $0x1f0] sm:$0xff]
        %v2813 = vld [vmem:[#allocation2 + $0x1f8] sm:$0xff]
        %v2814 = vmax.f32 %v2750, %v2751
        %2815 = vmax.xlane.f32.xlu0 %v2814
        %v2816 = vpop.xlane.xlu0 %2815
        %v2817 = vmax.f32 %v2752, %v2753
        %2818 = vmax.xlane.f32.xlu0 %v2817
        %v2819 = vpop.xlane.xlu0 %2818
        %v2820 = vmax.f32 %v2754, %v2755
        %2821 = vmax.xlane.f32.xlu0 %v2820
        %v2822 = vpop.xlane.xlu0 %2821
        %v2823 = vmax.f32 %v2756, %v2757
        %2824 = vmax.xlane.f32.xlu0 %v2823
        %v2825 = vpop.xlane.xlu0 %2824
        %v2826 = vmax.f32 %v2758, %v2759
        %2827 = vmax.xlane.f32.xlu0 %v2826
        %v2828 = vpop.xlane.xlu0 %2827
        %v2829 = vmax.f32 %v2760, %v2761
        %2830 = vmax.xlane.f32.xlu0 %v2829
        %v2831 = vpop.xlane.xlu0 %2830
        %v2832 = vmax.f32 %v2762, %v2763
        %2833 = vmax.xlane.f32.xlu0 %v2832
        %v2834 = vpop.xlane.xlu0 %2833
        %v2835 = vmax.f32 %v2764, %v2765
        %2836 = vmax.xlane.f32.xlu0 %v2835
        %v2837 = vpop.xlane.xlu0 %2836
        %v2838 = vmax.f32 %v2766, %v2767
        %2839 = vmax.xlane.f32.xlu0 %v2838
        %v2840 = vpop.xlane.xlu0 %2839
        %v2841 = vmax.f32 %v2768, %v2769
        %2842 = vmax.xlane.f32.xlu0 %v2841
        %v2843 = vpop.xlane.xlu0 %2842
        %v2844 = vmax.f32 %v2770, %v2771
        %2845 = vmax.xlane.f32.xlu0 %v2844
        %v2846 = vpop.xlane.xlu0 %2845
        %v2847 = vmax.f32 %v2772, %v2773
        %2848 = vmax.xlane.f32.xlu0 %v2847
        %v2849 = vpop.xlane.xlu0 %2848
        %v2850 = vmax.f32 %v2774, %v2775
        %2851 = vmax.xlane.f32.xlu0 %v2850
        %v2852 = vpop.xlane.xlu0 %2851
        %v2853 = vmax.f32 %v2776, %v2777
        %2854 = vmax.xlane.f32.xlu0 %v2853
        %v2855 = vpop.xlane.xlu0 %2854
        %v2856 = vmax.f32 %v2778, %v2779
        %2857 = vmax.xlane.f32.xlu0 %v2856
        %v2858 = vpop.xlane.xlu0 %2857
        %v2859 = vmax.f32 %v2780, %v2781
        %2860 = vmax.xlane.f32.xlu0 %v2859
        %v2861 = vpop.xlane.xlu0 %2860
        %v2862 = vmax.f32 %v2782, %v2783
        %2863 = vmax.xlane.f32.xlu0 %v2862
        %v2864 = vpop.xlane.xlu0 %2863
        %v2865 = vmax.f32 %v2784, %v2785
        %2866 = vmax.xlane.f32.xlu0 %v2865
        %v2867 = vpop.xlane.xlu0 %2866
        %v2868 = vmax.f32 %v2786, %v2787
        %2869 = vmax.xlane.f32.xlu0 %v2868
        %v2870 = vpop.xlane.xlu0 %2869
        %v2871 = vmax.f32 %v2788, %v2789
        %2872 = vmax.xlane.f32.xlu0 %v2871
        %v2873 = vpop.xlane.xlu0 %2872
        %v2874 = vmax.f32 %v2790, %v2791
        %2875 = vmax.xlane.f32.xlu0 %v2874
        %v2876 = vpop.xlane.xlu0 %2875
        %v2877 = vmax.f32 %v2792, %v2793
        %2878 = vmax.xlane.f32.xlu0 %v2877
        %v2879 = vpop.xlane.xlu0 %2878
        %v2880 = vmax.f32 %v2794, %v2795
        %2881 = vmax.xlane.f32.xlu0 %v2880
        %v2882 = vpop.xlane.xlu0 %2881
        %v2883 = vmax.f32 %v2796, %v2797
        %2884 = vmax.xlane.f32.xlu0 %v2883
        %v2885 = vpop.xlane.xlu0 %2884
        %v2886 = vmax.f32 %v2798, %v2799
        %2887 = vmax.xlane.f32.xlu0 %v2886
        %v2888 = vpop.xlane.xlu0 %2887
        %v2889 = vmax.f32 %v2800, %v2801
        %2890 = vmax.xlane.f32.xlu0 %v2889
        %v2891 = vpop.xlane.xlu0 %2890
        %v2892 = vmax.f32 %v2802, %v2803
        %2893 = vmax.xlane.f32.xlu0 %v2892
        %v2894 = vpop.xlane.xlu0 %2893
        %v2895 = vmax.f32 %v2804, %v2805
        %2896 = vmax.xlane.f32.xlu0 %v2895
        %v2897 = vpop.xlane.xlu0 %2896
        %v2898 = vmax.f32 %v2806, %v2807
        %2899 = vmax.xlane.f32.xlu0 %v2898
        %v2900 = vpop.xlane.xlu0 %2899
        %v2901 = vmax.f32 %v2808, %v2809
        %2902 = vmax.xlane.f32.xlu0 %v2901
        %v2903 = vpop.xlane.xlu0 %2902
        %v2904 = vmax.f32 %v2810, %v2811
        %2905 = vmax.xlane.f32.xlu0 %v2904
        %v2906 = vpop.xlane.xlu0 %2905
        %v2907 = vmax.f32 %v2812, %v2813
        %2908 = vmax.xlane.f32.xlu0 %v2907
        %v2909 = vpop.xlane.xlu0 %2908
        %v2910 = vsub.f32 %v2750, %v2816
        %v2911 = vsub.f32 %v2751, %v2816
        %v2912 = vsub.f32 %v2752, %v2819
        %v2913 = vsub.f32 %v2753, %v2819
        %v2914 = vsub.f32 %v2754, %v2822
        %v2915 = vsub.f32 %v2755, %v2822
        %v2916 = vsub.f32 %v2756, %v2825
        %v2917 = vsub.f32 %v2757, %v2825
        %v2918 = vsub.f32 %v2758, %v2828
        %v2919 = vsub.f32 %v2759, %v2828
        %v2920 = vsub.f32 %v2760, %v2831
        %v2921 = vsub.f32 %v2761, %v2831
        %v2922 = vsub.f32 %v2762, %v2834
        %v2923 = vsub.f32 %v2763, %v2834
        %v2924 = vsub.f32 %v2764, %v2837
        %v2925 = vsub.f32 %v2765, %v2837
        %v2926 = vsub.f32 %v2766, %v2840
        %v2927 = vsub.f32 %v2767, %v2840
        %v2928 = vsub.f32 %v2768, %v2843
        %v2929 = vsub.f32 %v2769, %v2843
        %v2930 = vsub.f32 %v2770, %v2846
        %v2931 = vsub.f32 %v2771, %v2846
        %v2932 = vsub.f32 %v2772, %v2849
        %v2933 = vsub.f32 %v2773, %v2849
        %v2934 = vsub.f32 %v2774, %v2852
        %v2935 = vsub.f32 %v2775, %v2852
        %v2936 = vsub.f32 %v2776, %v2855
        %v2937 = vsub.f32 %v2777, %v2855
        %v2938 = vsub.f32 %v2778, %v2858
        %v2939 = vsub.f32 %v2779, %v2858
        %v2940 = vsub.f32 %v2780, %v2861
        %v2941 = vsub.f32 %v2781, %v2861
        %v2942 = vsub.f32 %v2782, %v2864
        %v2943 = vsub.f32 %v2783, %v2864
        %v2944 = vsub.f32 %v2784, %v2867
        %v2945 = vsub.f32 %v2785, %v2867
        %v2946 = vsub.f32 %v2786, %v2870
        %v2947 = vsub.f32 %v2787, %v2870
        %v2948 = vsub.f32 %v2788, %v2873
        %v2949 = vsub.f32 %v2789, %v2873
        %v2950 = vsub.f32 %v2790, %v2876
        %v2951 = vsub.f32 %v2791, %v2876
        %v2952 = vsub.f32 %v2792, %v2879
        %v2953 = vsub.f32 %v2793, %v2879
        %v2954 = vsub.f32 %v2794, %v2882
        %v2955 = vsub.f32 %v2795, %v2882
        %v2956 = vsub.f32 %v2796, %v2885
        %v2957 = vsub.f32 %v2797, %v2885
        %v2958 = vsub.f32 %v2798, %v2888
        %v2959 = vsub.f32 %v2799, %v2888
        %v2960 = vsub.f32 %v2800, %v2891
        %v2961 = vsub.f32 %v2801, %v2891
        %v2962 = vsub.f32 %v2802, %v2894
        %v2963 = vsub.f32 %v2803, %v2894
        %v2964 = vsub.f32 %v2804, %v2897
        %v2965 = vsub.f32 %v2805, %v2897
        %v2966 = vsub.f32 %v2806, %v2900
        %v2967 = vsub.f32 %v2807, %v2900
        %v2968 = vsub.f32 %v2808, %v2903
        %v2969 = vsub.f32 %v2809, %v2903
        %v2970 = vsub.f32 %v2810, %v2906
        %v2971 = vsub.f32 %v2811, %v2906
        %v2972 = vsub.f32 %v2812, %v2909
        %v2973 = vsub.f32 %v2813, %v2909
        %v2974 = vmul.f32 %v2910, 1.442695
        %v2975 = vpow.pop %v2974
        %v2976 = vmul.f32 %v2911, 1.442695
        %v2977 = vpow.pop %v2976
        %v2978 = vmul.f32 %v2912, 1.442695
        %v2979 = vpow.pop %v2978
        %v2980 = vmul.f32 %v2913, 1.442695
        %v2981 = vpow.pop %v2980
        %v2982 = vmul.f32 %v2914, 1.442695
        %v2983 = vpow.pop %v2982
        %v2984 = vmul.f32 %v2915, 1.442695
        %v2985 = vpow.pop %v2984
        %v2986 = vmul.f32 %v2916, 1.442695
        %v2987 = vpow.pop %v2986
        %v2988 = vmul.f32 %v2917, 1.442695
        %v2989 = vpow.pop %v2988
        %v2990 = vmul.f32 %v2918, 1.442695
        %v2991 = vpow.pop %v2990
        %v2992 = vmul.f32 %v2919, 1.442695
        %v2993 = vpow.pop %v2992
        %v2994 = vmul.f32 %v2920, 1.442695
        %v2995 = vpow.pop %v2994
        %v2996 = vmul.f32 %v2921, 1.442695
        %v2997 = vpow.pop %v2996
        %v2998 = vmul.f32 %v2922, 1.442695
        %v2999 = vpow.pop %v2998
        %v3000 = vmul.f32 %v2923, 1.442695
        %v3001 = vpow.pop %v3000
        %v3002 = vmul.f32 %v2924, 1.442695
        %v3003 = vpow.pop %v3002
        %v3004 = vmul.f32 %v2925, 1.442695
        %v3005 = vpow.pop %v3004
        %v3006 = vmul.f32 %v2926, 1.442695
        %v3007 = vpow.pop %v3006
        %v3008 = vmul.f32 %v2927, 1.442695
        %v3009 = vpow.pop %v3008
        %v3010 = vmul.f32 %v2928, 1.442695
        %v3011 = vpow.pop %v3010
        %v3012 = vmul.f32 %v2929, 1.442695
        %v3013 = vpow.pop %v3012
        %v3014 = vmul.f32 %v2930, 1.442695
        %v3015 = vpow.pop %v3014
        %v3016 = vmul.f32 %v2931, 1.442695
        %v3017 = vpow.pop %v3016
        %v3018 = vmul.f32 %v2932, 1.442695
        %v3019 = vpow.pop %v3018
        %v3020 = vmul.f32 %v2933, 1.442695
        %v3021 = vpow.pop %v3020
        %v3022 = vmul.f32 %v2934, 1.442695
        %v3023 = vpow.pop %v3022
        %v3024 = vmul.f32 %v2935, 1.442695
        %v3025 = vpow.pop %v3024
        %v3026 = vmul.f32 %v2936, 1.442695
        %v3027 = vpow.pop %v3026
        %v3028 = vmul.f32 %v2937, 1.442695
        %v3029 = vpow.pop %v3028
        %v3030 = vmul.f32 %v2938, 1.442695
        %v3031 = vpow.pop %v3030
        %v3032 = vmul.f32 %v2939, 1.442695
        %v3033 = vpow.pop %v3032
        %v3034 = vmul.f32 %v2940, 1.442695
        %v3035 = vpow.pop %v3034
        %v3036 = vmul.f32 %v2941, 1.442695
        %v3037 = vpow.pop %v3036
        %v3038 = vmul.f32 %v2942, 1.442695
        %v3039 = vpow.pop %v3038
        %v3040 = vmul.f32 %v2943, 1.442695
        %v3041 = vpow.pop %v3040
        %v3042 = vmul.f32 %v2944, 1.442695
        %v3043 = vpow.pop %v3042
        %v3044 = vmul.f32 %v2945, 1.442695
        %v3045 = vpow.pop %v3044
        %v3046 = vmul.f32 %v2946, 1.442695
        %v3047 = vpow.pop %v3046
        %v3048 = vmul.f32 %v2947, 1.442695
        %v3049 = vpow.pop %v3048
        %v3050 = vmul.f32 %v2948, 1.442695
        %v3051 = vpow.pop %v3050
        %v3052 = vmul.f32 %v2949, 1.442695
        %v3053 = vpow.pop %v3052
        %v3054 = vmul.f32 %v2950, 1.442695
        %v3055 = vpow.pop %v3054
        %v3056 = vmul.f32 %v2951, 1.442695
        %v3057 = vpow.pop %v3056
        %v3058 = vmul.f32 %v2952, 1.442695
        %v3059 = vpow.pop %v3058
        %v3060 = vmul.f32 %v2953, 1.442695
        %v3061 = vpow.pop %v3060
        %v3062 = vmul.f32 %v2954, 1.442695
        %v3063 = vpow.pop %v3062
        %v3064 = vmul.f32 %v2955, 1.442695
        %v3065 = vpow.pop %v3064
        %v3066 = vmul.f32 %v2956, 1.442695
        %v3067 = vpow.pop %v3066
        %v3068 = vmul.f32 %v2957, 1.442695
        %v3069 = vpow.pop %v3068
        %v3070 = vmul.f32 %v2958, 1.442695
        %v3071 = vpow.pop %v3070
        %v3072 = vmul.f32 %v2959, 1.442695
        %v3073 = vpow.pop %v3072
        %v3074 = vmul.f32 %v2960, 1.442695
        %v3075 = vpow.pop %v3074
        %v3076 = vmul.f32 %v2961, 1.442695
        %v3077 = vpow.pop %v3076
        %v3078 = vmul.f32 %v2962, 1.442695
        %v3079 = vpow.pop %v3078
        %v3080 = vmul.f32 %v2963, 1.442695
        %v3081 = vpow.pop %v3080
        %v3082 = vmul.f32 %v2964, 1.442695
        %v3083 = vpow.pop %v3082
        %v3084 = vmul.f32 %v2965, 1.442695
        %v3085 = vpow.pop %v3084
        %v3086 = vmul.f32 %v2966, 1.442695
        %v3087 = vpow.pop %v3086
        %v3088 = vmul.f32 %v2967, 1.442695
        %v3089 = vpow.pop %v3088
        %v3090 = vmul.f32 %v2968, 1.442695
        %v3091 = vpow.pop %v3090
        %v3092 = vmul.f32 %v2969, 1.442695
        %v3093 = vpow.pop %v3092
        %v3094 = vmul.f32 %v2970, 1.442695
        %v3095 = vpow.pop %v3094
        %v3096 = vmul.f32 %v2971, 1.442695
        %v3097 = vpow.pop %v3096
        %v3098 = vmul.f32 %v2972, 1.442695
        %v3099 = vpow.pop %v3098
        %v3100 = vmul.f32 %v2973, 1.442695
        %v3101 = vpow.pop %v3100
        %v3102 = vadd.f32 %v2975, %v2977
        %3103 = vadd.xlane.f32.xlu0 %v3102
        %v3104 = vpop.xlane.xlu0 %3103
        %v3105 = vadd.f32 %v2979, %v2981
        %3106 = vadd.xlane.f32.xlu0 %v3105
        %v3107 = vpop.xlane.xlu0 %3106
        %v3108 = vadd.f32 %v2983, %v2985
        %3109 = vadd.xlane.f32.xlu0 %v3108
        %v3110 = vpop.xlane.xlu0 %3109
        %v3111 = vadd.f32 %v2987, %v2989
        %3112 = vadd.xlane.f32.xlu0 %v3111
        %v3113 = vpop.xlane.xlu0 %3112
        %v3114 = vadd.f32 %v2991, %v2993
        %3115 = vadd.xlane.f32.xlu0 %v3114
        %v3116 = vpop.xlane.xlu0 %3115
        %v3117 = vadd.f32 %v2995, %v2997
        %3118 = vadd.xlane.f32.xlu0 %v3117
        %v3119 = vpop.xlane.xlu0 %3118
        %v3120 = vadd.f32 %v2999, %v3001
        %3121 = vadd.xlane.f32.xlu0 %v3120
        %v3122 = vpop.xlane.xlu0 %3121
        %v3123 = vadd.f32 %v3003, %v3005
        %3124 = vadd.xlane.f32.xlu0 %v3123
        %v3125 = vpop.xlane.xlu0 %3124
        %v3126 = vadd.f32 %v3007, %v3009
        %3127 = vadd.xlane.f32.xlu0 %v3126
        %v3128 = vpop.xlane.xlu0 %3127
        %v3129 = vadd.f32 %v3011, %v3013
        %3130 = vadd.xlane.f32.xlu0 %v3129
        %v3131 = vpop.xlane.xlu0 %3130
        %v3132 = vadd.f32 %v3015, %v3017
        %3133 = vadd.xlane.f32.xlu0 %v3132
        %v3134 = vpop.xlane.xlu0 %3133
        %v3135 = vadd.f32 %v3019, %v3021
        %3136 = vadd.xlane.f32.xlu0 %v3135
        %v3137 = vpop.xlane.xlu0 %3136
        %v3138 = vadd.f32 %v3023, %v3025
        %3139 = vadd.xlane.f32.xlu0 %v3138
        %v3140 = vpop.xlane.xlu0 %3139
        %v3141 = vadd.f32 %v3027, %v3029
        %3142 = vadd.xlane.f32.xlu0 %v3141
        %v3143 = vpop.xlane.xlu0 %3142
        %v3144 = vadd.f32 %v3031, %v3033
        %3145 = vadd.xlane.f32.xlu0 %v3144
        %v3146 = vpop.xlane.xlu0 %3145
        %v3147 = vadd.f32 %v3035, %v3037
        %3148 = vadd.xlane.f32.xlu0 %v3147
        %v3149 = vpop.xlane.xlu0 %3148
        %v3150 = vadd.f32 %v3039, %v3041
        %3151 = vadd.xlane.f32.xlu0 %v3150
        %v3152 = vpop.xlane.xlu0 %3151
        %v3153 = vadd.f32 %v3043, %v3045
        %3154 = vadd.xlane.f32.xlu0 %v3153
        %v3155 = vpop.xlane.xlu0 %3154
        %v3156 = vadd.f32 %v3047, %v3049
        %3157 = vadd.xlane.f32.xlu0 %v3156
        %v3158 = vpop.xlane.xlu0 %3157
        %v3159 = vadd.f32 %v3051, %v3053
        %3160 = vadd.xlane.f32.xlu0 %v3159
        %v3161 = vpop.xlane.xlu0 %3160
        %v3162 = vadd.f32 %v3055, %v3057
        %3163 = vadd.xlane.f32.xlu0 %v3162
        %v3164 = vpop.xlane.xlu0 %3163
        %v3165 = vadd.f32 %v3059, %v3061
        %3166 = vadd.xlane.f32.xlu0 %v3165
        %v3167 = vpop.xlane.xlu0 %3166
        %v3168 = vadd.f32 %v3063, %v3065
        %3169 = vadd.xlane.f32.xlu0 %v3168
        %v3170 = vpop.xlane.xlu0 %3169
        %v3171 = vadd.f32 %v3067, %v3069
        %3172 = vadd.xlane.f32.xlu0 %v3171
        %v3173 = vpop.xlane.xlu0 %3172
        %v3174 = vadd.f32 %v3071, %v3073
        %3175 = vadd.xlane.f32.xlu0 %v3174
        %v3176 = vpop.xlane.xlu0 %3175
        %v3177 = vadd.f32 %v3075, %v3077
        %3178 = vadd.xlane.f32.xlu0 %v3177
        %v3179 = vpop.xlane.xlu0 %3178
        %v3180 = vadd.f32 %v3079, %v3081
        %3181 = vadd.xlane.f32.xlu0 %v3180
        %v3182 = vpop.xlane.xlu0 %3181
        %v3183 = vadd.f32 %v3083, %v3085
        %3184 = vadd.xlane.f32.xlu0 %v3183
        %v3185 = vpop.xlane.xlu0 %3184
        %v3186 = vadd.f32 %v3087, %v3089
        %3187 = vadd.xlane.f32.xlu0 %v3186
        %v3188 = vpop.xlane.xlu0 %3187
        %v3189 = vadd.f32 %v3091, %v3093
        %3190 = vadd.xlane.f32.xlu0 %v3189
        %v3191 = vpop.xlane.xlu0 %3190
        %v3192 = vadd.f32 %v3095, %v3097
        %3193 = vadd.xlane.f32.xlu0 %v3192
        %v3194 = vpop.xlane.xlu0 %3193
        %v3195 = vadd.f32 %v3099, %v3101
        %3196 = vadd.xlane.f32.xlu0 %v3195
        %v3197 = vpop.xlane.xlu0 %3196
        %v3198 = vrcp.pop %v3104
        %v3199 = vmul.f32 %v2975, %v3198
        %v3200 = vmul.f32 %v2977, %v3198
        %v3201 = vrcp.pop %v3107
        %v3202 = vmul.f32 %v2979, %v3201
        %v3203 = vmul.f32 %v2981, %v3201
        %v3204 = vrcp.pop %v3110
        %v3205 = vmul.f32 %v2983, %v3204
        %v3206 = vmul.f32 %v2985, %v3204
        %v3207 = vrcp.pop %v3113
        %v3208 = vmul.f32 %v2987, %v3207
        %v3209 = vmul.f32 %v2989, %v3207
        %v3210 = vrcp.pop %v3116
        %v3211 = vmul.f32 %v2991, %v3210
        %v3212 = vmul.f32 %v2993, %v3210
        %v3213 = vrcp.pop %v3119
        %v3214 = vmul.f32 %v2995, %v3213
        %v3215 = vmul.f32 %v2997, %v3213
        %v3216 = vrcp.pop %v3122
        %v3217 = vmul.f32 %v2999, %v3216
        %v3218 = vmul.f32 %v3001, %v3216
        %v3219 = vrcp.pop %v3125
        %v3220 = vmul.f32 %v3003, %v3219
        %v3221 = vmul.f32 %v3005, %v3219
        %v3222 = vrcp.pop %v3128
        %v3223 = vmul.f32 %v3007, %v3222
        %v3224 = vmul.f32 %v3009, %v3222
        %v3225 = vrcp.pop %v3131
        %v3226 = vmul.f32 %v3011, %v3225
        %v3227 = vmul.f32 %v3013, %v3225
        %v3228 = vrcp.pop %v3134
        %v3229 = vmul.f32 %v3015, %v3228
        %v3230 = vmul.f32 %v3017, %v3228
        %v3231 = vrcp.pop %v3137
        %v3232 = vmul.f32 %v3019, %v3231
        %v3233 = vmul.f32 %v3021, %v3231
        %v3234 = vrcp.pop %v3140
        %v3235 = vmul.f32 %v3023, %v3234
        %v3236 = vmul.f32 %v3025, %v3234
        %v3237 = vrcp.pop %v3143
        %v3238 = vmul.f32 %v3027, %v3237
        %v3239 = vmul.f32 %v3029, %v3237
        %v3240 = vrcp.pop %v3146
        %v3241 = vmul.f32 %v3031, %v3240
        %v3242 = vmul.f32 %v3033, %v3240
        %v3243 = vrcp.pop %v3149
        %v3244 = vmul.f32 %v3035, %v3243
        %v3245 = vmul.f32 %v3037, %v3243
        %v3246 = vrcp.pop %v3152
        %v3247 = vmul.f32 %v3039, %v3246
        %v3248 = vmul.f32 %v3041, %v3246
        %v3249 = vrcp.pop %v3155
        %v3250 = vmul.f32 %v3043, %v3249
        %v3251 = vmul.f32 %v3045, %v3249
        %v3252 = vrcp.pop %v3158
        %v3253 = vmul.f32 %v3047, %v3252
        %v3254 = vmul.f32 %v3049, %v3252
        %v3255 = vrcp.pop %v3161
        %v3256 = vmul.f32 %v3051, %v3255
        %v3257 = vmul.f32 %v3053, %v3255
        %v3258 = vrcp.pop %v3164
        %v3259 = vmul.f32 %v3055, %v3258
        %v3260 = vmul.f32 %v3057, %v3258
        %v3261 = vrcp.pop %v3167
        %v3262 = vmul.f32 %v3059, %v3261
        %v3263 = vmul.f32 %v3061, %v3261
        %v3264 = vrcp.pop %v3170
        %v3265 = vmul.f32 %v3063, %v3264
        %v3266 = vmul.f32 %v3065, %v3264
        %v3267 = vrcp.pop %v3173
        %v3268 = vmul.f32 %v3067, %v3267
        %v3269 = vmul.f32 %v3069, %v3267
        %v3270 = vrcp.pop %v3176
        %v3271 = vmul.f32 %v3071, %v3270
        %v3272 = vmul.f32 %v3073, %v3270
        %v3273 = vrcp.pop %v3179
        %v3274 = vmul.f32 %v3075, %v3273
        %v3275 = vmul.f32 %v3077, %v3273
        %v3276 = vrcp.pop %v3182
        %v3277 = vmul.f32 %v3079, %v3276
        %v3278 = vmul.f32 %v3081, %v3276
        %v3279 = vrcp.pop %v3185
        %v3280 = vmul.f32 %v3083, %v3279
        %v3281 = vmul.f32 %v3085, %v3279
        %v3282 = vrcp.pop %v3188
        %v3283 = vmul.f32 %v3087, %v3282
        %v3284 = vmul.f32 %v3089, %v3282
        %v3285 = vrcp.pop %v3191
        %v3286 = vmul.f32 %v3091, %v3285
        %v3287 = vmul.f32 %v3093, %v3285
        %v3288 = vrcp.pop %v3194
        %v3289 = vmul.f32 %v3095, %v3288
        %v3290 = vmul.f32 %v3097, %v3288
        %v3291 = vrcp.pop %v3197
        %v3292 = vmul.f32 %v3099, %v3291
        %v3293 = vmul.f32 %v3101, %v3291
        %vm3294 = vcmp.ge.f32.partialorder %v2750, 0.0
        %vm3295 = vcmp.ge.f32.partialorder %v2751, 0.0
        %vm3296 = vcmp.ge.f32.partialorder %v2752, 0.0
        %vm3297 = vcmp.ge.f32.partialorder %v2753, 0.0
        %vm3298 = vcmp.ge.f32.partialorder %v2754, 0.0
        %vm3299 = vcmp.ge.f32.partialorder %v2755, 0.0
        %vm3300 = vcmp.ge.f32.partialorder %v2756, 0.0
        %vm3301 = vcmp.ge.f32.partialorder %v2757, 0.0
        %vm3302 = vcmp.ge.f32.partialorder %v2758, 0.0
        %vm3303 = vcmp.ge.f32.partialorder %v2759, 0.0
        %vm3304 = vcmp.ge.f32.partialorder %v2760, 0.0
        %vm3305 = vcmp.ge.f32.partialorder %v2761, 0.0
        %vm3306 = vcmp.ge.f32.partialorder %v2762, 0.0
        %vm3307 = vcmp.ge.f32.partialorder %v2763, 0.0
        %vm3308 = vcmp.ge.f32.partialorder %v2764, 0.0
        %vm3309 = vcmp.ge.f32.partialorder %v2765, 0.0
        %vm3310 = vcmp.ge.f32.partialorder %v2766, 0.0
        %vm3311 = vcmp.ge.f32.partialorder %v2767, 0.0
        %vm3312 = vcmp.ge.f32.partialorder %v2768, 0.0
        %vm3313 = vcmp.ge.f32.partialorder %v2769, 0.0
        %vm3314 = vcmp.ge.f32.partialorder %v2770, 0.0
        %vm3315 = vcmp.ge.f32.partialorder %v2771, 0.0
        %vm3316 = vcmp.ge.f32.partialorder %v2772, 0.0
        %vm3317 = vcmp.ge.f32.partialorder %v2773, 0.0
        %vm3318 = vcmp.ge.f32.partialorder %v2774, 0.0
        %vm3319 = vcmp.ge.f32.partialorder %v2775, 0.0
        %vm3320 = vcmp.ge.f32.partialorder %v2776, 0.0
        %vm3321 = vcmp.ge.f32.partialorder %v2777, 0.0
        %vm3322 = vcmp.ge.f32.partialorder %v2778, 0.0
        %vm3323 = vcmp.ge.f32.partialorder %v2779, 0.0
        %vm3324 = vcmp.ge.f32.partialorder %v2780, 0.0
        %vm3325 = vcmp.ge.f32.partialorder %v2781, 0.0
        %vm3326 = vcmp.ge.f32.partialorder %v2782, 0.0
        %vm3327 = vcmp.ge.f32.partialorder %v2783, 0.0
        %vm3328 = vcmp.ge.f32.partialorder %v2784, 0.0
        %vm3329 = vcmp.ge.f32.partialorder %v2785, 0.0
        %vm3330 = vcmp.ge.f32.partialorder %v2786, 0.0
        %vm3331 = vcmp.ge.f32.partialorder %v2787, 0.0
        %vm3332 = vcmp.ge.f32.partialorder %v2788, 0.0
        %vm3333 = vcmp.ge.f32.partialorder %v2789, 0.0
        %vm3334 = vcmp.ge.f32.partialorder %v2790, 0.0
        %vm3335 = vcmp.ge.f32.partialorder %v2791, 0.0
        %vm3336 = vcmp.ge.f32.partialorder %v2792, 0.0
        %vm3337 = vcmp.ge.f32.partialorder %v2793, 0.0
        %vm3338 = vcmp.ge.f32.partialorder %v2794, 0.0
        %vm3339 = vcmp.ge.f32.partialorder %v2795, 0.0
        %vm3340 = vcmp.ge.f32.partialorder %v2796, 0.0
        %vm3341 = vcmp.ge.f32.partialorder %v2797, 0.0
        %vm3342 = vcmp.ge.f32.partialorder %v2798, 0.0
        %vm3343 = vcmp.ge.f32.partialorder %v2799, 0.0
        %vm3344 = vcmp.ge.f32.partialorder %v2800, 0.0
        %vm3345 = vcmp.ge.f32.partialorder %v2801, 0.0
        %vm3346 = vcmp.ge.f32.partialorder %v2802, 0.0
        %vm3347 = vcmp.ge.f32.partialorder %v2803, 0.0
        %vm3348 = vcmp.ge.f32.partialorder %v2804, 0.0
        %vm3349 = vcmp.ge.f32.partialorder %v2805, 0.0
        %vm3350 = vcmp.ge.f32.partialorder %v2806, 0.0
        %vm3351 = vcmp.ge.f32.partialorder %v2807, 0.0
        %vm3352 = vcmp.ge.f32.partialorder %v2808, 0.0
        %vm3353 = vcmp.ge.f32.partialorder %v2809, 0.0
        %vm3354 = vcmp.ge.f32.partialorder %v2810, 0.0
        %vm3355 = vcmp.ge.f32.partialorder %v2811, 0.0
        %vm3356 = vcmp.ge.f32.partialorder %v2812, 0.0
        %vm3357 = vcmp.ge.f32.partialorder %v2813, 0.0
        %v3358 = vsel %vm3294, 1, 0
        %v3359 = vsel %vm3295, 1, 0
        %v3360 = vsel %vm3296, 1, 0
        %v3361 = vsel %vm3297, 1, 0
        %v3362 = vsel %vm3298, 1, 0
        %v3363 = vsel %vm3299, 1, 0
        %v3364 = vsel %vm3300, 1, 0
        %v3365 = vsel %vm3301, 1, 0
        %v3366 = vsel %vm3302, 1, 0
        %v3367 = vsel %vm3303, 1, 0
        %v3368 = vsel %vm3304, 1, 0
        %v3369 = vsel %vm3305, 1, 0
        %v3370 = vsel %vm3306, 1, 0
        %v3371 = vsel %vm3307, 1, 0
        %v3372 = vsel %vm3308, 1, 0
        %v3373 = vsel %vm3309, 1, 0
        %v3374 = vsel %vm3310, 1, 0
        %v3375 = vsel %vm3311, 1, 0
        %v3376 = vsel %vm3312, 1, 0
        %v3377 = vsel %vm3313, 1, 0
        %v3378 = vsel %vm3314, 1, 0
        %v3379 = vsel %vm3315, 1, 0
        %v3380 = vsel %vm3316, 1, 0
        %v3381 = vsel %vm3317, 1, 0
        %v3382 = vsel %vm3318, 1, 0
        %v3383 = vsel %vm3319, 1, 0
        %v3384 = vsel %vm3320, 1, 0
        %v3385 = vsel %vm3321, 1, 0
        %v3386 = vsel %vm3322, 1, 0
        %v3387 = vsel %vm3323, 1, 0
        %v3388 = vsel %vm3324, 1, 0
        %v3389 = vsel %vm3325, 1, 0
        %v3390 = vsel %vm3326, 1, 0
        %v3391 = vsel %vm3327, 1, 0
        %v3392 = vsel %vm3328, 1, 0
        %v3393 = vsel %vm3329, 1, 0
        %v3394 = vsel %vm3330, 1, 0
        %v3395 = vsel %vm3331, 1, 0
        %v3396 = vsel %vm3332, 1, 0
        %v3397 = vsel %vm3333, 1, 0
        %v3398 = vsel %vm3334, 1, 0
        %v3399 = vsel %vm3335, 1, 0
        %v3400 = vsel %vm3336, 1, 0
        %v3401 = vsel %vm3337, 1, 0
        %v3402 = vsel %vm3338, 1, 0
        %v3403 = vsel %vm3339, 1, 0
        %v3404 = vsel %vm3340, 1, 0
        %v3405 = vsel %vm3341, 1, 0
        %v3406 = vsel %vm3342, 1, 0
        %v3407 = vsel %vm3343, 1, 0
        %v3408 = vsel %vm3344, 1, 0
        %v3409 = vsel %vm3345, 1, 0
        %v3410 = vsel %vm3346, 1, 0
        %v3411 = vsel %vm3347, 1, 0
        %v3412 = vsel %vm3348, 1, 0
        %v3413 = vsel %vm3349, 1, 0
        %v3414 = vsel %vm3350, 1, 0
        %v3415 = vsel %vm3351, 1, 0
        %v3416 = vsel %vm3352, 1, 0
        %v3417 = vsel %vm3353, 1, 0
        %v3418 = vsel %vm3354, 1, 0
        %v3419 = vsel %vm3355, 1, 0
        %v3420 = vsel %vm3356, 1, 0
        %v3421 = vsel %vm3357, 1, 0
        %v3422 = vcvt.s32.f32 %v3358
        %v3423 = vcvt.s32.f32 %v3359
        %v3424 = vcvt.s32.f32 %v3360
        %v3425 = vcvt.s32.f32 %v3361
        %v3426 = vcvt.s32.f32 %v3362
        %v3427 = vcvt.s32.f32 %v3363
        %v3428 = vcvt.s32.f32 %v3364
        %v3429 = vcvt.s32.f32 %v3365
        %v3430 = vcvt.s32.f32 %v3366
        %v3431 = vcvt.s32.f32 %v3367
        %v3432 = vcvt.s32.f32 %v3368
        %v3433 = vcvt.s32.f32 %v3369
        %v3434 = vcvt.s32.f32 %v3370
        %v3435 = vcvt.s32.f32 %v3371
        %v3436 = vcvt.s32.f32 %v3372
        %v3437 = vcvt.s32.f32 %v3373
        %v3438 = vcvt.s32.f32 %v3374
        %v3439 = vcvt.s32.f32 %v3375
        %v3440 = vcvt.s32.f32 %v3376
        %v3441 = vcvt.s32.f32 %v3377
        %v3442 = vcvt.s32.f32 %v3378
        %v3443 = vcvt.s32.f32 %v3379
        %v3444 = vcvt.s32.f32 %v3380
        %v3445 = vcvt.s32.f32 %v3381
        %v3446 = vcvt.s32.f32 %v3382
        %v3447 = vcvt.s32.f32 %v3383
        %v3448 = vcvt.s32.f32 %v3384
        %v3449 = vcvt.s32.f32 %v3385
        %v3450 = vcvt.s32.f32 %v3386
        %v3451 = vcvt.s32.f32 %v3387
        %v3452 = vcvt.s32.f32 %v3388
        %v3453 = vcvt.s32.f32 %v3389
        %v3454 = vcvt.s32.f32 %v3390
        %v3455 = vcvt.s32.f32 %v3391
        %v3456 = vcvt.s32.f32 %v3392
        %v3457 = vcvt.s32.f32 %v3393
        %v3458 = vcvt.s32.f32 %v3394
        %v3459 = vcvt.s32.f32 %v3395
        %v3460 = vcvt.s32.f32 %v3396
        %v3461 = vcvt.s32.f32 %v3397
        %v3462 = vcvt.s32.f32 %v3398
        %v3463 = vcvt.s32.f32 %v3399
        %v3464 = vcvt.s32.f32 %v3400
        %v3465 = vcvt.s32.f32 %v3401
        %v3466 = vcvt.s32.f32 %v3402
        %v3467 = vcvt.s32.f32 %v3403
        %v3468 = vcvt.s32.f32 %v3404
        %v3469 = vcvt.s32.f32 %v3405
        %v3470 = vcvt.s32.f32 %v3406
        %v3471 = vcvt.s32.f32 %v3407
        %v3472 = vcvt.s32.f32 %v3408
        %v3473 = vcvt.s32.f32 %v3409
        %v3474 = vcvt.s32.f32 %v3410
        %v3475 = vcvt.s32.f32 %v3411
        %v3476 = vcvt.s32.f32 %v3412
        %v3477 = vcvt.s32.f32 %v3413
        %v3478 = vcvt.s32.f32 %v3414
        %v3479 = vcvt.s32.f32 %v3415
        %v3480 = vcvt.s32.f32 %v3416
        %v3481 = vcvt.s32.f32 %v3417
        %v3482 = vcvt.s32.f32 %v3418
        %v3483 = vcvt.s32.f32 %v3419
        %v3484 = vcvt.s32.f32 %v3420
        %v3485 = vcvt.s32.f32 %v3421
        %v3486 = vadd.f32 %v3422, %v3423
        %3487 = vadd.xlane.f32.xlu0 %v3486
        %v3488 = vpop.xlane.xlu0 %3487
        %v3489 = vadd.f32 %v3424, %v3425
        %3490 = vadd.xlane.f32.xlu0 %v3489
        %v3491 = vpop.xlane.xlu0 %3490
        %v3492 = vadd.f32 %v3426, %v3427
        %3493 = vadd.xlane.f32.xlu0 %v3492
        %v3494 = vpop.xlane.xlu0 %3493
        %v3495 = vadd.f32 %v3428, %v3429
        %3496 = vadd.xlane.f32.xlu0 %v3495
        %v3497 = vpop.xlane.xlu0 %3496
        %v3498 = vadd.f32 %v3430, %v3431
        %3499 = vadd.xlane.f32.xlu0 %v3498
        %v3500 = vpop.xlane.xlu0 %3499
        %v3501 = vadd.f32 %v3432, %v3433
        %3502 = vadd.xlane.f32.xlu0 %v3501
        %v3503 = vpop.xlane.xlu0 %3502
        %v3504 = vadd.f32 %v3434, %v3435
        %3505 = vadd.xlane.f32.xlu0 %v3504
        %v3506 = vpop.xlane.xlu0 %3505
        %v3507 = vadd.f32 %v3436, %v3437
        %3508 = vadd.xlane.f32.xlu0 %v3507
        %v3509 = vpop.xlane.xlu0 %3508
        %v3510 = vadd.f32 %v3438, %v3439
        %3511 = vadd.xlane.f32.xlu0 %v3510
        %v3512 = vpop.xlane.xlu0 %3511
        %v3513 = vadd.f32 %v3440, %v3441
        %3514 = vadd.xlane.f32.xlu0 %v3513
        %v3515 = vpop.xlane.xlu0 %3514
        %v3516 = vadd.f32 %v3442, %v3443
        %3517 = vadd.xlane.f32.xlu0 %v3516
        %v3518 = vpop.xlane.xlu0 %3517
        %v3519 = vadd.f32 %v3444, %v3445
        %3520 = vadd.xlane.f32.xlu0 %v3519
        %v3521 = vpop.xlane.xlu0 %3520
        %v3522 = vadd.f32 %v3446, %v3447
        %3523 = vadd.xlane.f32.xlu0 %v3522
        %v3524 = vpop.xlane.xlu0 %3523
        %v3525 = vadd.f32 %v3448, %v3449
        %3526 = vadd.xlane.f32.xlu0 %v3525
        %v3527 = vpop.xlane.xlu0 %3526
        %v3528 = vadd.f32 %v3450, %v3451
        %3529 = vadd.xlane.f32.xlu0 %v3528
        %v3530 = vpop.xlane.xlu0 %3529
        %v3531 = vadd.f32 %v3452, %v3453
        %3532 = vadd.xlane.f32.xlu0 %v3531
        %v3533 = vpop.xlane.xlu0 %3532
        %v3534 = vadd.f32 %v3454, %v3455
        %3535 = vadd.xlane.f32.xlu0 %v3534
        %v3536 = vpop.xlane.xlu0 %3535
        %v3537 = vadd.f32 %v3456, %v3457
        %3538 = vadd.xlane.f32.xlu0 %v3537
        %v3539 = vpop.xlane.xlu0 %3538
        %v3540 = vadd.f32 %v3458, %v3459
        %3541 = vadd.xlane.f32.xlu0 %v3540
        %v3542 = vpop.xlane.xlu0 %3541
        %v3543 = vadd.f32 %v3460, %v3461
        %3544 = vadd.xlane.f32.xlu0 %v3543
        %v3545 = vpop.xlane.xlu0 %3544
        %v3546 = vadd.f32 %v3462, %v3463
        %3547 = vadd.xlane.f32.xlu0 %v3546
        %v3548 = vpop.xlane.xlu0 %3547
        %v3549 = vadd.f32 %v3464, %v3465
        %3550 = vadd.xlane.f32.xlu0 %v3549
        %v3551 = vpop.xlane.xlu0 %3550
        %v3552 = vadd.f32 %v3466, %v3467
        %3553 = vadd.xlane.f32.xlu0 %v3552
        %v3554 = vpop.xlane.xlu0 %3553
        %v3555 = vadd.f32 %v3468, %v3469
        %3556 = vadd.xlane.f32.xlu0 %v3555
        %v3557 = vpop.xlane.xlu0 %3556
        %v3558 = vadd.f32 %v3470, %v3471
        %3559 = vadd.xlane.f32.xlu0 %v3558
        %v3560 = vpop.xlane.xlu0 %3559
        %v3561 = vadd.f32 %v3472, %v3473
        %3562 = vadd.xlane.f32.xlu0 %v3561
        %v3563 = vpop.xlane.xlu0 %3562
        %v3564 = vadd.f32 %v3474, %v3475
        %3565 = vadd.xlane.f32.xlu0 %v3564
        %v3566 = vpop.xlane.xlu0 %3565
        %v3567 = vadd.f32 %v3476, %v3477
        %3568 = vadd.xlane.f32.xlu0 %v3567
        %v3569 = vpop.xlane.xlu0 %3568
        %v3570 = vadd.f32 %v3478, %v3479
        %3571 = vadd.xlane.f32.xlu0 %v3570
        %v3572 = vpop.xlane.xlu0 %3571
        %v3573 = vadd.f32 %v3480, %v3481
        %3574 = vadd.xlane.f32.xlu0 %v3573
        %v3575 = vpop.xlane.xlu0 %3574
        %v3576 = vadd.f32 %v3482, %v3483
        %3577 = vadd.xlane.f32.xlu0 %v3576
        %v3578 = vpop.xlane.xlu0 %3577
        %v3579 = vadd.f32 %v3484, %v3485
        %3580 = vadd.xlane.f32.xlu0 %v3579
        %v3581 = vpop.xlane.xlu0 %3580
        %v3582 = vld [vmem:[#allocation3] sm:$0xff]
        %v3583 = vld [vmem:[#allocation3 + $0x8] sm:$0xff]
        %v3584 = vld [vmem:[#allocation3 + $0x10] sm:$0xff]
        %v3585 = vld [vmem:[#allocation3 + $0x18] sm:$0xff]
        %v3586 = vld [vmem:[#allocation3 + $0x20] sm:$0xff]
        %v3587 = vld [vmem:[#allocation3 + $0x28] sm:$0xff]
        %v3588 = vld [vmem:[#allocation3 + $0x30] sm:$0xff]
        %v3589 = vld [vmem:[#allocation3 + $0x38] sm:$0xff]
        %v3590 = vld [vmem:[#allocation3 + $0x40] sm:$0xff]
        %v3591 = vld [vmem:[#allocation3 + $0x48] sm:$0xff]
        %v3592 = vld [vmem:[#allocation3 + $0x50] sm:$0xff]
        %v3593 = vld [vmem:[#allocation3 + $0x58] sm:$0xff]
        %v3594 = vld [vmem:[#allocation3 + $0x60] sm:$0xff]
        %v3595 = vld [vmem:[#allocation3 + $0x68] sm:$0xff]
        %v3596 = vld [vmem:[#allocation3 + $0x70] sm:$0xff]
        %v3597 = vld [vmem:[#allocation3 + $0x78] sm:$0xff]
        %v3598 = vld [vmem:[#allocation3 + $0x80] sm:$0xff]
        %v3599 = vld [vmem:[#allocation3 + $0x88] sm:$0xff]
        %v3600 = vld [vmem:[#allocation3 + $0x90] sm:$0xff]
        %v3601 = vld [vmem:[#allocation3 + $0x98] sm:$0xff]
        %v3602 = vld [vmem:[#allocation3 + $0xa0] sm:$0xff]
        %v3603 = vld [vmem:[#allocation3 + $0xa8] sm:$0xff]
        %v3604 = vld [vmem:[#allocation3 + $0xb0] sm:$0xff]
        %v3605 = vld [vmem:[#allocation3 + $0xb8] sm:$0xff]
        %v3606 = vld [vmem:[#allocation3 + $0xc0] sm:$0xff]
        %v3607 = vld [vmem:[#allocation3 + $0xc8] sm:$0xff]
        %v3608 = vld [vmem:[#allocation3 + $0xd0] sm:$0xff]
        %v3609 = vld [vmem:[#allocation3 + $0xd8] sm:$0xff]
        %v3610 = vld [vmem:[#allocation3 + $0xe0] sm:$0xff]
        %v3611 = vld [vmem:[#allocation3 + $0xe8] sm:$0xff]
        %v3612 = vld [vmem:[#allocation3 + $0xf0] sm:$0xff]
        %v3613 = vld [vmem:[#allocation3 + $0xf8] sm:$0xff]
        %v3614 = vld [vmem:[#allocation3 + $0x100] sm:$0xff]
        %v3615 = vld [vmem:[#allocation3 + $0x108] sm:$0xff]
        %v3616 = vld [vmem:[#allocation3 + $0x110] sm:$0xff]
        %v3617 = vld [vmem:[#allocation3 + $0x118] sm:$0xff]
        %v3618 = vld [vmem:[#allocation3 + $0x120] sm:$0xff]
        %v3619 = vld [vmem:[#allocation3 + $0x128] sm:$0xff]
        %v3620 = vld [vmem:[#allocation3 + $0x130] sm:$0xff]
        %v3621 = vld [vmem:[#allocation3 + $0x138] sm:$0xff]
        %v3622 = vld [vmem:[#allocation3 + $0x140] sm:$0xff]
        %v3623 = vld [vmem:[#allocation3 + $0x148] sm:$0xff]
        %v3624 = vld [vmem:[#allocation3 + $0x150] sm:$0xff]
        %v3625 = vld [vmem:[#allocation3 + $0x158] sm:$0xff]
        %v3626 = vld [vmem:[#allocation3 + $0x160] sm:$0xff]
        %v3627 = vld [vmem:[#allocation3 + $0x168] sm:$0xff]
        %v3628 = vld [vmem:[#allocation3 + $0x170] sm:$0xff]
        %v3629 = vld [vmem:[#allocation3 + $0x178] sm:$0xff]
        %v3630 = vld [vmem:[#allocation3 + $0x180] sm:$0xff]
        %v3631 = vld [vmem:[#allocation3 + $0x188] sm:$0xff]
        %v3632 = vld [vmem:[#allocation3 + $0x190] sm:$0xff]
        %v3633 = vld [vmem:[#allocation3 + $0x198] sm:$0xff]
        %v3634 = vld [vmem:[#allocation3 + $0x1a0] sm:$0xff]
        %v3635 = vld [vmem:[#allocation3 + $0x1a8] sm:$0xff]
        %v3636 = vld [vmem:[#allocation3 + $0x1b0] sm:$0xff]
        %v3637 = vld [vmem:[#allocation3 + $0x1b8] sm:$0xff]
        %v3638 = vld [vmem:[#allocation3 + $0x1c0] sm:$0xff]
        %v3639 = vld [vmem:[#allocation3 + $0x1c8] sm:$0xff]
        %v3640 = vld [vmem:[#allocation3 + $0x1d0] sm:$0xff]
        %v3641 = vld [vmem:[#allocation3 + $0x1d8] sm:$0xff]
        %v3642 = vld [vmem:[#allocation3 + $0x1e0] sm:$0xff]
        %v3643 = vld [vmem:[#allocation3 + $0x1e8] sm:$0xff]
        %v3644 = vld [vmem:[#allocation3 + $0x1f0] sm:$0xff]
        %v3645 = vld [vmem:[#allocation3 + $0x1f8] sm:$0xff]
        %v3646 = vsub.f32 %v3488, 1.0
        %v3647 = vsub.f32 %v3491, 1.0
        %v3648 = vsub.f32 %v3494, 1.0
        %v3649 = vsub.f32 %v3497, 1.0
        %v3650 = vsub.f32 %v3500, 1.0
        %v3651 = vsub.f32 %v3503, 1.0
        %v3652 = vsub.f32 %v3506, 1.0
        %v3653 = vsub.f32 %v3509, 1.0
        %v3654 = vsub.f32 %v3512, 1.0
        %v3655 = vsub.f32 %v3515, 1.0
        %v3656 = vsub.f32 %v3518, 1.0
        %v3657 = vsub.f32 %v3521, 1.0
        %v3658 = vsub.f32 %v3524, 1.0
        %v3659 = vsub.f32 %v3527, 1.0
        %v3660 = vsub.f32 %v3530, 1.0
        %v3661 = vsub.f32 %v3533, 1.0
        %v3662 = vsub.f32 %v3536, 1.0
        %v3663 = vsub.f32 %v3539, 1.0
        %v3664 = vsub.f32 %v3542, 1.0
        %v3665 = vsub.f32 %v3545, 1.0
        %v3666 = vsub.f32 %v3548, 1.0
        %v3667 = vsub.f32 %v3551, 1.0
        %v3668 = vsub.f32 %v3554, 1.0
        %v3669 = vsub.f32 %v3557, 1.0
        %v3670 = vsub.f32 %v3560, 1.0
        %v3671 = vsub.f32 %v3563, 1.0
        %v3672 = vsub.f32 %v3566, 1.0
        %v3673 = vsub.f32 %v3569, 1.0
        %v3674 = vsub.f32 %v3572, 1.0
        %v3675 = vsub.f32 %v3575, 1.0
        %v3676 = vsub.f32 %v3578, 1.0
        %v3677 = vsub.f32 %v3581, 1.0
        %vm3678 = vcmp.gt.f32.partialorder %v3582, %v3646
        %vm3679 = vcmp.gt.f32.partialorder %v3583, %v3646
        %vm3680 = vcmp.gt.f32.partialorder %v3584, %v3647
        %vm3681 = vcmp.gt.f32.partialorder %v3585, %v3647
        %vm3682 = vcmp.gt.f32.partialorder %v3586, %v3648
        %vm3683 = vcmp.gt.f32.partialorder %v3587, %v3648
        %vm3684 = vcmp.gt.f32.partialorder %v3588, %v3649
        %vm3685 = vcmp.gt.f32.partialorder %v3589, %v3649
        %vm3686 = vcmp.gt.f32.partialorder %v3590, %v3650
        %vm3687 = vcmp.gt.f32.partialorder %v3591, %v3650
        %vm3688 = vcmp.gt.f32.partialorder %v3592, %v3651
        %vm3689 = vcmp.gt.f32.partialorder %v3593, %v3651
        %vm3690 = vcmp.gt.f32.partialorder %v3594, %v3652
        %vm3691 = vcmp.gt.f32.partialorder %v3595, %v3652
        %vm3692 = vcmp.gt.f32.partialorder %v3596, %v3653
        %vm3693 = vcmp.gt.f32.partialorder %v3597, %v3653
        %vm3694 = vcmp.gt.f32.partialorder %v3598, %v3654
        %vm3695 = vcmp.gt.f32.partialorder %v3599, %v3654
        %vm3696 = vcmp.gt.f32.partialorder %v3600, %v3655
        %vm3697 = vcmp.gt.f32.partialorder %v3601, %v3655
        %vm3698 = vcmp.gt.f32.partialorder %v3602, %v3656
        %vm3699 = vcmp.gt.f32.partialorder %v3603, %v3656
        %vm3700 = vcmp.gt.f32.partialorder %v3604, %v3657
        %vm3701 = vcmp.gt.f32.partialorder %v3605, %v3657
        %vm3702 = vcmp.gt.f32.partialorder %v3606, %v3658
        %vm3703 = vcmp.gt.f32.partialorder %v3607, %v3658
        %vm3704 = vcmp.gt.f32.partialorder %v3608, %v3659
        %vm3705 = vcmp.gt.f32.partialorder %v3609, %v3659
        %vm3706 = vcmp.gt.f32.partialorder %v3610, %v3660
        %vm3707 = vcmp.gt.f32.partialorder %v3611, %v3660
        %vm3708 = vcmp.gt.f32.partialorder %v3612, %v3661
        %vm3709 = vcmp.gt.f32.partialorder %v3613, %v3661
        %vm3710 = vcmp.gt.f32.partialorder %v3614, %v3662
        %vm3711 = vcmp.gt.f32.partialorder %v3615, %v3662
        %vm3712 = vcmp.gt.f32.partialorder %v3616, %v3663
        %vm3713 = vcmp.gt.f32.partialorder %v3617, %v3663
        %vm3714 = vcmp.gt.f32.partialorder %v3618, %v3664
        %vm3715 = vcmp.gt.f32.partialorder %v3619, %v3664
        %vm3716 = vcmp.gt.f32.partialorder %v3620, %v3665
        %vm3717 = vcmp.gt.f32.partialorder %v3621, %v3665
        %vm3718 = vcmp.gt.f32.partialorder %v3622, %v3666
        %vm3719 = vcmp.gt.f32.partialorder %v3623, %v3666
        %vm3720 = vcmp.gt.f32.partialorder %v3624, %v3667
        %vm3721 = vcmp.gt.f32.partialorder %v3625, %v3667
        %vm3722 = vcmp.gt.f32.partialorder %v3626, %v3668
        %vm3723 = vcmp.gt.f32.partialorder %v3627, %v3668
        %vm3724 = vcmp.gt.f32.partialorder %v3628, %v3669
        %vm3725 = vcmp.gt.f32.partialorder %v3629, %v3669
        %vm3726 = vcmp.gt.f32.partialorder %v3630, %v3670
        %vm3727 = vcmp.gt.f32.partialorder %v3631, %v3670
        %vm3728 = vcmp.gt.f32.partialorder %v3632, %v3671
        %vm3729 = vcmp.gt.f32.partialorder %v3633, %v3671
        %vm3730 = vcmp.gt.f32.partialorder %v3634, %v3672
        %vm3731 = vcmp.gt.f32.partialorder %v3635, %v3672
        %vm3732 = vcmp.gt.f32.partialorder %v3636, %v3673
        %vm3733 = vcmp.gt.f32.partialorder %v3637, %v3673
        %vm3734 = vcmp.gt.f32.partialorder %v3638, %v3674
        %vm3735 = vcmp.gt.f32.partialorder %v3639, %v3674
        %vm3736 = vcmp.gt.f32.partialorder %v3640, %v3675
        %vm3737 = vcmp.gt.f32.partialorder %v3641, %v3675
        %vm3738 = vcmp.gt.f32.partialorder %v3642, %v3676
        %vm3739 = vcmp.gt.f32.partialorder %v3643, %v3676
        %vm3740 = vcmp.gt.f32.partialorder %v3644, %v3677
        %vm3741 = vcmp.gt.f32.partialorder %v3645, %v3677
        %v3742 = vsel %vm3678, 0.0, %v3582
        %v3743 = vsel %vm3679, 0.0, %v3583
        %v3744 = vsel %vm3680, 0.0, %v3584
        %v3745 = vsel %vm3681, 0.0, %v3585
        %v3746 = vsel %vm3682, 0.0, %v3586
        %v3747 = vsel %vm3683, 0.0, %v3587
        %v3748 = vsel %vm3684, 0.0, %v3588
        %v3749 = vsel %vm3685, 0.0, %v3589
        %v3750 = vsel %vm3686, 0.0, %v3590
        %v3751 = vsel %vm3687, 0.0, %v3591
        %v3752 = vsel %vm3688, 0.0, %v3592
        %v3753 = vsel %vm3689, 0.0, %v3593
        %v3754 = vsel %vm3690, 0.0, %v3594
        %v3755 = vsel %vm3691, 0.0, %v3595
        %v3756 = vsel %vm3692, 0.0, %v3596
        %v3757 = vsel %vm3693, 0.0, %v3597
        %v3758 = vsel %vm3694, 0.0, %v3598
        %v3759 = vsel %vm3695, 0.0, %v3599
        %v3760 = vsel %vm3696, 0.0, %v3600
        %v3761 = vsel %vm3697, 0.0, %v3601
        %v3762 = vsel %vm3698, 0.0, %v3602
        %v3763 = vsel %vm3699, 0.0, %v3603
        %v3764 = vsel %vm3700, 0.0, %v3604
        %v3765 = vsel %vm3701, 0.0, %v3605
        %v3766 = vsel %vm3702, 0.0, %v3606
        %v3767 = vsel %vm3703, 0.0, %v3607
        %v3768 = vsel %vm3704, 0.0, %v3608
        %v3769 = vsel %vm3705, 0.0, %v3609
        %v3770 = vsel %vm3706, 0.0, %v3610
        %v3771 = vsel %vm3707, 0.0, %v3611
        %v3772 = vsel %vm3708, 0.0, %v3612
        %v3773 = vsel %vm3709, 0.0, %v3613
        %v3774 = vsel %vm3710, 0.0, %v3614
        %v3775 = vsel %vm3711, 0.0, %v3615
        %v3776 = vsel %vm3712, 0.0, %v3616
        %v3777 = vsel %vm3713, 0.0, %v3617
        %v3778 = vsel %vm3714, 0.0, %v3618
        %v3779 = vsel %vm3715, 0.0, %v3619
        %v3780 = vsel %vm3716, 0.0, %v3620
        %v3781 = vsel %vm3717, 0.0, %v3621
        %v3782 = vsel %vm3718, 0.0, %v3622
        %v3783 = vsel %vm3719, 0.0, %v3623
        %v3784 = vsel %vm3720, 0.0, %v3624
        %v3785 = vsel %vm3721, 0.0, %v3625
        %v3786 = vsel %vm3722, 0.0, %v3626
        %v3787 = vsel %vm3723, 0.0, %v3627
        %v3788 = vsel %vm3724, 0.0, %v3628
        %v3789 = vsel %vm3725, 0.0, %v3629
        %v3790 = vsel %vm3726, 0.0, %v3630
        %v3791 = vsel %vm3727, 0.0, %v3631
        %v3792 = vsel %vm3728, 0.0, %v3632
        %v3793 = vsel %vm3729, 0.0, %v3633
        %v3794 = vsel %vm3730, 0.0, %v3634
        %v3795 = vsel %vm3731, 0.0, %v3635
        %v3796 = vsel %vm3732, 0.0, %v3636
        %v3797 = vsel %vm3733, 0.0, %v3637
        %v3798 = vsel %vm3734, 0.0, %v3638
        %v3799 = vsel %vm3735, 0.0, %v3639
        %v3800 = vsel %vm3736, 0.0, %v3640
        %v3801 = vsel %vm3737, 0.0, %v3641
        %v3802 = vsel %vm3738, 0.0, %v3642
        %v3803 = vsel %vm3739, 0.0, %v3643
        %v3804 = vsel %vm3740, 0.0, %v3644
        %v3805 = vsel %vm3741, 0.0, %v3645
        %v3806 = vadd.f32 %v3742, 1.0
        %v3807 = vadd.f32 %v3743, 1.0
        %v3808 = vadd.f32 %v3744, 1.0
        %v3809 = vadd.f32 %v3745, 1.0
        %v3810 = vadd.f32 %v3746, 1.0
        %v3811 = vadd.f32 %v3747, 1.0
        %v3812 = vadd.f32 %v3748, 1.0
        %v3813 = vadd.f32 %v3749, 1.0
        %v3814 = vadd.f32 %v3750, 1.0
        %v3815 = vadd.f32 %v3751, 1.0
        %v3816 = vadd.f32 %v3752, 1.0
        %v3817 = vadd.f32 %v3753, 1.0
        %v3818 = vadd.f32 %v3754, 1.0
        %v3819 = vadd.f32 %v3755, 1.0
        %v3820 = vadd.f32 %v3756, 1.0
        %v3821 = vadd.f32 %v3757, 1.0
        %v3822 = vadd.f32 %v3758, 1.0
        %v3823 = vadd.f32 %v3759, 1.0
        %v3824 = vadd.f32 %v3760, 1.0
        %v3825 = vadd.f32 %v3761, 1.0
        %v3826 = vadd.f32 %v3762, 1.0
        %v3827 = vadd.f32 %v3763, 1.0
        %v3828 = vadd.f32 %v3764, 1.0
        %v3829 = vadd.f32 %v3765, 1.0
        %v3830 = vadd.f32 %v3766, 1.0
        %v3831 = vadd.f32 %v3767, 1.0
        %v3832 = vadd.f32 %v3768, 1.0
        %v3833 = vadd.f32 %v3769, 1.0
        %v3834 = vadd.f32 %v3770, 1.0
        %v3835 = vadd.f32 %v3771, 1.0
        %v3836 = vadd.f32 %v3772, 1.0
        %v3837 = vadd.f32 %v3773, 1.0
        %v3838 = vadd.f32 %v3774, 1.0
        %v3839 = vadd.f32 %v3775, 1.0
        %v3840 = vadd.f32 %v3776, 1.0
        %v3841 = vadd.f32 %v3777, 1.0
        %v3842 = vadd.f32 %v3778, 1.0
        %v3843 = vadd.f32 %v3779, 1.0
        %v3844 = vadd.f32 %v3780, 1.0
        %v3845 = vadd.f32 %v3781, 1.0
        %v3846 = vadd.f32 %v3782, 1.0
        %v3847 = vadd.f32 %v3783, 1.0
        %v3848 = vadd.f32 %v3784, 1.0
        %v3849 = vadd.f32 %v3785, 1.0
        %v3850 = vadd.f32 %v3786, 1.0
        %v3851 = vadd.f32 %v3787, 1.0
        %v3852 = vadd.f32 %v3788, 1.0
        %v3853 = vadd.f32 %v3789, 1.0
        %v3854 = vadd.f32 %v3790, 1.0
        %v3855 = vadd.f32 %v3791, 1.0
        %v3856 = vadd.f32 %v3792, 1.0
        %v3857 = vadd.f32 %v3793, 1.0
        %v3858 = vadd.f32 %v3794, 1.0
        %v3859 = vadd.f32 %v3795, 1.0
        %v3860 = vadd.f32 %v3796, 1.0
        %v3861 = vadd.f32 %v3797, 1.0
        %v3862 = vadd.f32 %v3798, 1.0
        %v3863 = vadd.f32 %v3799, 1.0
        %v3864 = vadd.f32 %v3800, 1.0
        %v3865 = vadd.f32 %v3801, 1.0
        %v3866 = vadd.f32 %v3802, 1.0
        %v3867 = vadd.f32 %v3803, 1.0
        %v3868 = vadd.f32 %v3804, 1.0
        %v3869 = vadd.f32 %v3805, 1.0
        %v3870 = vmul.f32 %v3806, %v3806
        %v3871 = vmul.f32 %v3807, %v3807
        %v3872 = vmul.f32 %v3808, %v3808
        %v3873 = vmul.f32 %v3809, %v3809
        %v3874 = vmul.f32 %v3810, %v3810
        %v3875 = vmul.f32 %v3811, %v3811
        %v3876 = vmul.f32 %v3812, %v3812
        %v3877 = vmul.f32 %v3813, %v3813
        %v3878 = vmul.f32 %v3814, %v3814
        %v3879 = vmul.f32 %v3815, %v3815
        %v3880 = vmul.f32 %v3816, %v3816
        %v3881 = vmul.f32 %v3817, %v3817
        %v3882 = vmul.f32 %v3818, %v3818
        %v3883 = vmul.f32 %v3819, %v3819
        %v3884 = vmul.f32 %v3820, %v3820
        %v3885 = vmul.f32 %v3821, %v3821
        %v3886 = vmul.f32 %v3822, %v3822
        %v3887 = vmul.f32 %v3823, %v3823
        %v3888 = vmul.f32 %v3824, %v3824
        %v3889 = vmul.f32 %v3825, %v3825
        %v3890 = vmul.f32 %v3826, %v3826
        %v3891 = vmul.f32 %v3827, %v3827
        %v3892 = vmul.f32 %v3828, %v3828
        %v3893 = vmul.f32 %v3829, %v3829
        %v3894 = vmul.f32 %v3830, %v3830
        %v3895 = vmul.f32 %v3831, %v3831
        %v3896 = vmul.f32 %v3832, %v3832
        %v3897 = vmul.f32 %v3833, %v3833
        %v3898 = vmul.f32 %v3834, %v3834
        %v3899 = vmul.f32 %v3835, %v3835
        %v3900 = vmul.f32 %v3836, %v3836
        %v3901 = vmul.f32 %v3837, %v3837
        %v3902 = vmul.f32 %v3838, %v3838
        %v3903 = vmul.f32 %v3839, %v3839
        %v3904 = vmul.f32 %v3840, %v3840
        %v3905 = vmul.f32 %v3841, %v3841
        %v3906 = vmul.f32 %v3842, %v3842
        %v3907 = vmul.f32 %v3843, %v3843
        %v3908 = vmul.f32 %v3844, %v3844
        %v3909 = vmul.f32 %v3845, %v3845
        %v3910 = vmul.f32 %v3846, %v3846
        %v3911 = vmul.f32 %v3847, %v3847
        %v3912 = vmul.f32 %v3848, %v3848
        %v3913 = vmul.f32 %v3849, %v3849
        %v3914 = vmul.f32 %v3850, %v3850
        %v3915 = vmul.f32 %v3851, %v3851
        %v3916 = vmul.f32 %v3852, %v3852
        %v3917 = vmul.f32 %v3853, %v3853
        %v3918 = vmul.f32 %v3854, %v3854
        %v3919 = vmul.f32 %v3855, %v3855
        %v3920 = vmul.f32 %v3856, %v3856
        %v3921 = vmul.f32 %v3857, %v3857
        %v3922 = vmul.f32 %v3858, %v3858
        %v3923 = vmul.f32 %v3859, %v3859
        %v3924 = vmul.f32 %v3860, %v3860
        %v3925 = vmul.f32 %v3861, %v3861
        %v3926 = vmul.f32 %v3862, %v3862
        %v3927 = vmul.f32 %v3863, %v3863
        %v3928 = vmul.f32 %v3864, %v3864
        %v3929 = vmul.f32 %v3865, %v3865
        %v3930 = vmul.f32 %v3866, %v3866
        %v3931 = vmul.f32 %v3867, %v3867
        %v3932 = vmul.f32 %v3868, %v3868
        %v3933 = vmul.f32 %v3869, %v3869
        %v3934 = vmul.f32 %v3806, %v3870
        %v3935 = vmul.f32 %v3807, %v3871
        %v3936 = vmul.f32 %v3808, %v3872
        %v3937 = vmul.f32 %v3809, %v3873
        %v3938 = vmul.f32 %v3810, %v3874
        %v3939 = vmul.f32 %v3811, %v3875
        %v3940 = vmul.f32 %v3812, %v3876
        %v3941 = vmul.f32 %v3813, %v3877
        %v3942 = vmul.f32 %v3814, %v3878
        %v3943 = vmul.f32 %v3815, %v3879
        %v3944 = vmul.f32 %v3816, %v3880
        %v3945 = vmul.f32 %v3817, %v3881
        %v3946 = vmul.f32 %v3818, %v3882
        %v3947 = vmul.f32 %v3819, %v3883
        %v3948 = vmul.f32 %v3820, %v3884
        %v3949 = vmul.f32 %v3821, %v3885
        %v3950 = vmul.f32 %v3822, %v3886
        %v3951 = vmul.f32 %v3823, %v3887
        %v3952 = vmul.f32 %v3824, %v3888
        %v3953 = vmul.f32 %v3825, %v3889
        %v3954 = vmul.f32 %v3826, %v3890
        %v3955 = vmul.f32 %v3827, %v3891
        %v3956 = vmul.f32 %v3828, %v3892
        %v3957 = vmul.f32 %v3829, %v3893
        %v3958 = vmul.f32 %v3830, %v3894
        %v3959 = vmul.f32 %v3831, %v3895
        %v3960 = vmul.f32 %v3832, %v3896
        %v3961 = vmul.f32 %v3833, %v3897
        %v3962 = vmul.f32 %v3834, %v3898
        %v3963 = vmul.f32 %v3835, %v3899
        %v3964 = vmul.f32 %v3836, %v3900
        %v3965 = vmul.f32 %v3837, %v3901
        %v3966 = vmul.f32 %v3838, %v3902
        %v3967 = vmul.f32 %v3839, %v3903
        %v3968 = vmul.f32 %v3840, %v3904
        %v3969 = vmul.f32 %v3841, %v3905
        %v3970 = vmul.f32 %v3842, %v3906
        %v3971 = vmul.f32 %v3843, %v3907
        %v3972 = vmul.f32 %v3844, %v3908
        %v3973 = vmul.f32 %v3845, %v3909
        %v3974 = vmul.f32 %v3846, %v3910
        %v3975 = vmul.f32 %v3847, %v3911
        %v3976 = vmul.f32 %v3848, %v3912
        %v3977 = vmul.f32 %v3849, %v3913
        %v3978 = vmul.f32 %v3850, %v3914
        %v3979 = vmul.f32 %v3851, %v3915
        %v3980 = vmul.f32 %v3852, %v3916
        %v3981 = vmul.f32 %v3853, %v3917
        %v3982 = vmul.f32 %v3854, %v3918
        %v3983 = vmul.f32 %v3855, %v3919
        %v3984 = vmul.f32 %v3856, %v3920
        %v3985 = vmul.f32 %v3857, %v3921
        %v3986 = vmul.f32 %v3858, %v3922
        %v3987 = vmul.f32 %v3859, %v3923
        %v3988 = vmul.f32 %v3860, %v3924
        %v3989 = vmul.f32 %v3861, %v3925
        %v3990 = vmul.f32 %v3862, %v3926
        %v3991 = vmul.f32 %v3863, %v3927
        %v3992 = vmul.f32 %v3864, %v3928
        %v3993 = vmul.f32 %v3865, %v3929
        %v3994 = vmul.f32 %v3866, %v3930
        %v3995 = vmul.f32 %v3867, %v3931
        %v3996 = vmul.f32 %v3868, %v3932
        %v3997 = vmul.f32 %v3869, %v3933
        %v3998 = vmul.f32 %v3934, %v3422
        %v3999 = vmul.f32 %v3935, %v3423
        %v4000 = vmul.f32 %v3936, %v3424
        %v4001 = vmul.f32 %v3937, %v3425
        %v4002 = vmul.f32 %v3938, %v3426
        %v4003 = vmul.f32 %v3939, %v3427
        %v4004 = vmul.f32 %v3940, %v3428
        %v4005 = vmul.f32 %v3941, %v3429
        %v4006 = vmul.f32 %v3942, %v3430
        %v4007 = vmul.f32 %v3943, %v3431
        %v4008 = vmul.f32 %v3944, %v3432
        %v4009 = vmul.f32 %v3945, %v3433
        %v4010 = vmul.f32 %v3946, %v3434
        %v4011 = vmul.f32 %v3947, %v3435
        %v4012 = vmul.f32 %v3948, %v3436
        %v4013 = vmul.f32 %v3949, %v3437
        %v4014 = vmul.f32 %v3950, %v3438
        %v4015 = vmul.f32 %v3951, %v3439
        %v4016 = vmul.f32 %v3952, %v3440
        %v4017 = vmul.f32 %v3953, %v3441
        %v4018 = vmul.f32 %v3954, %v3442
        %v4019 = vmul.f32 %v3955, %v3443
        %v4020 = vmul.f32 %v3956, %v3444
        %v4021 = vmul.f32 %v3957, %v3445
        %v4022 = vmul.f32 %v3958, %v3446
        %v4023 = vmul.f32 %v3959, %v3447
        %v4024 = vmul.f32 %v3960, %v3448
        %v4025 = vmul.f32 %v3961, %v3449
        %v4026 = vmul.f32 %v3962, %v3450
        %v4027 = vmul.f32 %v3963, %v3451
        %v4028 = vmul.f32 %v3964, %v3452
        %v4029 = vmul.f32 %v3965, %v3453
        %v4030 = vmul.f32 %v3966, %v3454
        %v4031 = vmul.f32 %v3967, %v3455
        %v4032 = vmul.f32 %v3968, %v3456
        %v4033 = vmul.f32 %v3969, %v3457
        %v4034 = vmul.f32 %v3970, %v3458
        %v4035 = vmul.f32 %v3971, %v3459
        %v4036 = vmul.f32 %v3972, %v3460
        %v4037 = vmul.f32 %v3973, %v3461
        %v4038 = vmul.f32 %v3974, %v3462
        %v4039 = vmul.f32 %v3975, %v3463
        %v4040 = vmul.f32 %v3976, %v3464
        %v4041 = vmul.f32 %v3977, %v3465
        %v4042 = vmul.f32 %v3978, %v3466
        %v4043 = vmul.f32 %v3979, %v3467
        %v4044 = vmul.f32 %v3980, %v3468
        %v4045 = vmul.f32 %v3981, %v3469
        %v4046 = vmul.f32 %v3982, %v3470
        %v4047 = vmul.f32 %v3983, %v3471
        %v4048 = vmul.f32 %v3984, %v3472
        %v4049 = vmul.f32 %v3985, %v3473
        %v4050 = vmul.f32 %v3986, %v3474
        %v4051 = vmul.f32 %v3987, %v3475
        %v4052 = vmul.f32 %v3988, %v3476
        %v4053 = vmul.f32 %v3989, %v3477
        %v4054 = vmul.f32 %v3990, %v3478
        %v4055 = vmul.f32 %v3991, %v3479
        %v4056 = vmul.f32 %v3992, %v3480
        %v4057 = vmul.f32 %v3993, %v3481
        %v4058 = vmul.f32 %v3994, %v3482
        %v4059 = vmul.f32 %v3995, %v3483
        %v4060 = vmul.f32 %v3996, %v3484
        %v4061 = vmul.f32 %v3997, %v3485
        %v4062 = vsub.f32 1.0, %v3422
        %v4063 = vsub.f32 1.0, %v3423
        %v4064 = vsub.f32 1.0, %v3424
        %v4065 = vsub.f32 1.0, %v3425
        %v4066 = vsub.f32 1.0, %v3426
        %v4067 = vsub.f32 1.0, %v3427
        %v4068 = vsub.f32 1.0, %v3428
        %v4069 = vsub.f32 1.0, %v3429
        %v4070 = vsub.f32 1.0, %v3430
        %v4071 = vsub.f32 1.0, %v3431
        %v4072 = vsub.f32 1.0, %v3432
        %v4073 = vsub.f32 1.0, %v3433
        %v4074 = vsub.f32 1.0, %v3434
        %v4075 = vsub.f32 1.0, %v3435
        %v4076 = vsub.f32 1.0, %v3436
        %v4077 = vsub.f32 1.0, %v3437
        %v4078 = vsub.f32 1.0, %v3438
        %v4079 = vsub.f32 1.0, %v3439
        %v4080 = vsub.f32 1.0, %v3440
        %v4081 = vsub.f32 1.0, %v3441
        %v4082 = vsub.f32 1.0, %v3442
        %v4083 = vsub.f32 1.0, %v3443
        %v4084 = vsub.f32 1.0, %v3444
        %v4085 = vsub.f32 1.0, %v3445
        %v4086 = vsub.f32 1.0, %v3446
        %v4087 = vsub.f32 1.0, %v3447
        %v4088 = vsub.f32 1.0, %v3448
        %v4089 = vsub.f32 1.0, %v3449
        %v4090 = vsub.f32 1.0, %v3450
        %v4091 = vsub.f32 1.0, %v3451
        %v4092 = vsub.f32 1.0, %v3452
        %v4093 = vsub.f32 1.0, %v3453
        %v4094 = vsub.f32 1.0, %v3454
        %v4095 = vsub.f32 1.0, %v3455
        %v4096 = vsub.f32 1.0, %v3456
        %v4097 = vsub.f32 1.0, %v3457
        %v4098 = vsub.f32 1.0, %v3458
        %v4099 = vsub.f32 1.0, %v3459
        %v4100 = vsub.f32 1.0, %v3460
        %v4101 = vsub.f32 1.0, %v3461
        %v4102 = vsub.f32 1.0, %v3462
        %v4103 = vsub.f32 1.0, %v3463
        %v4104 = vsub.f32 1.0, %v3464
        %v4105 = vsub.f32 1.0, %v3465
        %v4106 = vsub.f32 1.0, %v3466
        %v4107 = vsub.f32 1.0, %v3467
        %v4108 = vsub.f32 1.0, %v3468
        %v4109 = vsub.f32 1.0, %v3469
        %v4110 = vsub.f32 1.0, %v3470
        %v4111 = vsub.f32 1.0, %v3471
        %v4112 = vsub.f32 1.0, %v3472
        %v4113 = vsub.f32 1.0, %v3473
        %v4114 = vsub.f32 1.0, %v3474
        %v4115 = vsub.f32 1.0, %v3475
        %v4116 = vsub.f32 1.0, %v3476
        %v4117 = vsub.f32 1.0, %v3477
        %v4118 = vsub.f32 1.0, %v3478
        %v4119 = vsub.f32 1.0, %v3479
        %v4120 = vsub.f32 1.0, %v3480
        %v4121 = vsub.f32 1.0, %v3481
        %v4122 = vsub.f32 1.0, %v3482
        %v4123 = vsub.f32 1.0, %v3483
        %v4124 = vsub.f32 1.0, %v3484
        %v4125 = vsub.f32 1.0, %v3485
        %v4126 = vadd.f32 %v3998, %v4062
        %v4127 = vadd.f32 %v3999, %v4063
        %v4128 = vadd.f32 %v4000, %v4064
        %v4129 = vadd.f32 %v4001, %v4065
        %v4130 = vadd.f32 %v4002, %v4066
        %v4131 = vadd.f32 %v4003, %v4067
        %v4132 = vadd.f32 %v4004, %v4068
        %v4133 = vadd.f32 %v4005, %v4069
        %v4134 = vadd.f32 %v4006, %v4070
        %v4135 = vadd.f32 %v4007, %v4071
        %v4136 = vadd.f32 %v4008, %v4072
        %v4137 = vadd.f32 %v4009, %v4073
        %v4138 = vadd.f32 %v4010, %v4074
        %v4139 = vadd.f32 %v4011, %v4075
        %v4140 = vadd.f32 %v4012, %v4076
        %v4141 = vadd.f32 %v4013, %v4077
        %v4142 = vadd.f32 %v4014, %v4078
        %v4143 = vadd.f32 %v4015, %v4079
        %v4144 = vadd.f32 %v4016, %v4080
        %v4145 = vadd.f32 %v4017, %v4081
        %v4146 = vadd.f32 %v4018, %v4082
        %v4147 = vadd.f32 %v4019, %v4083
        %v4148 = vadd.f32 %v4020, %v4084
        %v4149 = vadd.f32 %v4021, %v4085
        %v4150 = vadd.f32 %v4022, %v4086
        %v4151 = vadd.f32 %v4023, %v4087
        %v4152 = vadd.f32 %v4024, %v4088
        %v4153 = vadd.f32 %v4025, %v4089
        %v4154 = vadd.f32 %v4026, %v4090
        %v4155 = vadd.f32 %v4027, %v4091
        %v4156 = vadd.f32 %v4028, %v4092
        %v4157 = vadd.f32 %v4029, %v4093
        %v4158 = vadd.f32 %v4030, %v4094
        %v4159 = vadd.f32 %v4031, %v4095
        %v4160 = vadd.f32 %v4032, %v4096
        %v4161 = vadd.f32 %v4033, %v4097
        %v4162 = vadd.f32 %v4034, %v4098
        %v4163 = vadd.f32 %v4035, %v4099
        %v4164 = vadd.f32 %v4036, %v4100
        %v4165 = vadd.f32 %v4037, %v4101
        %v4166 = vadd.f32 %v4038, %v4102
        %v4167 = vadd.f32 %v4039, %v4103
        %v4168 = vadd.f32 %v4040, %v4104
        %v4169 = vadd.f32 %v4041, %v4105
        %v4170 = vadd.f32 %v4042, %v4106
        %v4171 = vadd.f32 %v4043, %v4107
        %v4172 = vadd.f32 %v4044, %v4108
        %v4173 = vadd.f32 %v4045, %v4109
        %v4174 = vadd.f32 %v4046, %v4110
        %v4175 = vadd.f32 %v4047, %v4111
        %v4176 = vadd.f32 %v4048, %v4112
        %v4177 = vadd.f32 %v4049, %v4113
        %v4178 = vadd.f32 %v4050, %v4114
        %v4179 = vadd.f32 %v4051, %v4115
        %v4180 = vadd.f32 %v4052, %v4116
        %v4181 = vadd.f32 %v4053, %v4117
        %v4182 = vadd.f32 %v4054, %v4118
        %v4183 = vadd.f32 %v4055, %v4119
        %v4184 = vadd.f32 %v4056, %v4120
        %v4185 = vadd.f32 %v4057, %v4121
        %v4186 = vadd.f32 %v4058, %v4122
        %v4187 = vadd.f32 %v4059, %v4123
        %v4188 = vadd.f32 %v4060, %v4124
        %v4189 = vadd.f32 %v4061, %v4125
        %v4190 = vmul.f32 %v3199, %v4126
        %v4191 = vmul.f32 %v3200, %v4127
        %v4192 = vmul.f32 %v3202, %v4128
        %v4193 = vmul.f32 %v3203, %v4129
        %v4194 = vmul.f32 %v3205, %v4130
        %v4195 = vmul.f32 %v3206, %v4131
        %v4196 = vmul.f32 %v3208, %v4132
        %v4197 = vmul.f32 %v3209, %v4133
        %v4198 = vmul.f32 %v3211, %v4134
        %v4199 = vmul.f32 %v3212, %v4135
        %v4200 = vmul.f32 %v3214, %v4136
        %v4201 = vmul.f32 %v3215, %v4137
        %v4202 = vmul.f32 %v3217, %v4138
        %v4203 = vmul.f32 %v3218, %v4139
        %v4204 = vmul.f32 %v3220, %v4140
        %v4205 = vmul.f32 %v3221, %v4141
        %v4206 = vmul.f32 %v3223, %v4142
        %v4207 = vmul.f32 %v3224, %v4143
        %v4208 = vmul.f32 %v3226, %v4144
        %v4209 = vmul.f32 %v3227, %v4145
        %v4210 = vmul.f32 %v3229, %v4146
        %v4211 = vmul.f32 %v3230, %v4147
        %v4212 = vmul.f32 %v3232, %v4148
        %v4213 = vmul.f32 %v3233, %v4149
        %v4214 = vmul.f32 %v3235, %v4150
        %v4215 = vmul.f32 %v3236, %v4151
        %v4216 = vmul.f32 %v3238, %v4152
        %v4217 = vmul.f32 %v3239, %v4153
        %v4218 = vmul.f32 %v3241, %v4154
        %v4219 = vmul.f32 %v3242, %v4155
        %v4220 = vmul.f32 %v3244, %v4156
        %v4221 = vmul.f32 %v3245, %v4157
        %v4222 = vmul.f32 %v3247, %v4158
        %v4223 = vmul.f32 %v3248, %v4159
        %v4224 = vmul.f32 %v3250, %v4160
        %v4225 = vmul.f32 %v3251, %v4161
        %v4226 = vmul.f32 %v3253, %v4162
        %v4227 = vmul.f32 %v3254, %v4163
        %v4228 = vmul.f32 %v3256, %v4164
        %v4229 = vmul.f32 %v3257, %v4165
        %v4230 = vmul.f32 %v3259, %v4166
        %v4231 = vmul.f32 %v3260, %v4167
        %v4232 = vmul.f32 %v3262, %v4168
        %v4233 = vmul.f32 %v3263, %v4169
        %v4234 = vmul.f32 %v3265, %v4170
        %v4235 = vmul.f32 %v3266, %v4171
        %v4236 = vmul.f32 %v3268, %v4172
        %v4237 = vmul.f32 %v3269, %v4173
        %v4238 = vmul.f32 %v3271, %v4174
        %v4239 = vmul.f32 %v3272, %v4175
        %v4240 = vmul.f32 %v3274, %v4176
        %v4241 = vmul.f32 %v3275, %v4177
        %v4242 = vmul.f32 %v3277, %v4178
        %v4243 = vmul.f32 %v3278, %v4179
        %v4244 = vmul.f32 %v3280, %v4180
        %v4245 = vmul.f32 %v3281, %v4181
        %v4246 = vmul.f32 %v3283, %v4182
        %v4247 = vmul.f32 %v3284, %v4183
        %v4248 = vmul.f32 %v3286, %v4184
        %v4249 = vmul.f32 %v3287, %v4185
        %v4250 = vmul.f32 %v3289, %v4186
        %v4251 = vmul.f32 %v3290, %v4187
        %v4252 = vmul.f32 %v3292, %v4188
        %v4253 = vmul.f32 %v3293, %v4189
        %4254 = vmatprep.subr.mxu0 %v4191
        %4255 = vmatpush1.xpose.msra.mxu0 %v4190
        %4256 = vmatprep.subr.mxu0 %v4193
        %4257 = vmatpush1.xpose.msra.mxu0 %v4192
        %4258 = vmatprep.subr.mxu0 %v4195
        %4259 = vmatpush1.xpose.msra.mxu0 %v4194
        %4260 = vmatprep.subr.mxu0 %v4197
        %4261 = vmatpush1.xpose.msra.mxu0 %v4196
        %4262 = vmatprep.subr.mxu0 %v4199
        %4263 = vmatpush1.xpose.msra.mxu0 %v4198
        %4264 = vmatprep.subr.mxu0 %v4201
        %4265 = vmatpush1.xpose.msra.mxu0 %v4200
        %4266 = vmatprep.subr.mxu0 %v4203
        %4267 = vmatpush1.xpose.msra.mxu0 %v4202
        %4268 = vmatprep.subr.mxu0 %v4205
        %4269 = vmatpush1.xpose.msra.mxu0 %v4204
        %4270 = vmatprep.subr.mxu0 %v4207
        %4271 = vmatpush1.xpose.msra.mxu0 %v4206
        %4272 = vmatprep.subr.mxu0 %v4209
        %4273 = vmatpush1.xpose.msra.mxu0 %v4208
        %4274 = vmatprep.subr.mxu0 %v4211
        %4275 = vmatpush1.xpose.msra.mxu0 %v4210
        %4276 = vmatprep.subr.mxu0 %v4213
        %4277 = vmatpush1.xpose.msra.mxu0 %v4212
        %4278 = vmatprep.subr.mxu0 %v4215
        %4279 = vmatpush1.xpose.msra.mxu0 %v4214
        %4280 = vmatprep.subr.mxu0 %v4217
        %4281 = vmatpush1.xpose.msra.mxu0 %v4216
        %4282 = vmatprep.subr.mxu0 %v4219
        %4283 = vmatpush1.xpose.msra.mxu0 %v4218
        %4284 = vmatprep.subr.mxu0 %v4221
        %4285 = vmatpush1.xpose.msra.mxu0 %v4220
        %4286 = vmatprep.subr.mxu0 %v4223
        %4287 = vmatpush1.xpose.msra.mxu0 %v4222
        %4288 = vmatprep.subr.mxu0 %v4225
        %4289 = vmatpush1.xpose.msra.mxu0 %v4224
        %4290 = vmatprep.subr.mxu0 %v4227
        %4291 = vmatpush1.xpose.msra.mxu0 %v4226
        %4292 = vmatprep.subr.mxu0 %v4229
        %4293 = vmatpush1.xpose.msra.mxu0 %v4228
        %4294 = vmatprep.subr.mxu0 %v4231
        %4295 = vmatpush1.xpose.msra.mxu0 %v4230
        %4296 = vmatprep.subr.mxu0 %v4233
        %4297 = vmatpush1.xpose.msra.mxu0 %v4232
        %4298 = vmatprep.subr.mxu0 %v4235
        %4299 = vmatpush1.xpose.msra.mxu0 %v4234
        %4300 = vmatprep.subr.mxu0 %v4237
        %4301 = vmatpush1.xpose.msra.mxu0 %v4236
        %4302 = vmatprep.subr.mxu0 %v4239
        %4303 = vmatpush1.xpose.msra.mxu0 %v4238
        %4304 = vmatprep.subr.mxu0 %v4241
        %4305 = vmatpush1.xpose.msra.mxu0 %v4240
        %4306 = vmatprep.subr.mxu0 %v4243
        %4307 = vmatpush1.xpose.msra.mxu0 %v4242
        %4308 = vmatprep.subr.mxu0 %v4245
        %4309 = vmatpush1.xpose.msra.mxu0 %v4244
        %4310 = vmatprep.subr.mxu0 %v4247
        %4311 = vmatpush1.xpose.msra.mxu0 %v4246
        %4312 = vmatprep.subr.mxu0 %v4249
        %4313 = vmatpush1.xpose.msra.mxu0 %v4248
        %4314 = vmatprep.subr.mxu0 %v4251
        %4315 = vmatpush1.xpose.msra.mxu0 %v4250
        %4316 = vmatprep.subr.mxu0 %v4253
        %4317 = vmatpush1.xpose.msra.mxu0 %v4252
        %4318 = vmatprep.mubr.f32.mxu0 %v1433
        %4319 = vmatmul.mubr.f32.gmra.mrb[0].mxu0 %v1431
        %v4320 = vpop.f32.mrb[0].mxu0
        %v4321 = vadd.f32 %v671, %v4320
        %v4322 = vpop.f32.mrb[0].mxu0
        %v4323 = vadd.f32 %v672, %v4322
        %4324 = vmatprep.mubr.f32.mxu0 %v1439
        %4325 = vmatmul.mubr.f32.gmra.mrb[0].mxu0 %v1437
        %v4326 = vpop.f32.mrb[0].mxu0
        %v4327 = vadd.f32 %v673, %v4326
        %v4328 = vpop.f32.mrb[0].mxu0
        %v4329 = vadd.f32 %v674, %v4328
        %4330 = vmatprep.mubr.f32.mxu0 %v1445
        %4331 = vmatmul.mubr.f32.gmra.mrb[0].mxu0 %v1443
        %v4332 = vpop.f32.mrb[0].mxu0
        %v4333 = vadd.f32 %v675, %v4332
        %v4334 = vpop.f32.mrb[0].mxu0
        %v4335 = vadd.f32 %v676, %v4334
        %4336 = vmatprep.mubr.f32.mxu0 %v1451
        %4337 = vmatmul.mubr.f32.gmra.mrb[0].mxu0 %v1449
        %v4338 = vpop.f32.mrb[0].mxu0
        %v4339 = vadd.f32 %v677, %v4338
        %v4340 = vpop.f32.mrb[0].mxu0
        %v4341 = vadd.f32 %v678, %v4340
        %4342 = vdwg.mxu0
        %4343 = vst [vmem:[%s532] sm:$0xff] %v4321
        %4344 = vst [vmem:[%s532 + $0x8] sm:$0xff] %v4323
        %4345 = vst [vmem:[%s532 + $0x10] sm:$0xff] %v4327
        %4346 = vst [vmem:[%s532 + $0x18] sm:$0xff] %v4329
        %4347 = vst [vmem:[%s532 + $0x20] sm:$0xff] %v4333
        %4348 = vst [vmem:[%s532 + $0x28] sm:$0xff] %v4335
        %4349 = vst [vmem:[%s532 + $0x30] sm:$0xff] %v4339
        %4350 = vst [vmem:[%s532 + $0x38] sm:$0xff] %v4341
        %p4351 = scmp.lt.s32.totalorder %s31, 1
        %s4352 = scalar_select %p4351, %s31, 1
        %s4353 = smul.addr %s4352, 8
        %s4354 = smul.addr %s4353, 8
        %s4355 = scalar_lea.vmem %s15, %s4354
        %s4356 = sand.u32 %s385, 1
        %s4357 = scalar_lea.sflag [#allocation5], %s4356
        %s4358 = sand.u32 %s385, 1
        %s4359 = smul.addr %s4358, 512
        %s4360 = scalar_lea.vmem [#allocation4], %s4359
        // Predicated region
        $region88: #{aug_attention_forward.1} parent=79 // pred_check
          %p4361 = pneg %p369
        $region89: #{aug_attention_forward.1} parent=79 // pred_check_branch
          %4363 = sbr.rel (%p4361) target = $region91
        $region90: #{aug_attention_forward.1} parent=79 // pred_region
          _
        $region91: #{aug_attention_forward.1} parent=79 // pred_fallthru
          _
        // Predicated region
        $region92: #{aug_attention_forward.1} parent=79 // pred_check
          %p4364 = pneg %p395
        $region93: #{aug_attention_forward.1} parent=79 // pred_check_branch
          %4366 = sbr.rel (%p4364) target = $region95
        $region94: #{aug_attention_forward.1} parent=79 // pred_region
          %s4368 = ssub.s32 8192, 8192
          %4369 = vsyncadd %s4357, %s4368
          %s4370 = smul.addr %s31, 64
          %s4371 = smul.addr %s4370, 128
          %s4372 = scalar_lea.hbm %s16, %s4371
          %s4373 = sshll.u32 %s4360, 4
          %s4374 = int_to_ptr.vmem [resolvable:$true] %s4373
          %4379 = dma.vmem_to_hbm [thread:$0]  %s4374, 8192, %s4372, %s4357, 256, 256, 16
        $region95: #{aug_attention_forward.1} parent=79 // pred_fallthru
          _
      $region80: #{aug_attention_forward.1} parent=5 // pred_fallthru
        _
      %p4380 = scmp.le.s32.totalorder 2, %s26
      // Predicated region
      $region96: #{aug_attention_forward.1} parent=5 // pred_check
        %p4381 = pneg %p4380
      $region97: #{aug_attention_forward.1} parent=5 // pred_check_branch
        %4383 = sbr.rel (%p4381) target = $region99
      $region98: #{aug_attention_forward.1} parent=5 // pred_region
        %s4384 = ssub.s32 %s26, 2
        // Predicated region
        $region100: #{aug_attention_forward.1} parent=98 // pred_check
          %p4385 = pneg %p375
        $region101: #{aug_attention_forward.1} parent=98 // pred_check_branch
          %4387 = sbr.rel (%p4385) target = $region103
        $region102: #{aug_attention_forward.1} parent=98 // pred_region
          %p4388 = scmp.lt.s32.totalorder %s32, 1
          %s4389 = scalar_select %p4388, %s32, 1
          %s4390 = smul.addr %s4389, 8
          %s4391 = smul.addr %s4390, 8
          %s4392 = scalar_lea.vmem %s15, %s4391
        $region103: #{aug_attention_forward.1} parent=98 // pred_fallthru
          _
        // Predicated region
        $region104: #{aug_attention_forward.1} parent=98 // pred_check
          %p4393 = pneg %p401
        $region105: #{aug_attention_forward.1} parent=98 // pred_check_branch
          %4395 = sbr.rel (%p4393) target = $region107
        $region106: #{aug_attention_forward.1} parent=98 // pred_region
          %s4396 = sand.u32 %s386, 1
          %s4397 = scalar_lea.sflag [#allocation5], %s4396
          %s4398 = sand.u32 %s386, 1
          %s4399 = smul.addr %s4398, 512
          %s4400 = scalar_lea.vmem [#allocation4], %s4399
          %4401 = dma.done %s4397, 8192
        $region107: #{aug_attention_forward.1} parent=98 // pred_fallthru
          _
      $region99: #{aug_attention_forward.1} parent=5 // pred_fallthru
        _
    $region6: #{aug_attention_forward.1} parent=1 // loop_footer
      %s30 = sadd.s32 1, %s26
    $region7: #{aug_attention_forward.1} parent=1 // loop_footer_branch
      %25 = sbr.rel target = $region3
    $region8: #{aug_attention_forward.1} parent=1 // loop_exit
      _
    %4402 = vsyncpa [#allocation5], 1
    %s4403 = scalar_lea.sflag [#allocation5], 1
    %4404 = vsyncpa %s4403, 1

</llo_original>
